<compile_context>
chip_gen: v6e
topology: v6e:2x2x1
jax: 0.10.0
libtpu: 0.0.40
codegen_flags: <defaults>
</compile_context>

<pallas_src>
import jax
import jax.numpy as jnp
from jax import lax
from jax.experimental import pallas as pl
from jax.experimental.pallas import tpu as pltpu

ACT_BITS = 8
WEIGHT_BITS = 8
NVALS = 2 ** ACT_BITS          # 256
R_CHUNK = 128                  # output positions per in-kernel chunk (one lane group)
SUBLANE = 8


def _round_up(x, m):
    return ((x + m - 1) // m) * m


def _default_compute_dtype():
    """bf16 histogram math only where the VALU is bf16-native (v6e / v7x);
    f32 elsewhere.  Conservative f32 fallback if the device can't be sniffed.
    TODO(synk): switch to pltpu.get_tpu_info() once chip generation is exposed.
    """
    try:
        kind = jax.devices()[0].device_kind.lower()
    except Exception:
        return jnp.float32
    return jnp.bfloat16 if any(t in kind for t in ("v6", "v7", "7x")) else jnp.float32


def _choose_tile_s(s, batch, tile_s_max=2048, target_steps=16):
    """Spatial tile size (lane axis).  Aim for >= ~target_steps grid steps in
    total (>= 8 per TensorCore on v7x) while keeping tiles large (>= 512 rows
    when the problem is big enough) to amortize the ~0.35us/step overhead.
    VMEM is never the constraint here (per-step footprint is a few tens of
    KiB on all generations)."""
    steps_per_batch = max(1, -(-target_steps // max(1, batch)))
    tile = _round_up(max(1, -(-s // steps_per_batch)), R_CHUNK)
    if s >= steps_per_batch * 512:
        tile = max(tile, 512)
    return max(R_CHUNK, min(tile, _round_up(tile_s_max, R_CHUNK)))


# ---------------------------------------------------------------------------
# Pallas kernel: per-position activation-value histogram (VPU) followed by a
# hi/lo-split bf16 MXU contraction against the PCILT-derived lookup table,
# bias added in the epilogue.  Positions live on the lane axis, the 256
# candidate values on the sublane axis, output channels on the sublane axis of
# the result (so the output is already NCHW-ordered).
# ---------------------------------------------------------------------------
def _make_kernel(ikk, n_chunks, compute_dtype, mxu_dtype):
    dn = (((0,), (0,)), ((), ()))   # contract dim 0 of both operands (MXU-native trans_a)

    def kernel(patches_ref, lut_hi_ref, lut_lo_ref, bias_ref, out_ref):
        def chunk_body(c, carry):
            col0 = c * R_CHUNK
            if not isinstance(col0, int):
                col0 = pl.multiple_of(col0, R_CHUNK)
            cols = pl.ds(col0, R_CHUNK)

            # 256 candidate activation values (shifted by -128 to match the
            # int8 patch encoding) down the sublane axis; exact in bf16.
            # Built per chunk so it does not stay live across the loop.
            vals = (lax.broadcasted_iota(jnp.int32, (NVALS, R_CHUNK), 0) - 128
                    ).astype(compute_dtype)

            hist = jnp.zeros((NVALS, R_CHUNK), compute_dtype)
            for p in range(ikk):                       # small static unroll (C*k*k)
                # (1, 128) row straight from VMEM, replicated down sublanes.
                # TODO(synk): try the stride-0 sublane-broadcast load
                #             patches_ref[pl.ds(p, NVALS, stride=0), cols].
                row = patches_ref[pl.ds(p, 1), cols].astype(jnp.float32)
                row = row.astype(compute_dtype)
                hist = hist + (jnp.broadcast_to(row, (NVALS, R_CHUNK)) == vals
                               ).astype(compute_dtype)

            # hi/lo-split LUT contraction on the MXU, f32 accumulation.
            # (counts <= ikk <= 256 are exact in bf16; no-op cast otherwise)
            hist_mm = hist.astype(mxu_dtype)
            acc = lax.dot_general(lut_hi_ref[...], hist_mm, dn,
                                  preferred_element_type=jnp.float32)
            acc = acc + lax.dot_general(lut_lo_ref[...], hist_mm, dn,
                                        preferred_element_type=jnp.float32)
            out_ref[:, cols] = acc + bias_ref[...]     # (O_pad, R_CHUNK) f32
            return carry

        if n_chunks == 1:
            chunk_body(0, 0)
        else:
            # fori_loop (not a static Python loop) bounds live ranges per chunk.
            lax.fori_loop(0, n_chunks, chunk_body, 0)

    return kernel


# ---------------------------------------------------------------------------
# Parameter / glue code (plain JAX)
# ---------------------------------------------------------------------------
def build_lut_int(weight):
    """L[v, o] = sum_{i,ky,kx} int16_wrap(quantized_weight[o,i,ky,kx] * v), int32.

    Matches the PyTorch module exactly: weights quantized with
    (w * 255).round().clamp(0, 255) (negative weights clamp to 0, as in the
    module's _quantize_weights) and the per-entry product cast to int16
    (wraps mod 2**16)."""
    wr = 2 ** WEIGHT_BITS
    qw = jnp.clip(jnp.round(weight * (wr - 1)), 0, wr - 1).astype(jnp.int32)   # (O,I,k,k)
    v = jnp.arange(NVALS, dtype=jnp.int32)
    prod = qw.reshape(qw.shape[0], -1)[:, :, None] * v[None, None, :]          # (O,IKK,256)
    prod16 = ((prod + 2 ** 15) % (2 ** 16)) - 2 ** 15                          # emulate .to(int16)
    return prod16.sum(axis=1).T                                                # (256, O) int32


def _im2col(x, kernel_size, stride, padding):
    """Quantize to 8 bits and unfold, emitting patches directly in the
    transposed, lane-friendly (B, C*k*k, OH*OW) layout (no host transpose
    pass).  Values are stored as int8 shifted by -128 so the kernel's only
    large input stream is 1 byte/element."""
    B, C, H, W = x.shape
    k = kernel_size
    xq = jnp.clip(jnp.round(x * (NVALS - 1)), 0, NVALS - 1).astype(jnp.int32) - 128
    xq = xq.astype(jnp.int8)
    # PyTorch pads the quantized image with 0 -> shifted value is -128.
    xp = jnp.pad(xq, ((0, 0), (0, 0), (padding, padding), (padding, padding)),
                 constant_values=-128)
    Hp, Wp = H + 2 * padding, W + 2 * padding
    OH = (Hp - k) // stride + 1
    OW = (Wp - k) // stride + 1
    cols = []
    for ky in range(k):
        for kx in range(k):
            cols.append(xp[:, :, ky:ky + stride * (OH - 1) + 1:stride,
                               kx:kx + stride * (OW - 1) + 1:stride])
    patches = jnp.stack(cols, axis=2)                    # (B, C, k*k, OH, OW) int8
    return patches.reshape(B, C * k * k, OH * OW), OH, OW


def pcilt_conv2d(x, weight, bias, kernel_size, stride=1, padding=0,
                 tile_s_max=2048, compute_dtype=None):
    B = x.shape[0]
    O = weight.shape[0]
    patches, OH, OW = _im2col(x, kernel_size, stride, padding)   # (B, IKK, S) int8
    _, IKK, S = patches.shape

    if compute_dtype is None:
        compute_dtype = _default_compute_dtype()

    # bf16 histogram counts / bf16 MXU path are exact only for IKK <= 256;
    # larger patches fall back to an all-f32 path (rare for this algorithm).
    bf16_path = IKK <= NVALS
    if not bf16_path:
        compute_dtype = jnp.float32

    # LUT: exact int32, exact as f32 (|L| <= IKK * 32768 < 2**24 for IKK<=256),
    # shipped as hi/lo bf16 planes so the MXU runs native bf16 on every chip
    # generation (v7x has no integer MXU path).
    o_pad = _round_up(O, SUBLANE)                     # sublane granularity only
    lut = build_lut_int(weight).astype(jnp.float32)   # (256, O)
    if o_pad != O:
        lut = jnp.pad(lut, ((0, 0), (0, o_pad - O)))
    if bf16_path:
        lut_hi = lut.astype(jnp.bfloat16)
        lut_lo = (lut - lut_hi.astype(jnp.float32)).astype(jnp.bfloat16)
        mxu_dtype = jnp.bfloat16
    else:
        lut_hi = lut
        lut_lo = jnp.zeros_like(lut)
        mxu_dtype = jnp.float32

    bias_pad = jnp.pad(bias.astype(jnp.float32), (0, o_pad - O))
    bias_tile = jnp.broadcast_to(bias_pad[:, None], (o_pad, R_CHUNK))  # host-side bcast

    tile_s = _choose_tile_s(S, B, tile_s_max)
    s_pad = _round_up(S, tile_s)
    if s_pad != S:
        patches = jnp.pad(patches, ((0, 0), (0, 0), (0, s_pad - S)))

    n_chunks = tile_s // R_CHUNK
    kernel = _make_kernel(IKK, n_chunks, compute_dtype, mxu_dtype)

    out = pl.pallas_call(
        kernel,
        out_shape=jax.ShapeDtypeStruct((B, o_pad, s_pad), jnp.float32),
        grid_spec=pltpu.PrefetchScalarGridSpec(
            num_scalar_prefetch=0,
            grid=(B, s_pad // tile_s),
            in_specs=[
                pl.BlockSpec((None, IKK, tile_s), lambda b, s: (b, 0, s)),   # int8 patches
                pl.BlockSpec((NVALS, o_pad), lambda b, s: (0, 0)),           # LUT hi plane
                pl.BlockSpec((NVALS, o_pad), lambda b, s: (0, 0)),           # LUT lo plane
                pl.BlockSpec((o_pad, R_CHUNK), lambda b, s: (0, 0)),         # bias tile
            ],
            out_specs=pl.BlockSpec((None, o_pad, tile_s), lambda b, s: (b, 0, s)),
        ),
        compiler_params=pltpu.CompilerParams(
            dimension_semantics=("parallel", "parallel")),
    )(patches, lut_hi, lut_lo, bias_tile)

    if o_pad != O or s_pad != S:
        out = out[:, :O, :S]
    # Output is already (B, O, OH*OW): NCHW is a free reshape, no transpose.
    return out.reshape(B, O, OH, OW)


# ---------------------------------------------------------------------------
# Integer-exact pure-JAX reference (gather + int32 sum), independent of the
# histogram/MXU path used by the kernel.
# ---------------------------------------------------------------------------
def reference_forward(x, weight, bias, kernel_size, stride=1, padding=0):
    B = x.shape[0]
    O = weight.shape[0]
    patches, OH, OW = _im2col(x, kernel_size, stride, padding)   # (B, IKK, S) int8
    idx = patches.astype(jnp.int32) + 128                        # back to 0..255
    lut = build_lut_int(weight)                                  # (256, O) int32
    gathered = jnp.take(lut, idx, axis=0)                        # (B, IKK, S, O)
    out = gathered.sum(axis=1).astype(jnp.float32)               # (B, S, O) exact
    out = out + bias.astype(jnp.float32)[None, None, :]
    return jnp.transpose(out, (0, 2, 1)).reshape(B, O, OH, OW)   # NCHW


if __name__ == "__main__":
    key = jax.random.PRNGKey(0)
    k_w, k_x = jax.random.split(key)

    B, C, O, H, W = 2, 4, 8, 16, 16
    kernel_size, stride, padding = 3, 1, 1

    # Deterministic parameter init (shapes from the module's __init__).
    weight = jax.random.normal(k_w, (O, C, kernel_size, kernel_size), jnp.float32)
    bias = jnp.zeros((O,), jnp.float32)
    # Activations in [0, 1) so the 8-bit quantization is meaningful.
    x = jax.random.uniform(k_x, (B, C, H, W), jnp.float32)

    out = pcilt_conv2d(x, weight, bias, kernel_size, stride, padding)
    out = jax.block_until_ready(out)

    ref = reference_forward(x, weight, bias, kernel_size, stride, padding)
    scale = float(jnp.max(jnp.abs(ref)))
    max_err = float(jnp.max(jnp.abs(out - ref)))
    # Tolerance: the hi/lo bf16 LUT split and f32 MXU accumulation carry a
    # bounded ~2^-16 relative rounding term vs. this integer-exact reference
    # (the PyTorch module's own float32 sum has the same class of rounding);
    # genuine bugs would show up at O(scale).
    assert max_err <= 1e-3 * scale + 16.0, f"max_err={max_err} scale={scale}"

    print("KERNEL_OK")
</pallas_src>

<mosaic_0001>
module attributes {stable_mosaic.version = 11 : i64} {
  func.func @kernel(%arg0: i32, %arg1: i32, %arg2: memref<1x36x128xi8, #tpu.memory_space<vmem>>, %arg3: memref<256x8xbf16, #tpu.memory_space<vmem>>, %arg4: memref<256x8xbf16, #tpu.memory_space<vmem>>, %arg5: memref<8x128xf32, #tpu.memory_space<vmem>>, %arg6: memref<1x8x128xf32, #tpu.memory_space<vmem>>) attributes {dimension_semantics = [#tpu.dimension_semantics<parallel>, #tpu.dimension_semantics<parallel>], iteration_bounds = array<i64: 2, 2>, scalar_prefetch = 0 : i64, scratch_operands = 0 : i64, tpu.core_type = #tpu.core_type<tc>, window_params = [{transform_indices = @transform_0, window_bounds = array<i64: 1, 36, 128>}, {pipeline_mode = #tpu.pipeline_mode<synchronous>, transform_indices = @transform_1, window_bounds = array<i64: 256, 8>}, {pipeline_mode = #tpu.pipeline_mode<synchronous>, transform_indices = @transform_2, window_bounds = array<i64: 256, 8>}, {pipeline_mode = #tpu.pipeline_mode<synchronous>, transform_indices = @transform_3, window_bounds = array<i64: 8, 128>}, {transform_indices = @transform_4, window_bounds = array<i64: 1, 8, 128>}]} {
    %0 = tpu.iota {dimensions = array<i32: 0>} : vector<256x128xi32>
    %c128_i32 = arith.constant 128 : i32
    %1 = vector.broadcast %c128_i32 : i32 to vector<256x128xi32>
    %2 = arith.subi %0, %1 : vector<256x128xi32>
    %3 = arith.sitofp %2 : vector<256x128xi32> to vector<256x128xf32>
    %cst = arith.constant 0.000000e+00 : f32
    %4 = vector.broadcast %cst : f32 to vector<256x128xf32>
    %c0 = arith.constant 0 : index
    %c0_0 = arith.constant 0 : index
    %c0_1 = arith.constant 0 : index
    %5 = vector.load %arg2[%c0, %c0_0, %c0_1] : memref<1x36x128xi8, #tpu.memory_space<vmem>>, vector<1x1x128xi8>
    %6 = vector.shape_cast %5 : vector<1x1x128xi8> to vector<1x128xi8>
    %7 = arith.sitofp %6 : vector<1x128xi8> to vector<1x128xf32>
    %8 = vector.shape_cast %7 : vector<1x128xf32> to vector<1x128xf32>
    %9 = vector.broadcast %8 : vector<1x128xf32> to vector<256x128xf32>
    %10 = arith.cmpf oeq, %9, %3 : vector<256x128xf32>
    %11 = arith.extui %10 : vector<256x128xi1> to vector<256x128xi32>
    %12 = arith.sitofp %11 : vector<256x128xi32> to vector<256x128xf32>
    %13 = arith.addf %4, %12 : vector<256x128xf32>
    %c0_2 = arith.constant 0 : index
    %c1 = arith.constant 1 : index
    %c0_3 = arith.constant 0 : index
    %14 = vector.load %arg2[%c0_2, %c1, %c0_3] : memref<1x36x128xi8, #tpu.memory_space<vmem>>, vector<1x1x128xi8>
    %15 = vector.shape_cast %14 : vector<1x1x128xi8> to vector<1x128xi8>
    %16 = arith.sitofp %15 : vector<1x128xi8> to vector<1x128xf32>
    %17 = vector.shape_cast %16 : vector<1x128xf32> to vector<1x128xf32>
    %18 = vector.broadcast %17 : vector<1x128xf32> to vector<256x128xf32>
    %19 = arith.cmpf oeq, %18, %3 : vector<256x128xf32>
    %20 = arith.extui %19 : vector<256x128xi1> to vector<256x128xi32>
    %21 = arith.sitofp %20 : vector<256x128xi32> to vector<256x128xf32>
    %22 = arith.addf %13, %21 : vector<256x128xf32>
    %c0_4 = arith.constant 0 : index
    %c2 = arith.constant 2 : index
    %c0_5 = arith.constant 0 : index
    %23 = vector.load %arg2[%c0_4, %c2, %c0_5] : memref<1x36x128xi8, #tpu.memory_space<vmem>>, vector<1x1x128xi8>
    %24 = vector.shape_cast %23 : vector<1x1x128xi8> to vector<1x128xi8>
    %25 = arith.sitofp %24 : vector<1x128xi8> to vector<1x128xf32>
    %26 = vector.shape_cast %25 : vector<1x128xf32> to vector<1x128xf32>
    %27 = vector.broadcast %26 : vector<1x128xf32> to vector<256x128xf32>
    %28 = arith.cmpf oeq, %27, %3 : vector<256x128xf32>
    %29 = arith.extui %28 : vector<256x128xi1> to vector<256x128xi32>
    %30 = arith.sitofp %29 : vector<256x128xi32> to vector<256x128xf32>
    %31 = arith.addf %22, %30 : vector<256x128xf32>
    %c0_6 = arith.constant 0 : index
    %c3 = arith.constant 3 : index
    %c0_7 = arith.constant 0 : index
    %32 = vector.load %arg2[%c0_6, %c3, %c0_7] : memref<1x36x128xi8, #tpu.memory_space<vmem>>, vector<1x1x128xi8>
    %33 = vector.shape_cast %32 : vector<1x1x128xi8> to vector<1x128xi8>
    %34 = arith.sitofp %33 : vector<1x128xi8> to vector<1x128xf32>
    %35 = vector.shape_cast %34 : vector<1x128xf32> to vector<1x128xf32>
    %36 = vector.broadcast %35 : vector<1x128xf32> to vector<256x128xf32>
    %37 = arith.cmpf oeq, %36, %3 : vector<256x128xf32>
    %38 = arith.extui %37 : vector<256x128xi1> to vector<256x128xi32>
    %39 = arith.sitofp %38 : vector<256x128xi32> to vector<256x128xf32>
    %40 = arith.addf %31, %39 : vector<256x128xf32>
    %c0_8 = arith.constant 0 : index
    %c4 = arith.constant 4 : index
    %c0_9 = arith.constant 0 : index
    %41 = vector.load %arg2[%c0_8, %c4, %c0_9] : memref<1x36x128xi8, #tpu.memory_space<vmem>>, vector<1x1x128xi8>
    %42 = vector.shape_cast %41 : vector<1x1x128xi8> to vector<1x128xi8>
    %43 = arith.sitofp %42 : vector<1x128xi8> to vector<1x128xf32>
    %44 = vector.shape_cast %43 : vector<1x128xf32> to vector<1x128xf32>
    %45 = vector.broadcast %44 : vector<1x128xf32> to vector<256x128xf32>
    %46 = arith.cmpf oeq, %45, %3 : vector<256x128xf32>
    %47 = arith.extui %46 : vector<256x128xi1> to vector<256x128xi32>
    %48 = arith.sitofp %47 : vector<256x128xi32> to vector<256x128xf32>
    %49 = arith.addf %40, %48 : vector<256x128xf32>
    %c0_10 = arith.constant 0 : index
    %c5 = arith.constant 5 : index
    %c0_11 = arith.constant 0 : index
    %50 = vector.load %arg2[%c0_10, %c5, %c0_11] : memref<1x36x128xi8, #tpu.memory_space<vmem>>, vector<1x1x128xi8>
    %51 = vector.shape_cast %50 : vector<1x1x128xi8> to vector<1x128xi8>
    %52 = arith.sitofp %51 : vector<1x128xi8> to vector<1x128xf32>
    %53 = vector.shape_cast %52 : vector<1x128xf32> to vector<1x128xf32>
    %54 = vector.broadcast %53 : vector<1x128xf32> to vector<256x128xf32>
    %55 = arith.cmpf oeq, %54, %3 : vector<256x128xf32>
    %56 = arith.extui %55 : vector<256x128xi1> to vector<256x128xi32>
    %57 = arith.sitofp %56 : vector<256x128xi32> to vector<256x128xf32>
    %58 = arith.addf %49, %57 : vector<256x128xf32>
    %c0_12 = arith.constant 0 : index
    %c6 = arith.constant 6 : index
    %c0_13 = arith.constant 0 : index
    %59 = vector.load %arg2[%c0_12, %c6, %c0_13] : memref<1x36x128xi8, #tpu.memory_space<vmem>>, vector<1x1x128xi8>
    %60 = vector.shape_cast %59 : vector<1x1x128xi8> to vector<1x128xi8>
    %61 = arith.sitofp %60 : vector<1x128xi8> to vector<1x128xf32>
    %62 = vector.shape_cast %61 : vector<1x128xf32> to vector<1x128xf32>
    %63 = vector.broadcast %62 : vector<1x128xf32> to vector<256x128xf32>
    %64 = arith.cmpf oeq, %63, %3 : vector<256x128xf32>
    %65 = arith.extui %64 : vector<256x128xi1> to vector<256x128xi32>
    %66 = arith.sitofp %65 : vector<256x128xi32> to vector<256x128xf32>
    %67 = arith.addf %58, %66 : vector<256x128xf32>
    %c0_14 = arith.constant 0 : index
    %c7 = arith.constant 7 : index
    %c0_15 = arith.constant 0 : index
    %68 = vector.load %arg2[%c0_14, %c7, %c0_15] : memref<1x36x128xi8, #tpu.memory_space<vmem>>, vector<1x1x128xi8>
    %69 = vector.shape_cast %68 : vector<1x1x128xi8> to vector<1x128xi8>
    %70 = arith.sitofp %69 : vector<1x128xi8> to vector<1x128xf32>
    %71 = vector.shape_cast %70 : vector<1x128xf32> to vector<1x128xf32>
    %72 = vector.broadcast %71 : vector<1x128xf32> to vector<256x128xf32>
    %73 = arith.cmpf oeq, %72, %3 : vector<256x128xf32>
    %74 = arith.extui %73 : vector<256x128xi1> to vector<256x128xi32>
    %75 = arith.sitofp %74 : vector<256x128xi32> to vector<256x128xf32>
    %76 = arith.addf %67, %75 : vector<256x128xf32>
    %c0_16 = arith.constant 0 : index
    %c8 = arith.constant 8 : index
    %c0_17 = arith.constant 0 : index
    %77 = vector.load %arg2[%c0_16, %c8, %c0_17] : memref<1x36x128xi8, #tpu.memory_space<vmem>>, vector<1x1x128xi8>
    %78 = vector.shape_cast %77 : vector<1x1x128xi8> to vector<1x128xi8>
    %79 = arith.sitofp %78 : vector<1x128xi8> to vector<1x128xf32>
    %80 = vector.shape_cast %79 : vector<1x128xf32> to vector<1x128xf32>
    %81 = vector.broadcast %80 : vector<1x128xf32> to vector<256x128xf32>
    %82 = arith.cmpf oeq, %81, %3 : vector<256x128xf32>
    %83 = arith.extui %82 : vector<256x128xi1> to vector<256x128xi32>
    %84 = arith.sitofp %83 : vector<256x128xi32> to vector<256x128xf32>
    %85 = arith.addf %76, %84 : vector<256x128xf32>
    %c0_18 = arith.constant 0 : index
    %c9 = arith.constant 9 : index
    %c0_19 = arith.constant 0 : index
    %86 = vector.load %arg2[%c0_18, %c9, %c0_19] : memref<1x36x128xi8, #tpu.memory_space<vmem>>, vector<1x1x128xi8>
    %87 = vector.shape_cast %86 : vector<1x1x128xi8> to vector<1x128xi8>
    %88 = arith.sitofp %87 : vector<1x128xi8> to vector<1x128xf32>
    %89 = vector.shape_cast %88 : vector<1x128xf32> to vector<1x128xf32>
    %90 = vector.broadcast %89 : vector<1x128xf32> to vector<256x128xf32>
    %91 = arith.cmpf oeq, %90, %3 : vector<256x128xf32>
    %92 = arith.extui %91 : vector<256x128xi1> to vector<256x128xi32>
    %93 = arith.sitofp %92 : vector<256x128xi32> to vector<256x128xf32>
    %94 = arith.addf %85, %93 : vector<256x128xf32>
    %c0_20 = arith.constant 0 : index
    %c10 = arith.constant 10 : index
    %c0_21 = arith.constant 0 : index
    %95 = vector.load %arg2[%c0_20, %c10, %c0_21] : memref<1x36x128xi8, #tpu.memory_space<vmem>>, vector<1x1x128xi8>
    %96 = vector.shape_cast %95 : vector<1x1x128xi8> to vector<1x128xi8>
    %97 = arith.sitofp %96 : vector<1x128xi8> to vector<1x128xf32>
    %98 = vector.shape_cast %97 : vector<1x128xf32> to vector<1x128xf32>
    %99 = vector.broadcast %98 : vector<1x128xf32> to vector<256x128xf32>
    %100 = arith.cmpf oeq, %99, %3 : vector<256x128xf32>
    %101 = arith.extui %100 : vector<256x128xi1> to vector<256x128xi32>
    %102 = arith.sitofp %101 : vector<256x128xi32> to vector<256x128xf32>
    %103 = arith.addf %94, %102 : vector<256x128xf32>
    %c0_22 = arith.constant 0 : index
    %c11 = arith.constant 11 : index
    %c0_23 = arith.constant 0 : index
    %104 = vector.load %arg2[%c0_22, %c11, %c0_23] : memref<1x36x128xi8, #tpu.memory_space<vmem>>, vector<1x1x128xi8>
    %105 = vector.shape_cast %104 : vector<1x1x128xi8> to vector<1x128xi8>
    %106 = arith.sitofp %105 : vector<1x128xi8> to vector<1x128xf32>
    %107 = vector.shape_cast %106 : vector<1x128xf32> to vector<1x128xf32>
    %108 = vector.broadcast %107 : vector<1x128xf32> to vector<256x128xf32>
    %109 = arith.cmpf oeq, %108, %3 : vector<256x128xf32>
    %110 = arith.extui %109 : vector<256x128xi1> to vector<256x128xi32>
    %111 = arith.sitofp %110 : vector<256x128xi32> to vector<256x128xf32>
    %112 = arith.addf %103, %111 : vector<256x128xf32>
    %c0_24 = arith.constant 0 : index
    %c12 = arith.constant 12 : index
    %c0_25 = arith.constant 0 : index
    %113 = vector.load %arg2[%c0_24, %c12, %c0_25] : memref<1x36x128xi8, #tpu.memory_space<vmem>>, vector<1x1x128xi8>
    %114 = vector.shape_cast %113 : vector<1x1x128xi8> to vector<1x128xi8>
    %115 = arith.sitofp %114 : vector<1x128xi8> to vector<1x128xf32>
    %116 = vector.shape_cast %115 : vector<1x128xf32> to vector<1x128xf32>
    %117 = vector.broadcast %116 : vector<1x128xf32> to vector<256x128xf32>
    %118 = arith.cmpf oeq, %117, %3 : vector<256x128xf32>
    %119 = arith.extui %118 : vector<256x128xi1> to vector<256x128xi32>
    %120 = arith.sitofp %119 : vector<256x128xi32> to vector<256x128xf32>
    %121 = arith.addf %112, %120 : vector<256x128xf32>
    %c0_26 = arith.constant 0 : index
    %c13 = arith.constant 13 : index
    %c0_27 = arith.constant 0 : index
    %122 = vector.load %arg2[%c0_26, %c13, %c0_27] : memref<1x36x128xi8, #tpu.memory_space<vmem>>, vector<1x1x128xi8>
    %123 = vector.shape_cast %122 : vector<1x1x128xi8> to vector<1x128xi8>
    %124 = arith.sitofp %123 : vector<1x128xi8> to vector<1x128xf32>
    %125 = vector.shape_cast %124 : vector<1x128xf32> to vector<1x128xf32>
    %126 = vector.broadcast %125 : vector<1x128xf32> to vector<256x128xf32>
    %127 = arith.cmpf oeq, %126, %3 : vector<256x128xf32>
    %128 = arith.extui %127 : vector<256x128xi1> to vector<256x128xi32>
    %129 = arith.sitofp %128 : vector<256x128xi32> to vector<256x128xf32>
    %130 = arith.addf %121, %129 : vector<256x128xf32>
    %c0_28 = arith.constant 0 : index
    %c14 = arith.constant 14 : index
    %c0_29 = arith.constant 0 : index
    %131 = vector.load %arg2[%c0_28, %c14, %c0_29] : memref<1x36x128xi8, #tpu.memory_space<vmem>>, vector<1x1x128xi8>
    %132 = vector.shape_cast %131 : vector<1x1x128xi8> to vector<1x128xi8>
    %133 = arith.sitofp %132 : vector<1x128xi8> to vector<1x128xf32>
    %134 = vector.shape_cast %133 : vector<1x128xf32> to vector<1x128xf32>
    %135 = vector.broadcast %134 : vector<1x128xf32> to vector<256x128xf32>
    %136 = arith.cmpf oeq, %135, %3 : vector<256x128xf32>
    %137 = arith.extui %136 : vector<256x128xi1> to vector<256x128xi32>
    %138 = arith.sitofp %137 : vector<256x128xi32> to vector<256x128xf32>
    %139 = arith.addf %130, %138 : vector<256x128xf32>
    %c0_30 = arith.constant 0 : index
    %c15 = arith.constant 15 : index
    %c0_31 = arith.constant 0 : index
    %140 = vector.load %arg2[%c0_30, %c15, %c0_31] : memref<1x36x128xi8, #tpu.memory_space<vmem>>, vector<1x1x128xi8>
    %141 = vector.shape_cast %140 : vector<1x1x128xi8> to vector<1x128xi8>
    %142 = arith.sitofp %141 : vector<1x128xi8> to vector<1x128xf32>
    %143 = vector.shape_cast %142 : vector<1x128xf32> to vector<1x128xf32>
    %144 = vector.broadcast %143 : vector<1x128xf32> to vector<256x128xf32>
    %145 = arith.cmpf oeq, %144, %3 : vector<256x128xf32>
    %146 = arith.extui %145 : vector<256x128xi1> to vector<256x128xi32>
    %147 = arith.sitofp %146 : vector<256x128xi32> to vector<256x128xf32>
    %148 = arith.addf %139, %147 : vector<256x128xf32>
    %c0_32 = arith.constant 0 : index
    %c16 = arith.constant 16 : index
    %c0_33 = arith.constant 0 : index
    %149 = vector.load %arg2[%c0_32, %c16, %c0_33] : memref<1x36x128xi8, #tpu.memory_space<vmem>>, vector<1x1x128xi8>
    %150 = vector.shape_cast %149 : vector<1x1x128xi8> to vector<1x128xi8>
    %151 = arith.sitofp %150 : vector<1x128xi8> to vector<1x128xf32>
    %152 = vector.shape_cast %151 : vector<1x128xf32> to vector<1x128xf32>
    %153 = vector.broadcast %152 : vector<1x128xf32> to vector<256x128xf32>
    %154 = arith.cmpf oeq, %153, %3 : vector<256x128xf32>
    %155 = arith.extui %154 : vector<256x128xi1> to vector<256x128xi32>
    %156 = arith.sitofp %155 : vector<256x128xi32> to vector<256x128xf32>
    %157 = arith.addf %148, %156 : vector<256x128xf32>
    %c0_34 = arith.constant 0 : index
    %c17 = arith.constant 17 : index
    %c0_35 = arith.constant 0 : index
    %158 = vector.load %arg2[%c0_34, %c17, %c0_35] : memref<1x36x128xi8, #tpu.memory_space<vmem>>, vector<1x1x128xi8>
    %159 = vector.shape_cast %158 : vector<1x1x128xi8> to vector<1x128xi8>
    %160 = arith.sitofp %159 : vector<1x128xi8> to vector<1x128xf32>
    %161 = vector.shape_cast %160 : vector<1x128xf32> to vector<1x128xf32>
    %162 = vector.broadcast %161 : vector<1x128xf32> to vector<256x128xf32>
    %163 = arith.cmpf oeq, %162, %3 : vector<256x128xf32>
    %164 = arith.extui %163 : vector<256x128xi1> to vector<256x128xi32>
    %165 = arith.sitofp %164 : vector<256x128xi32> to vector<256x128xf32>
    %166 = arith.addf %157, %165 : vector<256x128xf32>
    %c0_36 = arith.constant 0 : index
    %c18 = arith.constant 18 : index
    %c0_37 = arith.constant 0 : index
    %167 = vector.load %arg2[%c0_36, %c18, %c0_37] : memref<1x36x128xi8, #tpu.memory_space<vmem>>, vector<1x1x128xi8>
    %168 = vector.shape_cast %167 : vector<1x1x128xi8> to vector<1x128xi8>
    %169 = arith.sitofp %168 : vector<1x128xi8> to vector<1x128xf32>
    %170 = vector.shape_cast %169 : vector<1x128xf32> to vector<1x128xf32>
    %171 = vector.broadcast %170 : vector<1x128xf32> to vector<256x128xf32>
    %172 = arith.cmpf oeq, %171, %3 : vector<256x128xf32>
    %173 = arith.extui %172 : vector<256x128xi1> to vector<256x128xi32>
    %174 = arith.sitofp %173 : vector<256x128xi32> to vector<256x128xf32>
    %175 = arith.addf %166, %174 : vector<256x128xf32>
    %c0_38 = arith.constant 0 : index
    %c19 = arith.constant 19 : index
    %c0_39 = arith.constant 0 : index
    %176 = vector.load %arg2[%c0_38, %c19, %c0_39] : memref<1x36x128xi8, #tpu.memory_space<vmem>>, vector<1x1x128xi8>
    %177 = vector.shape_cast %176 : vector<1x1x128xi8> to vector<1x128xi8>
    %178 = arith.sitofp %177 : vector<1x128xi8> to vector<1x128xf32>
    %179 = vector.shape_cast %178 : vector<1x128xf32> to vector<1x128xf32>
    %180 = vector.broadcast %179 : vector<1x128xf32> to vector<256x128xf32>
    %181 = arith.cmpf oeq, %180, %3 : vector<256x128xf32>
    %182 = arith.extui %181 : vector<256x128xi1> to vector<256x128xi32>
    %183 = arith.sitofp %182 : vector<256x128xi32> to vector<256x128xf32>
    %184 = arith.addf %175, %183 : vector<256x128xf32>
    %c0_40 = arith.constant 0 : index
    %c20 = arith.constant 20 : index
    %c0_41 = arith.constant 0 : index
    %185 = vector.load %arg2[%c0_40, %c20, %c0_41] : memref<1x36x128xi8, #tpu.memory_space<vmem>>, vector<1x1x128xi8>
    %186 = vector.shape_cast %185 : vector<1x1x128xi8> to vector<1x128xi8>
    %187 = arith.sitofp %186 : vector<1x128xi8> to vector<1x128xf32>
    %188 = vector.shape_cast %187 : vector<1x128xf32> to vector<1x128xf32>
    %189 = vector.broadcast %188 : vector<1x128xf32> to vector<256x128xf32>
    %190 = arith.cmpf oeq, %189, %3 : vector<256x128xf32>
    %191 = arith.extui %190 : vector<256x128xi1> to vector<256x128xi32>
    %192 = arith.sitofp %191 : vector<256x128xi32> to vector<256x128xf32>
    %193 = arith.addf %184, %192 : vector<256x128xf32>
    %c0_42 = arith.constant 0 : index
    %c21 = arith.constant 21 : index
    %c0_43 = arith.constant 0 : index
    %194 = vector.load %arg2[%c0_42, %c21, %c0_43] : memref<1x36x128xi8, #tpu.memory_space<vmem>>, vector<1x1x128xi8>
    %195 = vector.shape_cast %194 : vector<1x1x128xi8> to vector<1x128xi8>
    %196 = arith.sitofp %195 : vector<1x128xi8> to vector<1x128xf32>
    %197 = vector.shape_cast %196 : vector<1x128xf32> to vector<1x128xf32>
    %198 = vector.broadcast %197 : vector<1x128xf32> to vector<256x128xf32>
    %199 = arith.cmpf oeq, %198, %3 : vector<256x128xf32>
    %200 = arith.extui %199 : vector<256x128xi1> to vector<256x128xi32>
    %201 = arith.sitofp %200 : vector<256x128xi32> to vector<256x128xf32>
    %202 = arith.addf %193, %201 : vector<256x128xf32>
    %c0_44 = arith.constant 0 : index
    %c22 = arith.constant 22 : index
    %c0_45 = arith.constant 0 : index
    %203 = vector.load %arg2[%c0_44, %c22, %c0_45] : memref<1x36x128xi8, #tpu.memory_space<vmem>>, vector<1x1x128xi8>
    %204 = vector.shape_cast %203 : vector<1x1x128xi8> to vector<1x128xi8>
    %205 = arith.sitofp %204 : vector<1x128xi8> to vector<1x128xf32>
    %206 = vector.shape_cast %205 : vector<1x128xf32> to vector<1x128xf32>
    %207 = vector.broadcast %206 : vector<1x128xf32> to vector<256x128xf32>
    %208 = arith.cmpf oeq, %207, %3 : vector<256x128xf32>
    %209 = arith.extui %208 : vector<256x128xi1> to vector<256x128xi32>
    %210 = arith.sitofp %209 : vector<256x128xi32> to vector<256x128xf32>
    %211 = arith.addf %202, %210 : vector<256x128xf32>
    %c0_46 = arith.constant 0 : index
    %c23 = arith.constant 23 : index
    %c0_47 = arith.constant 0 : index
    %212 = vector.load %arg2[%c0_46, %c23, %c0_47] : memref<1x36x128xi8, #tpu.memory_space<vmem>>, vector<1x1x128xi8>
    %213 = vector.shape_cast %212 : vector<1x1x128xi8> to vector<1x128xi8>
    %214 = arith.sitofp %213 : vector<1x128xi8> to vector<1x128xf32>
    %215 = vector.shape_cast %214 : vector<1x128xf32> to vector<1x128xf32>
    %216 = vector.broadcast %215 : vector<1x128xf32> to vector<256x128xf32>
    %217 = arith.cmpf oeq, %216, %3 : vector<256x128xf32>
    %218 = arith.extui %217 : vector<256x128xi1> to vector<256x128xi32>
    %219 = arith.sitofp %218 : vector<256x128xi32> to vector<256x128xf32>
    %220 = arith.addf %211, %219 : vector<256x128xf32>
    %c0_48 = arith.constant 0 : index
    %c24 = arith.constant 24 : index
    %c0_49 = arith.constant 0 : index
    %221 = vector.load %arg2[%c0_48, %c24, %c0_49] : memref<1x36x128xi8, #tpu.memory_space<vmem>>, vector<1x1x128xi8>
    %222 = vector.shape_cast %221 : vector<1x1x128xi8> to vector<1x128xi8>
    %223 = arith.sitofp %222 : vector<1x128xi8> to vector<1x128xf32>
    %224 = vector.shape_cast %223 : vector<1x128xf32> to vector<1x128xf32>
    %225 = vector.broadcast %224 : vector<1x128xf32> to vector<256x128xf32>
    %226 = arith.cmpf oeq, %225, %3 : vector<256x128xf32>
    %227 = arith.extui %226 : vector<256x128xi1> to vector<256x128xi32>
    %228 = arith.sitofp %227 : vector<256x128xi32> to vector<256x128xf32>
    %229 = arith.addf %220, %228 : vector<256x128xf32>
    %c0_50 = arith.constant 0 : index
    %c25 = arith.constant 25 : index
    %c0_51 = arith.constant 0 : index
    %230 = vector.load %arg2[%c0_50, %c25, %c0_51] : memref<1x36x128xi8, #tpu.memory_space<vmem>>, vector<1x1x128xi8>
    %231 = vector.shape_cast %230 : vector<1x1x128xi8> to vector<1x128xi8>
    %232 = arith.sitofp %231 : vector<1x128xi8> to vector<1x128xf32>
    %233 = vector.shape_cast %232 : vector<1x128xf32> to vector<1x128xf32>
    %234 = vector.broadcast %233 : vector<1x128xf32> to vector<256x128xf32>
    %235 = arith.cmpf oeq, %234, %3 : vector<256x128xf32>
    %236 = arith.extui %235 : vector<256x128xi1> to vector<256x128xi32>
    %237 = arith.sitofp %236 : vector<256x128xi32> to vector<256x128xf32>
    %238 = arith.addf %229, %237 : vector<256x128xf32>
    %c0_52 = arith.constant 0 : index
    %c26 = arith.constant 26 : index
    %c0_53 = arith.constant 0 : index
    %239 = vector.load %arg2[%c0_52, %c26, %c0_53] : memref<1x36x128xi8, #tpu.memory_space<vmem>>, vector<1x1x128xi8>
    %240 = vector.shape_cast %239 : vector<1x1x128xi8> to vector<1x128xi8>
    %241 = arith.sitofp %240 : vector<1x128xi8> to vector<1x128xf32>
    %242 = vector.shape_cast %241 : vector<1x128xf32> to vector<1x128xf32>
    %243 = vector.broadcast %242 : vector<1x128xf32> to vector<256x128xf32>
    %244 = arith.cmpf oeq, %243, %3 : vector<256x128xf32>
    %245 = arith.extui %244 : vector<256x128xi1> to vector<256x128xi32>
    %246 = arith.sitofp %245 : vector<256x128xi32> to vector<256x128xf32>
    %247 = arith.addf %238, %246 : vector<256x128xf32>
    %c0_54 = arith.constant 0 : index
    %c27 = arith.constant 27 : index
    %c0_55 = arith.constant 0 : index
    %248 = vector.load %arg2[%c0_54, %c27, %c0_55] : memref<1x36x128xi8, #tpu.memory_space<vmem>>, vector<1x1x128xi8>
    %249 = vector.shape_cast %248 : vector<1x1x128xi8> to vector<1x128xi8>
    %250 = arith.sitofp %249 : vector<1x128xi8> to vector<1x128xf32>
    %251 = vector.shape_cast %250 : vector<1x128xf32> to vector<1x128xf32>
    %252 = vector.broadcast %251 : vector<1x128xf32> to vector<256x128xf32>
    %253 = arith.cmpf oeq, %252, %3 : vector<256x128xf32>
    %254 = arith.extui %253 : vector<256x128xi1> to vector<256x128xi32>
    %255 = arith.sitofp %254 : vector<256x128xi32> to vector<256x128xf32>
    %256 = arith.addf %247, %255 : vector<256x128xf32>
    %c0_56 = arith.constant 0 : index
    %c28 = arith.constant 28 : index
    %c0_57 = arith.constant 0 : index
    %257 = vector.load %arg2[%c0_56, %c28, %c0_57] : memref<1x36x128xi8, #tpu.memory_space<vmem>>, vector<1x1x128xi8>
    %258 = vector.shape_cast %257 : vector<1x1x128xi8> to vector<1x128xi8>
    %259 = arith.sitofp %258 : vector<1x128xi8> to vector<1x128xf32>
    %260 = vector.shape_cast %259 : vector<1x128xf32> to vector<1x128xf32>
    %261 = vector.broadcast %260 : vector<1x128xf32> to vector<256x128xf32>
    %262 = arith.cmpf oeq, %261, %3 : vector<256x128xf32>
    %263 = arith.extui %262 : vector<256x128xi1> to vector<256x128xi32>
    %264 = arith.sitofp %263 : vector<256x128xi32> to vector<256x128xf32>
    %265 = arith.addf %256, %264 : vector<256x128xf32>
    %c0_58 = arith.constant 0 : index
    %c29 = arith.constant 29 : index
    %c0_59 = arith.constant 0 : index
    %266 = vector.load %arg2[%c0_58, %c29, %c0_59] : memref<1x36x128xi8, #tpu.memory_space<vmem>>, vector<1x1x128xi8>
    %267 = vector.shape_cast %266 : vector<1x1x128xi8> to vector<1x128xi8>
    %268 = arith.sitofp %267 : vector<1x128xi8> to vector<1x128xf32>
    %269 = vector.shape_cast %268 : vector<1x128xf32> to vector<1x128xf32>
    %270 = vector.broadcast %269 : vector<1x128xf32> to vector<256x128xf32>
    %271 = arith.cmpf oeq, %270, %3 : vector<256x128xf32>
    %272 = arith.extui %271 : vector<256x128xi1> to vector<256x128xi32>
    %273 = arith.sitofp %272 : vector<256x128xi32> to vector<256x128xf32>
    %274 = arith.addf %265, %273 : vector<256x128xf32>
    %c0_60 = arith.constant 0 : index
    %c30 = arith.constant 30 : index
    %c0_61 = arith.constant 0 : index
    %275 = vector.load %arg2[%c0_60, %c30, %c0_61] : memref<1x36x128xi8, #tpu.memory_space<vmem>>, vector<1x1x128xi8>
    %276 = vector.shape_cast %275 : vector<1x1x128xi8> to vector<1x128xi8>
    %277 = arith.sitofp %276 : vector<1x128xi8> to vector<1x128xf32>
    %278 = vector.shape_cast %277 : vector<1x128xf32> to vector<1x128xf32>
    %279 = vector.broadcast %278 : vector<1x128xf32> to vector<256x128xf32>
    %280 = arith.cmpf oeq, %279, %3 : vector<256x128xf32>
    %281 = arith.extui %280 : vector<256x128xi1> to vector<256x128xi32>
    %282 = arith.sitofp %281 : vector<256x128xi32> to vector<256x128xf32>
    %283 = arith.addf %274, %282 : vector<256x128xf32>
    %c0_62 = arith.constant 0 : index
    %c31 = arith.constant 31 : index
    %c0_63 = arith.constant 0 : index
    %284 = vector.load %arg2[%c0_62, %c31, %c0_63] : memref<1x36x128xi8, #tpu.memory_space<vmem>>, vector<1x1x128xi8>
    %285 = vector.shape_cast %284 : vector<1x1x128xi8> to vector<1x128xi8>
    %286 = arith.sitofp %285 : vector<1x128xi8> to vector<1x128xf32>
    %287 = vector.shape_cast %286 : vector<1x128xf32> to vector<1x128xf32>
    %288 = vector.broadcast %287 : vector<1x128xf32> to vector<256x128xf32>
    %289 = arith.cmpf oeq, %288, %3 : vector<256x128xf32>
    %290 = arith.extui %289 : vector<256x128xi1> to vector<256x128xi32>
    %291 = arith.sitofp %290 : vector<256x128xi32> to vector<256x128xf32>
    %292 = arith.addf %283, %291 : vector<256x128xf32>
    %c0_64 = arith.constant 0 : index
    %c32 = arith.constant 32 : index
    %c0_65 = arith.constant 0 : index
    %293 = vector.load %arg2[%c0_64, %c32, %c0_65] : memref<1x36x128xi8, #tpu.memory_space<vmem>>, vector<1x1x128xi8>
    %294 = vector.shape_cast %293 : vector<1x1x128xi8> to vector<1x128xi8>
    %295 = arith.sitofp %294 : vector<1x128xi8> to vector<1x128xf32>
    %296 = vector.shape_cast %295 : vector<1x128xf32> to vector<1x128xf32>
    %297 = vector.broadcast %296 : vector<1x128xf32> to vector<256x128xf32>
    %298 = arith.cmpf oeq, %297, %3 : vector<256x128xf32>
    %299 = arith.extui %298 : vector<256x128xi1> to vector<256x128xi32>
    %300 = arith.sitofp %299 : vector<256x128xi32> to vector<256x128xf32>
    %301 = arith.addf %292, %300 : vector<256x128xf32>
    %c0_66 = arith.constant 0 : index
    %c33 = arith.constant 33 : index
    %c0_67 = arith.constant 0 : index
    %302 = vector.load %arg2[%c0_66, %c33, %c0_67] : memref<1x36x128xi8, #tpu.memory_space<vmem>>, vector<1x1x128xi8>
    %303 = vector.shape_cast %302 : vector<1x1x128xi8> to vector<1x128xi8>
    %304 = arith.sitofp %303 : vector<1x128xi8> to vector<1x128xf32>
    %305 = vector.shape_cast %304 : vector<1x128xf32> to vector<1x128xf32>
    %306 = vector.broadcast %305 : vector<1x128xf32> to vector<256x128xf32>
    %307 = arith.cmpf oeq, %306, %3 : vector<256x128xf32>
    %308 = arith.extui %307 : vector<256x128xi1> to vector<256x128xi32>
    %309 = arith.sitofp %308 : vector<256x128xi32> to vector<256x128xf32>
    %310 = arith.addf %301, %309 : vector<256x128xf32>
    %c0_68 = arith.constant 0 : index
    %c34 = arith.constant 34 : index
    %c0_69 = arith.constant 0 : index
    %311 = vector.load %arg2[%c0_68, %c34, %c0_69] : memref<1x36x128xi8, #tpu.memory_space<vmem>>, vector<1x1x128xi8>
    %312 = vector.shape_cast %311 : vector<1x1x128xi8> to vector<1x128xi8>
    %313 = arith.sitofp %312 : vector<1x128xi8> to vector<1x128xf32>
    %314 = vector.shape_cast %313 : vector<1x128xf32> to vector<1x128xf32>
    %315 = vector.broadcast %314 : vector<1x128xf32> to vector<256x128xf32>
    %316 = arith.cmpf oeq, %315, %3 : vector<256x128xf32>
    %317 = arith.extui %316 : vector<256x128xi1> to vector<256x128xi32>
    %318 = arith.sitofp %317 : vector<256x128xi32> to vector<256x128xf32>
    %319 = arith.addf %310, %318 : vector<256x128xf32>
    %c0_70 = arith.constant 0 : index
    %c35 = arith.constant 35 : index
    %c0_71 = arith.constant 0 : index
    %320 = vector.load %arg2[%c0_70, %c35, %c0_71] : memref<1x36x128xi8, #tpu.memory_space<vmem>>, vector<1x1x128xi8>
    %321 = vector.shape_cast %320 : vector<1x1x128xi8> to vector<1x128xi8>
    %322 = arith.sitofp %321 : vector<1x128xi8> to vector<1x128xf32>
    %323 = vector.shape_cast %322 : vector<1x128xf32> to vector<1x128xf32>
    %324 = vector.broadcast %323 : vector<1x128xf32> to vector<256x128xf32>
    %325 = arith.cmpf oeq, %324, %3 : vector<256x128xf32>
    %326 = arith.extui %325 : vector<256x128xi1> to vector<256x128xi32>
    %327 = arith.sitofp %326 : vector<256x128xi32> to vector<256x128xf32>
    %328 = arith.addf %319, %327 : vector<256x128xf32>
    %329 = arith.truncf %328 : vector<256x128xf32> to vector<256x128xbf16>
    %c0_72 = arith.constant 0 : index
    %c0_73 = arith.constant 0 : index
    %330 = vector.load %arg3[%c0_72, %c0_73] : memref<256x8xbf16, #tpu.memory_space<vmem>>, vector<256x8xbf16>
    %cst_74 = arith.constant dense<0.000000e+00> : vector<8x128xf32>
    %331 = tpu.matmul %330, %329, %cst_74 {dimension_numbers = #tpu.dot_dimension_numbers<[0], [0], [1], [1], [0, 1, 1, 1], [], []>} : vector<256x8xbf16>, vector<256x128xbf16>, vector<8x128xf32> -> vector<8x128xf32>
    %c0_75 = arith.constant 0 : index
    %c0_76 = arith.constant 0 : index
    %332 = vector.load %arg4[%c0_75, %c0_76] : memref<256x8xbf16, #tpu.memory_space<vmem>>, vector<256x8xbf16>
    %cst_77 = arith.constant dense<0.000000e+00> : vector<8x128xf32>
    %333 = tpu.matmul %332, %329, %cst_77 {dimension_numbers = #tpu.dot_dimension_numbers<[0], [0], [1], [1], [0, 1, 1, 1], [], []>} : vector<256x8xbf16>, vector<256x128xbf16>, vector<8x128xf32> -> vector<8x128xf32>
    %334 = arith.addf %331, %333 : vector<8x128xf32>
    %c0_78 = arith.constant 0 : index
    %c0_79 = arith.constant 0 : index
    %335 = vector.load %arg5[%c0_78, %c0_79] : memref<8x128xf32, #tpu.memory_space<vmem>>, vector<8x128xf32>
    %336 = arith.addf %334, %335 : vector<8x128xf32>
    %c0_80 = arith.constant 0 : index
    %c0_81 = arith.constant 0 : index
    %c0_82 = arith.constant 0 : index
    %337 = vector.load %arg6[%c0_80, %c0_81, %c0_82] : memref<1x8x128xf32, #tpu.memory_space<vmem>>, vector<1x8x128xf32>
    %338 = vector.shape_cast %337 : vector<1x8x128xf32> to vector<8x128xf32>
    %339 = vector.shape_cast %336 : vector<8x128xf32> to vector<1x8x128xf32>
    tpu.vector_store %arg6[%c0_80, %c0_81, %c0_82], %339 {strides = array<i32>} : memref<1x8x128xf32, #tpu.memory_space<vmem>>, vector<1x8x128xf32>,
    return
  }
  func.func @transform_0(%arg0: i32, %arg1: i32) -> (i32, i32, i32) {
    %c0_i32 = arith.constant 0 : i32
    %c0_i32_0 = arith.constant 0 : i32
    return %arg0, %c0_i32, %arg1 : i32, i32, i32
  }
  func.func @transform_1(%arg0: i32, %arg1: i32) -> (i32, i32) {
    %c0_i32 = arith.constant 0 : i32
    %c0_i32_0 = arith.constant 0 : i32
    %c0_i32_1 = arith.constant 0 : i32
    return %c0_i32, %c0_i32_0 : i32, i32
  }
  func.func @transform_2(%arg0: i32, %arg1: i32) -> (i32, i32) {
    %c0_i32 = arith.constant 0 : i32
    %c0_i32_0 = arith.constant 0 : i32
    %c0_i32_1 = arith.constant 0 : i32
    return %c0_i32, %c0_i32_0 : i32, i32
  }
  func.func @transform_3(%arg0: i32, %arg1: i32) -> (i32, i32) {
    %c0_i32 = arith.constant 0 : i32
    %c0_i32_0 = arith.constant 0 : i32
    %c0_i32_1 = arith.constant 0 : i32
    return %c0_i32, %c0_i32_0 : i32, i32
  }
  func.func @transform_4(%arg0: i32, %arg1: i32) -> (i32, i32, i32) {
    %c0_i32 = arith.constant 0 : i32
    %c0_i32_0 = arith.constant 0 : i32
    return %arg0, %c0_i32, %arg1 : i32, i32, i32
  }
}

</mosaic_0001>

<llo_original>
// kernel: tpu_custom_call.1
$region0: #{tpu_custom_call.1}
  #allocation0 [shape = 'u32[]', space=smem, size = 0x4, offset = 0x4, fixed_abs, tag = 'smem constant byte address 0x4 - core index']
  #allocation1 [shape = 'u32[144,128]{1,0:T(1,128)}', space=vmem, size = 0x12000, scoped, tag = 'internal scratch']
  %s0 = inlined_call_operand.vmem [shape: s8[2,36,256], index: 0, kind: input, shape index: {}]
  %s1 = inlined_call_operand.vmem [shape: bf16[256,8], index: 1, kind: input, shape index: {}]
  %s2 = inlined_call_operand.vmem [shape: bf16[256,8], index: 2, kind: input, shape index: {}]
  %s3 = inlined_call_operand.vmem [shape: f32[8,128], index: 3, kind: input, shape index: {}]
  %s4 = inlined_call_operand.hbm [shape: f32[2,8,256], index: 4, kind: output, shape index: {}]
  %s5 = sld [smem:[#allocation0]]
  $region90: #{tpu_custom_call.1} parent=0
    _
  %s7 = ssub.s32 1, %s5
  %s8 = scalar_select 0, %s7, %s5
  $region1: #{tpu_custom_call.1} parent=0
    #allocation2 [shape = 'u8[10240]{0}', space=vmem, size = 0x2800, scoped, tag = 'input window, operand 0']
    #allocation3 [shape = 'u8[8192]{0}', space=vmem, size = 0x2000, scoped, tag = 'output window, operand 0']
    #allocation4 [shape = 's32[2]{0}', space=sflag, size = 0x8, scoped, tag = 'scoped memory for tpu_custom_call.1']
    %9 = vsyncpa [#allocation4], 0
    %s10 = scalar_lea.sflag [#allocation4], 1
    %11 = vsyncpa %s10, 0
    loop: start=0, step=1, limit=6
    $region2: #{tpu_custom_call.1} parent=1 // loop_pre_header
      _
    $region3: #{tpu_custom_call.1} parent=1 // loop_header
      %s13 = sphi 0, %s17
      %p14 = scmp.ge.s32.totalorder %s13, 6
      %s20 = sphi 0, %s32
      %s21 = sphi 0, %s28
      %s22 = sphi 0, %s20
      %s23 = sphi 0, %s21
      %s24 = sphi 0, %s22
      %s25 = sphi 0, %s23
      %s37 = sphi 0, %s39
      %s40 = sphi 0, %s37
      %s41 = sphi 0, %s40
      %s57 = sphi 0, %s41
      %s61 = sphi 0, %s61
      %s63 = sphi 0, %s61
      %s64 = sphi 0, %s63
      %s78 = sphi 0, %s64
      %s82 = sphi 0, %s82
      %s84 = sphi 0, %s82
      %s85 = sphi 0, %s84
      %s99 = sphi 0, %s85
      %s103 = sphi 0, %s103
      %s105 = sphi 0, %s103
      %s106 = sphi 0, %s105
      %s120 = sphi 0, %s106
      %s128 = sphi 0, %s130
      %s131 = sphi 0, %s128
      %s132 = sphi 0, %s131
      %s148 = sphi 0, %s132
    $region4: #{tpu_custom_call.1} parent=1 // loop_header_branch
      %16 = sbr.rel (%p14) target = $region8
    $region5: #{tpu_custom_call.1} parent=1 // loop_body
      %s18 = ssub.s32 %s13, 1
      %s19 = ssub.s32 %s13, 2
      %s26 = sadd.s32 1, %s21
      %p27 = scmp.ge.s32.totalorder %s26, 2
      %s28 = scalar_select %p27, 0, %s26
      %s29 = sadd.s32 1, %s20
      %s30 = scalar_select %p27, %s29, %s20
      %p31 = scmp.ge.s32.totalorder %s30, 2
      %s32 = scalar_select %p31, 0, %s30
      %s33 = ssub.s32 %s20, %s32
      %s34 = ssub.s32 %s21, %s28
      %s35 = sor.u32 %s33, %s34
      %p36 = scmp.eq.s32.totalorder %s35, 0
      %s38 = sadd.s32 %s37, 1
      %s39 = scalar_select %p36, %s37, %s38
      %p42 = pneg %p36
      %p43 = scmp.eq.s32.totalorder %s13, 3
      %p44 = por %p42, %p43
      %p45 = scmp.ne.s32.totalorder %s37, %s40
      %p46 = scmp.eq.s32.totalorder %s13, 0
      %p47 = por %p45, %p46
      %p48 = scmp.ne.s32.totalorder %s37, %s40
      %p49 = scmp.eq.s32.totalorder %s18, 3
      %p50 = por %p48, %p49
      %p51 = scmp.ne.s32.totalorder %s40, %s41
      %p52 = scmp.eq.s32.totalorder %s18, 0
      %p53 = por %p51, %p52
      %p54 = scmp.ne.s32.totalorder %s40, %s41
      %p55 = scmp.eq.s32.totalorder %s19, 3
      %p56 = por %p54, %p55
      %p58 = scmp.ne.s32.totalorder %s41, %s57
      %p59 = scmp.eq.s32.totalorder %s19, 0
      %p60 = por %p58, %p59
      %s62 = sadd.s32 %s61, 1
      %p65 = scmp.eq.s32.totalorder %s13, 3
      %p66 = scmp.ne.s32.totalorder %s61, %s63
      %p67 = scmp.eq.s32.totalorder %s13, 0
      %p68 = por %p66, %p67
      %p69 = scmp.ne.s32.totalorder %s61, %s63
      %p70 = scmp.eq.s32.totalorder %s18, 3
      %p71 = por %p69, %p70
      %p72 = scmp.ne.s32.totalorder %s63, %s64
      %p73 = scmp.eq.s32.totalorder %s18, 0
      %p74 = por %p72, %p73
      %p75 = scmp.ne.s32.totalorder %s63, %s64
      %p76 = scmp.eq.s32.totalorder %s19, 3
      %p77 = por %p75, %p76
      %p79 = scmp.ne.s32.totalorder %s64, %s78
      %p80 = scmp.eq.s32.totalorder %s19, 0
      %p81 = por %p79, %p80
      %s83 = sadd.s32 %s82, 1
      %p86 = scmp.eq.s32.totalorder %s13, 3
      %p87 = scmp.ne.s32.totalorder %s82, %s84
      %p88 = scmp.eq.s32.totalorder %s13, 0
      %p89 = por %p87, %p88
      %p90 = scmp.ne.s32.totalorder %s82, %s84
      %p91 = scmp.eq.s32.totalorder %s18, 3
      %p92 = por %p90, %p91
      %p93 = scmp.ne.s32.totalorder %s84, %s85
      %p94 = scmp.eq.s32.totalorder %s18, 0
      %p95 = por %p93, %p94
      %p96 = scmp.ne.s32.totalorder %s84, %s85
      %p97 = scmp.eq.s32.totalorder %s19, 3
      %p98 = por %p96, %p97
      %p100 = scmp.ne.s32.totalorder %s85, %s99
      %p101 = scmp.eq.s32.totalorder %s19, 0
      %p102 = por %p100, %p101
      %s104 = sadd.s32 %s103, 1
      %p107 = scmp.eq.s32.totalorder %s13, 3
      %p108 = scmp.ne.s32.totalorder %s103, %s105
      %p109 = scmp.eq.s32.totalorder %s13, 0
      %p110 = por %p108, %p109
      %p111 = scmp.ne.s32.totalorder %s103, %s105
      %p112 = scmp.eq.s32.totalorder %s18, 3
      %p113 = por %p111, %p112
      %p114 = scmp.ne.s32.totalorder %s105, %s106
      %p115 = scmp.eq.s32.totalorder %s18, 0
      %p116 = por %p114, %p115
      %p117 = scmp.ne.s32.totalorder %s105, %s106
      %p118 = scmp.eq.s32.totalorder %s19, 3
      %p119 = por %p117, %p118
      %p121 = scmp.ne.s32.totalorder %s106, %s120
      %p122 = scmp.eq.s32.totalorder %s19, 0
      %p123 = por %p121, %p122
      %s124 = ssub.s32 %s20, %s32
      %s125 = ssub.s32 %s21, %s28
      %s126 = sor.u32 %s124, %s125
      %p127 = scmp.eq.s32.totalorder %s126, 0
      %s129 = sadd.s32 %s128, 1
      %s130 = scalar_select %p127, %s128, %s129
      %p133 = pneg %p127
      %p134 = scmp.eq.s32.totalorder %s13, 3
      %p135 = por %p133, %p134
      %p136 = scmp.ne.s32.totalorder %s128, %s131
      %p137 = scmp.eq.s32.totalorder %s13, 0
      %p138 = por %p136, %p137
      %p139 = scmp.ne.s32.totalorder %s128, %s131
      %p140 = scmp.eq.s32.totalorder %s18, 3
      %p141 = por %p139, %p140
      %p142 = scmp.ne.s32.totalorder %s131, %s132
      %p143 = scmp.eq.s32.totalorder %s18, 0
      %p144 = por %p142, %p143
      %p145 = scmp.ne.s32.totalorder %s131, %s132
      %p146 = scmp.eq.s32.totalorder %s19, 3
      %p147 = por %p145, %p146
      %p149 = scmp.ne.s32.totalorder %s132, %s148
      %p150 = scmp.eq.s32.totalorder %s19, 0
      %p151 = por %p149, %p150
      %p152 = scmp.le.s32.totalorder 1, %s13
      %p153 = scmp.lt.s32.totalorder %s13, 5
      %p154 = pnand %p152, %p153
      %p155 = pneg %p154
      // Predicated region
      $region9: #{tpu_custom_call.1} parent=5 // pred_check
        _
      $region10: #{tpu_custom_call.1} parent=5 // pred_check_branch
        %157 = sbr.rel (%p154) target = $region12
      $region11: #{tpu_custom_call.1} parent=5 // pred_region
        %s158 = ssub.s32 %s13, 1
        // Predicated region
        $region13: #{tpu_custom_call.1} parent=11 // pred_check
          %p159 = pneg %p74
        $region14: #{tpu_custom_call.1} parent=11 // pred_check_branch
          %161 = sbr.rel (%p159) target = $region16
        $region15: #{tpu_custom_call.1} parent=11 // pred_region
          _
        $region16: #{tpu_custom_call.1} parent=11 // pred_fallthru
          _
        // Predicated region
        $region17: #{tpu_custom_call.1} parent=11 // pred_check
          %p162 = pneg %p95
        $region18: #{tpu_custom_call.1} parent=11 // pred_check_branch
          %164 = sbr.rel (%p162) target = $region20
        $region19: #{tpu_custom_call.1} parent=11 // pred_region
          _
        $region20: #{tpu_custom_call.1} parent=11 // pred_fallthru
          _
        // Predicated region
        $region21: #{tpu_custom_call.1} parent=11 // pred_check
          %p165 = pneg %p116
        $region22: #{tpu_custom_call.1} parent=11 // pred_check_branch
          %167 = sbr.rel (%p165) target = $region24
        $region23: #{tpu_custom_call.1} parent=11 // pred_region
          _
        $region24: #{tpu_custom_call.1} parent=11 // pred_fallthru
          _
      $region12: #{tpu_custom_call.1} parent=5 // pred_fallthru
        _
      %p168 = scmp.lt.s32.totalorder %s13, 4
      // Predicated region
      $region25: #{tpu_custom_call.1} parent=5 // pred_check
        %p169 = pneg %p168
      $region26: #{tpu_custom_call.1} parent=5 // pred_check_branch
        %171 = sbr.rel (%p169) target = $region28
      $region27: #{tpu_custom_call.1} parent=5 // pred_region
        // Predicated region
        $region29: #{tpu_custom_call.1} parent=27 // pred_check
          %p172 = pneg %p47
        $region30: #{tpu_custom_call.1} parent=27 // pred_check_branch
          %174 = sbr.rel (%p172) target = $region32
        $region31: #{tpu_custom_call.1} parent=27 // pred_region
          %s175 = sand.u32 %s37, 1
          %s176 = sand.u32 %s37, 1
          %s177 = smul.addr %s176, 10
          %s178 = scalar_lea.vmem [#allocation2], %s177
          %s179 = smul.addr %s20, 10
          %s180 = sadd.s32 %s21, %s179
          %s181 = smul.addr %s180, 2
          %s182 = scalar_lea.vmem %s0, %s181
          // Predicated region
          $region33: #{tpu_custom_call.1} parent=31 // pred_check
            _
          $region34: #{tpu_custom_call.1} parent=31 // pred_check_branch
            %184 = sbr.rel (0) target = $region36
          $region35: #{tpu_custom_call.1} parent=31 // pred_region
            // Predicated region
            $region37: #{tpu_custom_call.1} parent=35 // pred_check
              _
            $region38: #{tpu_custom_call.1} parent=35 // pred_check_branch
              %186 = sbr.rel target = $region40
            $region39: #{tpu_custom_call.1} parent=35 // pred_region
              // Predicated region
              $region52: #{tpu_custom_call.1} parent=39 // pred_check
                _
              $region53: #{tpu_custom_call.1} parent=39 // pred_check_branch
                %210 = sbr.rel (0) target = $region55
              $region54: #{tpu_custom_call.1} parent=39 // pred_region
                loop: start=0, step=1, limit=1
                $region56: #{tpu_custom_call.1} parent=54 // loop_pre_header
                  _
                $region57: #{tpu_custom_call.1} parent=54 // loop_header
                  %s212 = sphi 0, %s216
                  %p213 = scmp.ge.s32.totalorder %s212, 1
                  %s217 = sphi %s182, %s182
                  %s218 = sphi %s178, %s178
                $region58: #{tpu_custom_call.1} parent=54 // loop_header_branch
                  %215 = sbr.rel (%p213) target = $region62
                $region59: #{tpu_custom_call.1} parent=54 // loop_body
                  _
                $region60: #{tpu_custom_call.1} parent=54 // loop_footer
                  %s216 = sadd.s32 1, %s212
                $region61: #{tpu_custom_call.1} parent=54 // loop_footer_branch
                  %211 = sbr.rel target = $region57
                $region62: #{tpu_custom_call.1} parent=54 // loop_exit
                  _
                %s220 = ssub.s32 4, 1
                loop: start=0, step=1, limit=1
                $region63: #{tpu_custom_call.1} parent=54 // loop_pre_header
                  _
                $region64: #{tpu_custom_call.1} parent=54 // loop_header
                  %s222 = sphi 0, %s226
                  %p223 = scmp.ge.s32.totalorder %s222, 1
                  %s227 = sphi %s182, %s182
                  %s228 = sphi %s178, %s178
                $region65: #{tpu_custom_call.1} parent=54 // loop_header_branch
                  %225 = sbr.rel (%p223) target = $region69
                $region66: #{tpu_custom_call.1} parent=54 // loop_body
                  %v229 = vld [vmem:[%s227] sm:%s220]
                  %230 = vst [vmem:[%s228] sm:%s220] %v229
                  %v231 = vld [vmem:[%s227 + $0x4] sm:%s220]
                  %232 = vst [vmem:[%s228 + $0x2] sm:%s220] %v231
                  %v233 = vld [vmem:[%s227 + $0x8] sm:%s220]
                  %234 = vst [vmem:[%s228 + $0x4] sm:%s220] %v233
                  %v235 = vld [vmem:[%s227 + $0xc] sm:%s220]
                  %236 = vst [vmem:[%s228 + $0x6] sm:%s220] %v235
                  %v237 = vld [vmem:[%s227 + $0x10] sm:%s220]
                  %238 = vst [vmem:[%s228 + $0x8] sm:%s220] %v237
                $region67: #{tpu_custom_call.1} parent=54 // loop_footer
                  %s226 = sadd.s32 1, %s222
                $region68: #{tpu_custom_call.1} parent=54 // loop_footer_branch
                  %221 = sbr.rel target = $region64
                $region69: #{tpu_custom_call.1} parent=54 // loop_exit
                  _
              $region55: #{tpu_custom_call.1} parent=39 // pred_fallthru
                _
            $region40: #{tpu_custom_call.1} parent=35 // pred_fallthru
              _
            // Predicated region
            $region41: #{tpu_custom_call.1} parent=35 // pred_check
              _
            $region42: #{tpu_custom_call.1} parent=35 // pred_check_branch
              %188 = sbr.rel (0) target = $region44
            $region43: #{tpu_custom_call.1} parent=35 // pred_region
              %s190 = ssub.s32 4, 1
              loop: start=0, step=1, limit=1
              $region45: #{tpu_custom_call.1} parent=43 // loop_pre_header
                _
              $region46: #{tpu_custom_call.1} parent=43 // loop_header
                %s192 = sphi 0, %s196
                %p193 = scmp.ge.s32.totalorder %s192, 1
                %s197 = sphi %s182, %s182
                %s198 = sphi %s178, %s178
              $region47: #{tpu_custom_call.1} parent=43 // loop_header_branch
                %195 = sbr.rel (%p193) target = $region51
              $region48: #{tpu_custom_call.1} parent=43 // loop_body
                %v199 = vld [vmem:[%s197] sm:%s190]
                %200 = vst [vmem:[%s198] sm:%s190] %v199
                %v201 = vld [vmem:[%s197 + $0x4] sm:%s190]
                %202 = vst [vmem:[%s198 + $0x2] sm:%s190] %v201
                %v203 = vld [vmem:[%s197 + $0x8] sm:%s190]
                %204 = vst [vmem:[%s198 + $0x4] sm:%s190] %v203
                %v205 = vld [vmem:[%s197 + $0xc] sm:%s190]
                %206 = vst [vmem:[%s198 + $0x6] sm:%s190] %v205
                %v207 = vld [vmem:[%s197 + $0x10] sm:%s190]
                %208 = vst [vmem:[%s198 + $0x8] sm:%s190] %v207
              $region49: #{tpu_custom_call.1} parent=43 // loop_footer
                %s196 = sadd.s32 1, %s192
              $region50: #{tpu_custom_call.1} parent=43 // loop_footer_branch
                %191 = sbr.rel target = $region46
              $region51: #{tpu_custom_call.1} parent=43 // loop_exit
                _
            $region44: #{tpu_custom_call.1} parent=35 // pred_fallthru
              _
          $region36: #{tpu_custom_call.1} parent=31 // pred_fallthru
            _
          %239 = vnop
        $region32: #{tpu_custom_call.1} parent=27 // pred_fallthru
          _
      $region28: #{tpu_custom_call.1} parent=5 // pred_fallthru
        _
      %p240 = scmp.le.s32.totalorder 1, %s13
      %p241 = scmp.lt.s32.totalorder %s13, 5
      %p242 = pnand %p240, %p241
      %p243 = pneg %p242
      // Predicated region
      $region70: #{tpu_custom_call.1} parent=5 // pred_check
        _
      $region71: #{tpu_custom_call.1} parent=5 // pred_check_branch
        %245 = sbr.rel (%p242) target = $region73
      $region72: #{tpu_custom_call.1} parent=5 // pred_region
        %s246 = ssub.s32 %s13, 1
        %s247 = sand.u32 %s40, 1
        %s248 = sand.u32 %s40, 1
        %s249 = smul.addr %s248, 10
        %s250 = scalar_lea.vmem [#allocation2], %s249
        // Predicated region
        $region74: #{tpu_custom_call.1} parent=72 // pred_check
          %p251 = pneg %p53
        $region75: #{tpu_custom_call.1} parent=72 // pred_check_branch
          %253 = sbr.rel (%p251) target = $region77
        $region76: #{tpu_custom_call.1} parent=72 // pred_region
          _
        $region77: #{tpu_custom_call.1} parent=72 // pred_fallthru
          _
        %s254 = sand.u32 %s40, 1
        %s255 = sand.u32 %s40, 1
        %s256 = smul.addr %s255, 10
        %s257 = scalar_lea.vmem [#allocation2], %s256
        %p258 = pneg %p53
        %p259 = pneg %p50
        %p260 = pneg %p74
        %p261 = pneg %p71
        %p262 = pneg %p95
        %p263 = pneg %p92
        %p264 = pneg %p116
        %p265 = pneg %p113
        %p266 = pneg %p144
        %p267 = pneg %p141
        %s268 = sand.u32 %s131, 1
        %s269 = scalar_lea.sflag [#allocation4], %s268
        %s270 = sand.u32 %s131, 1
        %s271 = smul.addr %s270, 8
        %s272 = scalar_lea.vmem [#allocation3], %s271
        %v274 = vlaneseq
        %v275 = vshrl.u32 %v274, 7
        %v276 = vadd.s32 %v275, 8
        %v277 = vadd.s32 %v275, 16
        %v278 = vadd.s32 %v275, 24
        %v279 = vadd.s32 %v275, 32
        %v280 = vadd.s32 %v275, 40
        %v281 = vadd.s32 %v275, 48
        %v282 = vadd.s32 %v275, 56
        %v283 = vadd.s32 %v275, 64
        %v284 = vadd.s32 %v275, 72
        %v285 = vadd.s32 %v275, 80
        %v286 = vadd.s32 %v275, 88
        %v287 = vadd.s32 %v275, 96
        %v288 = vadd.s32 %v275, 104
        %v289 = vadd.s32 %v275, 112
        %v290 = vadd.s32 %v275, 120
        %v291 = vadd.s32 %v275, 136
        %v292 = vadd.s32 %v275, 144
        %v293 = vadd.s32 %v275, 152
        %v294 = vadd.s32 %v275, 160
        %v295 = vadd.s32 %v275, 168
        %v296 = vadd.s32 %v275, 176
        %v297 = vadd.s32 %v275, 184
        %v298 = vadd.s32 %v275, 192
        %v299 = vadd.s32 %v275, 200
        %v300 = vadd.s32 %v275, 208
        %v301 = vadd.s32 %v275, 216
        %v302 = vadd.s32 %v275, 224
        %v303 = vadd.s32 %v275, 232
        %v304 = vadd.s32 %v275, 240
        %v305 = vadd.s32 %v275, 248
        %v306 = vsub.s32 %v275, 128
        %v307 = vsub.s32 %v276, 128
        %v308 = vsub.s32 %v277, 128
        %v309 = vsub.s32 %v278, 128
        %v310 = vsub.s32 %v279, 128
        %v311 = vsub.s32 %v280, 128
        %v312 = vsub.s32 %v281, 128
        %v313 = vsub.s32 %v282, 128
        %v314 = vsub.s32 %v283, 128
        %v315 = vsub.s32 %v284, 128
        %v316 = vsub.s32 %v285, 128
        %v317 = vsub.s32 %v286, 128
        %v318 = vsub.s32 %v287, 128
        %v319 = vsub.s32 %v288, 128
        %v320 = vsub.s32 %v289, 128
        %v321 = vsub.s32 %v290, 128
        %v322 = vsub.s32 %v291, 128
        %v323 = vsub.s32 %v292, 128
        %v324 = vsub.s32 %v293, 128
        %v325 = vsub.s32 %v294, 128
        %v326 = vsub.s32 %v295, 128
        %v327 = vsub.s32 %v296, 128
        %v328 = vsub.s32 %v297, 128
        %v329 = vsub.s32 %v298, 128
        %v330 = vsub.s32 %v299, 128
        %v331 = vsub.s32 %v300, 128
        %v332 = vsub.s32 %v301, 128
        %v333 = vsub.s32 %v302, 128
        %v334 = vsub.s32 %v303, 128
        %v335 = vsub.s32 %v304, 128
        %v336 = vsub.s32 %v305, 128
        %v337 = vcvt.s32.f32 %v306
        %v338 = vcvt.s32.f32 %v307
        %v339 = vcvt.s32.f32 %v308
        %v340 = vcvt.s32.f32 %v309
        %v341 = vcvt.s32.f32 %v310
        %v342 = vcvt.s32.f32 %v311
        %v343 = vcvt.s32.f32 %v312
        %v344 = vcvt.s32.f32 %v313
        %v345 = vcvt.s32.f32 %v314
        %v346 = vcvt.s32.f32 %v315
        %v347 = vcvt.s32.f32 %v316
        %v348 = vcvt.s32.f32 %v317
        %v349 = vcvt.s32.f32 %v318
        %v350 = vcvt.s32.f32 %v319
        %v351 = vcvt.s32.f32 %v320
        %v352 = vcvt.s32.f32 %v321
        %v353 = vcvt.s32.f32 %v275
        %v354 = vcvt.s32.f32 %v322
        %v355 = vcvt.s32.f32 %v323
        %v356 = vcvt.s32.f32 %v324
        %v357 = vcvt.s32.f32 %v325
        %v358 = vcvt.s32.f32 %v326
        %v359 = vcvt.s32.f32 %v327
        %v360 = vcvt.s32.f32 %v328
        %v361 = vcvt.s32.f32 %v329
        %v362 = vcvt.s32.f32 %v330
        %v363 = vcvt.s32.f32 %v331
        %v364 = vcvt.s32.f32 %v332
        %v365 = vcvt.s32.f32 %v333
        %v366 = vcvt.s32.f32 %v334
        %v367 = vcvt.s32.f32 %v335
        %v368 = vcvt.s32.f32 %v336
        %v369 = vld [vmem:[%s250] sm:$0x1]
        %v370 = vunpack.c.0.s8 %v369
        %v371 = vcvt.s32.f32 %v370
        %v372 = vlaneseq
        %v373 = vshrl.u32 %v372, 7
        %v374 = vsub.s32 0, %v373
        %v375 = vrot.slane %v371, %v374
        %vm376 = vcmp.eq.f32.partialorder %v375, %v337
        %vm377 = vcmp.eq.f32.partialorder %v375, %v338
        %vm378 = vcmp.eq.f32.partialorder %v375, %v339
        %vm379 = vcmp.eq.f32.partialorder %v375, %v340
        %vm380 = vcmp.eq.f32.partialorder %v375, %v341
        %vm381 = vcmp.eq.f32.partialorder %v375, %v342
        %vm382 = vcmp.eq.f32.partialorder %v375, %v343
        %vm383 = vcmp.eq.f32.partialorder %v375, %v344
        %vm384 = vcmp.eq.f32.partialorder %v375, %v345
        %vm385 = vcmp.eq.f32.partialorder %v375, %v346
        %vm386 = vcmp.eq.f32.partialorder %v375, %v347
        %vm387 = vcmp.eq.f32.partialorder %v375, %v348
        %vm388 = vcmp.eq.f32.partialorder %v375, %v349
        %vm389 = vcmp.eq.f32.partialorder %v375, %v350
        %vm390 = vcmp.eq.f32.partialorder %v375, %v351
        %vm391 = vcmp.eq.f32.partialorder %v375, %v352
        %vm392 = vcmp.eq.f32.partialorder %v375, %v353
        %vm393 = vcmp.eq.f32.partialorder %v375, %v354
        %vm394 = vcmp.eq.f32.partialorder %v375, %v355
        %vm395 = vcmp.eq.f32.partialorder %v375, %v356
        %vm396 = vcmp.eq.f32.partialorder %v375, %v357
        %vm397 = vcmp.eq.f32.partialorder %v375, %v358
        %vm398 = vcmp.eq.f32.partialorder %v375, %v359
        %vm399 = vcmp.eq.f32.partialorder %v375, %v360
        %vm400 = vcmp.eq.f32.partialorder %v375, %v361
        %vm401 = vcmp.eq.f32.partialorder %v375, %v362
        %vm402 = vcmp.eq.f32.partialorder %v375, %v363
        %vm403 = vcmp.eq.f32.partialorder %v375, %v364
        %vm404 = vcmp.eq.f32.partialorder %v375, %v365
        %vm405 = vcmp.eq.f32.partialorder %v375, %v366
        %vm406 = vcmp.eq.f32.partialorder %v375, %v367
        %vm407 = vcmp.eq.f32.partialorder %v375, %v368
        %v408 = vsel %vm376, 1, 0
        %v409 = vsel %vm377, 1, 0
        %v410 = vsel %vm378, 1, 0
        %v411 = vsel %vm379, 1, 0
        %v412 = vsel %vm380, 1, 0
        %v413 = vsel %vm381, 1, 0
        %v414 = vsel %vm382, 1, 0
        %v415 = vsel %vm383, 1, 0
        %v416 = vsel %vm384, 1, 0
        %v417 = vsel %vm385, 1, 0
        %v418 = vsel %vm386, 1, 0
        %v419 = vsel %vm387, 1, 0
        %v420 = vsel %vm388, 1, 0
        %v421 = vsel %vm389, 1, 0
        %v422 = vsel %vm390, 1, 0
        %v423 = vsel %vm391, 1, 0
        %v424 = vsel %vm392, 1, 0
        %v425 = vsel %vm393, 1, 0
        %v426 = vsel %vm394, 1, 0
        %v427 = vsel %vm395, 1, 0
        %v428 = vsel %vm396, 1, 0
        %v429 = vsel %vm397, 1, 0
        %v430 = vsel %vm398, 1, 0
        %v431 = vsel %vm399, 1, 0
        %v432 = vsel %vm400, 1, 0
        %v433 = vsel %vm401, 1, 0
        %v434 = vsel %vm402, 1, 0
        %v435 = vsel %vm403, 1, 0
        %v436 = vsel %vm404, 1, 0
        %v437 = vsel %vm405, 1, 0
        %v438 = vsel %vm406, 1, 0
        %v439 = vsel %vm407, 1, 0
        %v440 = vcvt.s32.f32 %v408
        %v441 = vcvt.s32.f32 %v409
        %v442 = vcvt.s32.f32 %v410
        %v443 = vcvt.s32.f32 %v411
        %v444 = vcvt.s32.f32 %v412
        %v445 = vcvt.s32.f32 %v413
        %v446 = vcvt.s32.f32 %v414
        %v447 = vcvt.s32.f32 %v415
        %v448 = vcvt.s32.f32 %v416
        %v449 = vcvt.s32.f32 %v417
        %v450 = vcvt.s32.f32 %v418
        %v451 = vcvt.s32.f32 %v419
        %v452 = vcvt.s32.f32 %v420
        %v453 = vcvt.s32.f32 %v421
        %v454 = vcvt.s32.f32 %v422
        %v455 = vcvt.s32.f32 %v423
        %v456 = vcvt.s32.f32 %v424
        %v457 = vcvt.s32.f32 %v425
        %v458 = vcvt.s32.f32 %v426
        %v459 = vcvt.s32.f32 %v427
        %v460 = vcvt.s32.f32 %v428
        %v461 = vcvt.s32.f32 %v429
        %v462 = vcvt.s32.f32 %v430
        %v463 = vcvt.s32.f32 %v431
        %v464 = vcvt.s32.f32 %v432
        %v465 = vcvt.s32.f32 %v433
        %v466 = vcvt.s32.f32 %v434
        %v467 = vcvt.s32.f32 %v435
        %v468 = vcvt.s32.f32 %v436
        %v469 = vcvt.s32.f32 %v437
        %v470 = vcvt.s32.f32 %v438
        %v471 = vcvt.s32.f32 %v439
        %v472 = vadd.f32 %v440, 0.0
        %v473 = vadd.f32 %v441, 0.0
        %v474 = vadd.f32 %v442, 0.0
        %v475 = vadd.f32 %v443, 0.0
        %v476 = vadd.f32 %v444, 0.0
        %v477 = vadd.f32 %v445, 0.0
        %v478 = vadd.f32 %v446, 0.0
        %v479 = vadd.f32 %v447, 0.0
        %v480 = vadd.f32 %v448, 0.0
        %v481 = vadd.f32 %v449, 0.0
        %v482 = vadd.f32 %v450, 0.0
        %v483 = vadd.f32 %v451, 0.0
        %v484 = vadd.f32 %v452, 0.0
        %v485 = vadd.f32 %v453, 0.0
        %v486 = vadd.f32 %v454, 0.0
        %v487 = vadd.f32 %v455, 0.0
        %v488 = vadd.f32 %v456, 0.0
        %v489 = vadd.f32 %v457, 0.0
        %v490 = vadd.f32 %v458, 0.0
        %v491 = vadd.f32 %v459, 0.0
        %v492 = vadd.f32 %v460, 0.0
        %v493 = vadd.f32 %v461, 0.0
        %v494 = vadd.f32 %v462, 0.0
        %v495 = vadd.f32 %v463, 0.0
        %v496 = vadd.f32 %v464, 0.0
        %v497 = vadd.f32 %v465, 0.0
        %v498 = vadd.f32 %v466, 0.0
        %v499 = vadd.f32 %v467, 0.0
        %v500 = vadd.f32 %v468, 0.0
        %v501 = vadd.f32 %v469, 0.0
        %v502 = vadd.f32 %v470, 0.0
        %v503 = vadd.f32 %v471, 0.0
        %v504 = vlaneseq
        %v505 = vshrl.u32 %v504, 7
        %v506 = vsub.s32 1, %v505
        %v507 = vrot.slane %v371, %v506
        %vm508 = vcmp.eq.f32.partialorder %v507, %v337
        %vm509 = vcmp.eq.f32.partialorder %v507, %v338
        %vm510 = vcmp.eq.f32.partialorder %v507, %v339
        %vm511 = vcmp.eq.f32.partialorder %v507, %v340
        %vm512 = vcmp.eq.f32.partialorder %v507, %v341
        %vm513 = vcmp.eq.f32.partialorder %v507, %v342
        %vm514 = vcmp.eq.f32.partialorder %v507, %v343
        %vm515 = vcmp.eq.f32.partialorder %v507, %v344
        %vm516 = vcmp.eq.f32.partialorder %v507, %v345
        %vm517 = vcmp.eq.f32.partialorder %v507, %v346
        %vm518 = vcmp.eq.f32.partialorder %v507, %v347
        %vm519 = vcmp.eq.f32.partialorder %v507, %v348
        %vm520 = vcmp.eq.f32.partialorder %v507, %v349
        %vm521 = vcmp.eq.f32.partialorder %v507, %v350
        %vm522 = vcmp.eq.f32.partialorder %v507, %v351
        %vm523 = vcmp.eq.f32.partialorder %v507, %v352
        %vm524 = vcmp.eq.f32.partialorder %v507, %v353
        %vm525 = vcmp.eq.f32.partialorder %v507, %v354
        %vm526 = vcmp.eq.f32.partialorder %v507, %v355
        %vm527 = vcmp.eq.f32.partialorder %v507, %v356
        %vm528 = vcmp.eq.f32.partialorder %v507, %v357
        %vm529 = vcmp.eq.f32.partialorder %v507, %v358
        %vm530 = vcmp.eq.f32.partialorder %v507, %v359
        %vm531 = vcmp.eq.f32.partialorder %v507, %v360
        %vm532 = vcmp.eq.f32.partialorder %v507, %v361
        %vm533 = vcmp.eq.f32.partialorder %v507, %v362
        %vm534 = vcmp.eq.f32.partialorder %v507, %v363
        %vm535 = vcmp.eq.f32.partialorder %v507, %v364
        %vm536 = vcmp.eq.f32.partialorder %v507, %v365
        %vm537 = vcmp.eq.f32.partialorder %v507, %v366
        %vm538 = vcmp.eq.f32.partialorder %v507, %v367
        %vm539 = vcmp.eq.f32.partialorder %v507, %v368
        %v540 = vsel %vm508, 1, 0
        %v541 = vsel %vm509, 1, 0
        %v542 = vsel %vm510, 1, 0
        %v543 = vsel %vm511, 1, 0
        %v544 = vsel %vm512, 1, 0
        %v545 = vsel %vm513, 1, 0
        %v546 = vsel %vm514, 1, 0
        %v547 = vsel %vm515, 1, 0
        %v548 = vsel %vm516, 1, 0
        %v549 = vsel %vm517, 1, 0
        %v550 = vsel %vm518, 1, 0
        %v551 = vsel %vm519, 1, 0
        %v552 = vsel %vm520, 1, 0
        %v553 = vsel %vm521, 1, 0
        %v554 = vsel %vm522, 1, 0
        %v555 = vsel %vm523, 1, 0
        %v556 = vsel %vm524, 1, 0
        %v557 = vsel %vm525, 1, 0
        %v558 = vsel %vm526, 1, 0
        %v559 = vsel %vm527, 1, 0
        %v560 = vsel %vm528, 1, 0
        %v561 = vsel %vm529, 1, 0
        %v562 = vsel %vm530, 1, 0
        %v563 = vsel %vm531, 1, 0
        %v564 = vsel %vm532, 1, 0
        %v565 = vsel %vm533, 1, 0
        %v566 = vsel %vm534, 1, 0
        %v567 = vsel %vm535, 1, 0
        %v568 = vsel %vm536, 1, 0
        %v569 = vsel %vm537, 1, 0
        %v570 = vsel %vm538, 1, 0
        %v571 = vsel %vm539, 1, 0
        %v572 = vcvt.s32.f32 %v540
        %v573 = vcvt.s32.f32 %v541
        %v574 = vcvt.s32.f32 %v542
        %v575 = vcvt.s32.f32 %v543
        %v576 = vcvt.s32.f32 %v544
        %v577 = vcvt.s32.f32 %v545
        %v578 = vcvt.s32.f32 %v546
        %v579 = vcvt.s32.f32 %v547
        %v580 = vcvt.s32.f32 %v548
        %v581 = vcvt.s32.f32 %v549
        %v582 = vcvt.s32.f32 %v550
        %v583 = vcvt.s32.f32 %v551
        %v584 = vcvt.s32.f32 %v552
        %v585 = vcvt.s32.f32 %v553
        %v586 = vcvt.s32.f32 %v554
        %v587 = vcvt.s32.f32 %v555
        %v588 = vcvt.s32.f32 %v556
        %v589 = vcvt.s32.f32 %v557
        %v590 = vcvt.s32.f32 %v558
        %v591 = vcvt.s32.f32 %v559
        %v592 = vcvt.s32.f32 %v560
        %v593 = vcvt.s32.f32 %v561
        %v594 = vcvt.s32.f32 %v562
        %v595 = vcvt.s32.f32 %v563
        %v596 = vcvt.s32.f32 %v564
        %v597 = vcvt.s32.f32 %v565
        %v598 = vcvt.s32.f32 %v566
        %v599 = vcvt.s32.f32 %v567
        %v600 = vcvt.s32.f32 %v568
        %v601 = vcvt.s32.f32 %v569
        %v602 = vcvt.s32.f32 %v570
        %v603 = vcvt.s32.f32 %v571
        %v604 = vadd.f32 %v472, %v572
        %v605 = vadd.f32 %v473, %v573
        %v606 = vadd.f32 %v474, %v574
        %v607 = vadd.f32 %v475, %v575
        %v608 = vadd.f32 %v476, %v576
        %v609 = vadd.f32 %v477, %v577
        %v610 = vadd.f32 %v478, %v578
        %v611 = vadd.f32 %v479, %v579
        %v612 = vadd.f32 %v480, %v580
        %v613 = vadd.f32 %v481, %v581
        %v614 = vadd.f32 %v482, %v582
        %v615 = vadd.f32 %v483, %v583
        %v616 = vadd.f32 %v484, %v584
        %v617 = vadd.f32 %v485, %v585
        %v618 = vadd.f32 %v486, %v586
        %v619 = vadd.f32 %v487, %v587
        %v620 = vadd.f32 %v488, %v588
        %v621 = vadd.f32 %v489, %v589
        %v622 = vadd.f32 %v490, %v590
        %v623 = vadd.f32 %v491, %v591
        %v624 = vadd.f32 %v492, %v592
        %v625 = vadd.f32 %v493, %v593
        %v626 = vadd.f32 %v494, %v594
        %v627 = vadd.f32 %v495, %v595
        %v628 = vadd.f32 %v496, %v596
        %v629 = vadd.f32 %v497, %v597
        %v630 = vadd.f32 %v498, %v598
        %v631 = vadd.f32 %v499, %v599
        %v632 = vadd.f32 %v500, %v600
        %v633 = vadd.f32 %v501, %v601
        %v634 = vadd.f32 %v502, %v602
        %v635 = vadd.f32 %v503, %v603
        %v636 = vlaneseq
        %v637 = vshrl.u32 %v636, 7
        %v638 = vsub.s32 2, %v637
        %v639 = vrot.slane %v371, %v638
        %vm640 = vcmp.eq.f32.partialorder %v639, %v337
        %vm641 = vcmp.eq.f32.partialorder %v639, %v338
        %vm642 = vcmp.eq.f32.partialorder %v639, %v339
        %vm643 = vcmp.eq.f32.partialorder %v639, %v340
        %vm644 = vcmp.eq.f32.partialorder %v639, %v341
        %vm645 = vcmp.eq.f32.partialorder %v639, %v342
        %vm646 = vcmp.eq.f32.partialorder %v639, %v343
        %vm647 = vcmp.eq.f32.partialorder %v639, %v344
        %vm648 = vcmp.eq.f32.partialorder %v639, %v345
        %vm649 = vcmp.eq.f32.partialorder %v639, %v346
        %vm650 = vcmp.eq.f32.partialorder %v639, %v347
        %vm651 = vcmp.eq.f32.partialorder %v639, %v348
        %vm652 = vcmp.eq.f32.partialorder %v639, %v349
        %vm653 = vcmp.eq.f32.partialorder %v639, %v350
        %vm654 = vcmp.eq.f32.partialorder %v639, %v351
        %vm655 = vcmp.eq.f32.partialorder %v639, %v352
        %vm656 = vcmp.eq.f32.partialorder %v639, %v353
        %vm657 = vcmp.eq.f32.partialorder %v639, %v354
        %vm658 = vcmp.eq.f32.partialorder %v639, %v355
        %vm659 = vcmp.eq.f32.partialorder %v639, %v356
        %vm660 = vcmp.eq.f32.partialorder %v639, %v357
        %vm661 = vcmp.eq.f32.partialorder %v639, %v358
        %vm662 = vcmp.eq.f32.partialorder %v639, %v359
        %vm663 = vcmp.eq.f32.partialorder %v639, %v360
        %vm664 = vcmp.eq.f32.partialorder %v639, %v361
        %vm665 = vcmp.eq.f32.partialorder %v639, %v362
        %vm666 = vcmp.eq.f32.partialorder %v639, %v363
        %vm667 = vcmp.eq.f32.partialorder %v639, %v364
        %vm668 = vcmp.eq.f32.partialorder %v639, %v365
        %vm669 = vcmp.eq.f32.partialorder %v639, %v366
        %vm670 = vcmp.eq.f32.partialorder %v639, %v367
        %vm671 = vcmp.eq.f32.partialorder %v639, %v368
        %v672 = vsel %vm640, 1, 0
        %v673 = vsel %vm641, 1, 0
        %v674 = vsel %vm642, 1, 0
        %v675 = vsel %vm643, 1, 0
        %v676 = vsel %vm644, 1, 0
        %v677 = vsel %vm645, 1, 0
        %v678 = vsel %vm646, 1, 0
        %v679 = vsel %vm647, 1, 0
        %v680 = vsel %vm648, 1, 0
        %v681 = vsel %vm649, 1, 0
        %v682 = vsel %vm650, 1, 0
        %v683 = vsel %vm651, 1, 0
        %v684 = vsel %vm652, 1, 0
        %v685 = vsel %vm653, 1, 0
        %v686 = vsel %vm654, 1, 0
        %v687 = vsel %vm655, 1, 0
        %v688 = vsel %vm656, 1, 0
        %v689 = vsel %vm657, 1, 0
        %v690 = vsel %vm658, 1, 0
        %v691 = vsel %vm659, 1, 0
        %v692 = vsel %vm660, 1, 0
        %v693 = vsel %vm661, 1, 0
        %v694 = vsel %vm662, 1, 0
        %v695 = vsel %vm663, 1, 0
        %v696 = vsel %vm664, 1, 0
        %v697 = vsel %vm665, 1, 0
        %v698 = vsel %vm666, 1, 0
        %v699 = vsel %vm667, 1, 0
        %v700 = vsel %vm668, 1, 0
        %v701 = vsel %vm669, 1, 0
        %v702 = vsel %vm670, 1, 0
        %v703 = vsel %vm671, 1, 0
        %v704 = vcvt.s32.f32 %v672
        %v705 = vcvt.s32.f32 %v673
        %v706 = vcvt.s32.f32 %v674
        %v707 = vcvt.s32.f32 %v675
        %v708 = vcvt.s32.f32 %v676
        %v709 = vcvt.s32.f32 %v677
        %v710 = vcvt.s32.f32 %v678
        %v711 = vcvt.s32.f32 %v679
        %v712 = vcvt.s32.f32 %v680
        %v713 = vcvt.s32.f32 %v681
        %v714 = vcvt.s32.f32 %v682
        %v715 = vcvt.s32.f32 %v683
        %v716 = vcvt.s32.f32 %v684
        %v717 = vcvt.s32.f32 %v685
        %v718 = vcvt.s32.f32 %v686
        %v719 = vcvt.s32.f32 %v687
        %v720 = vcvt.s32.f32 %v688
        %v721 = vcvt.s32.f32 %v689
        %v722 = vcvt.s32.f32 %v690
        %v723 = vcvt.s32.f32 %v691
        %v724 = vcvt.s32.f32 %v692
        %v725 = vcvt.s32.f32 %v693
        %v726 = vcvt.s32.f32 %v694
        %v727 = vcvt.s32.f32 %v695
        %v728 = vcvt.s32.f32 %v696
        %v729 = vcvt.s32.f32 %v697
        %v730 = vcvt.s32.f32 %v698
        %v731 = vcvt.s32.f32 %v699
        %v732 = vcvt.s32.f32 %v700
        %v733 = vcvt.s32.f32 %v701
        %v734 = vcvt.s32.f32 %v702
        %v735 = vcvt.s32.f32 %v703
        %v736 = vadd.f32 %v604, %v704
        %v737 = vadd.f32 %v605, %v705
        %v738 = vadd.f32 %v606, %v706
        %v739 = vadd.f32 %v607, %v707
        %v740 = vadd.f32 %v608, %v708
        %v741 = vadd.f32 %v609, %v709
        %v742 = vadd.f32 %v610, %v710
        %v743 = vadd.f32 %v611, %v711
        %v744 = vadd.f32 %v612, %v712
        %v745 = vadd.f32 %v613, %v713
        %v746 = vadd.f32 %v614, %v714
        %v747 = vadd.f32 %v615, %v715
        %v748 = vadd.f32 %v616, %v716
        %v749 = vadd.f32 %v617, %v717
        %v750 = vadd.f32 %v618, %v718
        %v751 = vadd.f32 %v619, %v719
        %v752 = vadd.f32 %v620, %v720
        %v753 = vadd.f32 %v621, %v721
        %v754 = vadd.f32 %v622, %v722
        %v755 = vadd.f32 %v623, %v723
        %v756 = vadd.f32 %v624, %v724
        %v757 = vadd.f32 %v625, %v725
        %v758 = vadd.f32 %v626, %v726
        %v759 = vadd.f32 %v627, %v727
        %v760 = vadd.f32 %v628, %v728
        %v761 = vadd.f32 %v629, %v729
        %v762 = vadd.f32 %v630, %v730
        %v763 = vadd.f32 %v631, %v731
        %v764 = vadd.f32 %v632, %v732
        %v765 = vadd.f32 %v633, %v733
        %v766 = vadd.f32 %v634, %v734
        %v767 = vadd.f32 %v635, %v735
        %v768 = vlaneseq
        %v769 = vshrl.u32 %v768, 7
        %v770 = vsub.s32 3, %v769
        %v771 = vrot.slane %v371, %v770
        %vm772 = vcmp.eq.f32.partialorder %v771, %v337
        %vm773 = vcmp.eq.f32.partialorder %v771, %v338
        %vm774 = vcmp.eq.f32.partialorder %v771, %v339
        %vm775 = vcmp.eq.f32.partialorder %v771, %v340
        %vm776 = vcmp.eq.f32.partialorder %v771, %v341
        %vm777 = vcmp.eq.f32.partialorder %v771, %v342
        %vm778 = vcmp.eq.f32.partialorder %v771, %v343
        %vm779 = vcmp.eq.f32.partialorder %v771, %v344
        %vm780 = vcmp.eq.f32.partialorder %v771, %v345
        %vm781 = vcmp.eq.f32.partialorder %v771, %v346
        %vm782 = vcmp.eq.f32.partialorder %v771, %v347
        %vm783 = vcmp.eq.f32.partialorder %v771, %v348
        %vm784 = vcmp.eq.f32.partialorder %v771, %v349
        %vm785 = vcmp.eq.f32.partialorder %v771, %v350
        %vm786 = vcmp.eq.f32.partialorder %v771, %v351
        %vm787 = vcmp.eq.f32.partialorder %v771, %v352
        %vm788 = vcmp.eq.f32.partialorder %v771, %v353
        %vm789 = vcmp.eq.f32.partialorder %v771, %v354
        %vm790 = vcmp.eq.f32.partialorder %v771, %v355
        %vm791 = vcmp.eq.f32.partialorder %v771, %v356
        %vm792 = vcmp.eq.f32.partialorder %v771, %v357
        %vm793 = vcmp.eq.f32.partialorder %v771, %v358
        %vm794 = vcmp.eq.f32.partialorder %v771, %v359
        %vm795 = vcmp.eq.f32.partialorder %v771, %v360
        %vm796 = vcmp.eq.f32.partialorder %v771, %v361
        %vm797 = vcmp.eq.f32.partialorder %v771, %v362
        %vm798 = vcmp.eq.f32.partialorder %v771, %v363
        %vm799 = vcmp.eq.f32.partialorder %v771, %v364
        %vm800 = vcmp.eq.f32.partialorder %v771, %v365
        %vm801 = vcmp.eq.f32.partialorder %v771, %v366
        %vm802 = vcmp.eq.f32.partialorder %v771, %v367
        %vm803 = vcmp.eq.f32.partialorder %v771, %v368
        %v804 = vsel %vm772, 1, 0
        %v805 = vsel %vm773, 1, 0
        %v806 = vsel %vm774, 1, 0
        %v807 = vsel %vm775, 1, 0
        %v808 = vsel %vm776, 1, 0
        %v809 = vsel %vm777, 1, 0
        %v810 = vsel %vm778, 1, 0
        %v811 = vsel %vm779, 1, 0
        %v812 = vsel %vm780, 1, 0
        %v813 = vsel %vm781, 1, 0
        %v814 = vsel %vm782, 1, 0
        %v815 = vsel %vm783, 1, 0
        %v816 = vsel %vm784, 1, 0
        %v817 = vsel %vm785, 1, 0
        %v818 = vsel %vm786, 1, 0
        %v819 = vsel %vm787, 1, 0
        %v820 = vsel %vm788, 1, 0
        %v821 = vsel %vm789, 1, 0
        %v822 = vsel %vm790, 1, 0
        %v823 = vsel %vm791, 1, 0
        %v824 = vsel %vm792, 1, 0
        %v825 = vsel %vm793, 1, 0
        %v826 = vsel %vm794, 1, 0
        %v827 = vsel %vm795, 1, 0
        %v828 = vsel %vm796, 1, 0
        %v829 = vsel %vm797, 1, 0
        %v830 = vsel %vm798, 1, 0
        %v831 = vsel %vm799, 1, 0
        %v832 = vsel %vm800, 1, 0
        %v833 = vsel %vm801, 1, 0
        %v834 = vsel %vm802, 1, 0
        %v835 = vsel %vm803, 1, 0
        %v836 = vcvt.s32.f32 %v804
        %v837 = vcvt.s32.f32 %v805
        %v838 = vcvt.s32.f32 %v806
        %v839 = vcvt.s32.f32 %v807
        %v840 = vcvt.s32.f32 %v808
        %v841 = vcvt.s32.f32 %v809
        %v842 = vcvt.s32.f32 %v810
        %v843 = vcvt.s32.f32 %v811
        %v844 = vcvt.s32.f32 %v812
        %v845 = vcvt.s32.f32 %v813
        %v846 = vcvt.s32.f32 %v814
        %v847 = vcvt.s32.f32 %v815
        %v848 = vcvt.s32.f32 %v816
        %v849 = vcvt.s32.f32 %v817
        %v850 = vcvt.s32.f32 %v818
        %v851 = vcvt.s32.f32 %v819
        %v852 = vcvt.s32.f32 %v820
        %v853 = vcvt.s32.f32 %v821
        %v854 = vcvt.s32.f32 %v822
        %v855 = vcvt.s32.f32 %v823
        %v856 = vcvt.s32.f32 %v824
        %v857 = vcvt.s32.f32 %v825
        %v858 = vcvt.s32.f32 %v826
        %v859 = vcvt.s32.f32 %v827
        %v860 = vcvt.s32.f32 %v828
        %v861 = vcvt.s32.f32 %v829
        %v862 = vcvt.s32.f32 %v830
        %v863 = vcvt.s32.f32 %v831
        %v864 = vcvt.s32.f32 %v832
        %v865 = vcvt.s32.f32 %v833
        %v866 = vcvt.s32.f32 %v834
        %v867 = vcvt.s32.f32 %v835
        %v868 = vadd.f32 %v736, %v836
        %v869 = vadd.f32 %v737, %v837
        %v870 = vadd.f32 %v738, %v838
        %v871 = vadd.f32 %v739, %v839
        %v872 = vadd.f32 %v740, %v840
        %v873 = vadd.f32 %v741, %v841
        %v874 = vadd.f32 %v742, %v842
        %v875 = vadd.f32 %v743, %v843
        %v876 = vadd.f32 %v744, %v844
        %v877 = vadd.f32 %v745, %v845
        %v878 = vadd.f32 %v746, %v846
        %v879 = vadd.f32 %v747, %v847
        %v880 = vadd.f32 %v748, %v848
        %v881 = vadd.f32 %v749, %v849
        %v882 = vadd.f32 %v750, %v850
        %v883 = vadd.f32 %v751, %v851
        %v884 = vadd.f32 %v752, %v852
        %v885 = vadd.f32 %v753, %v853
        %v886 = vadd.f32 %v754, %v854
        %v887 = vadd.f32 %v755, %v855
        %v888 = vadd.f32 %v756, %v856
        %v889 = vadd.f32 %v757, %v857
        %v890 = vadd.f32 %v758, %v858
        %v891 = vadd.f32 %v759, %v859
        %v892 = vadd.f32 %v760, %v860
        %v893 = vadd.f32 %v761, %v861
        %v894 = vadd.f32 %v762, %v862
        %v895 = vadd.f32 %v763, %v863
        %v896 = vadd.f32 %v764, %v864
        %v897 = vadd.f32 %v765, %v865
        %v898 = vadd.f32 %v766, %v866
        %v899 = vadd.f32 %v767, %v867
        %v900 = vld [vmem:[%s250] sm:$0x2]
        %v901 = vunpack.c.0.s8 %v900
        %v902 = vcvt.s32.f32 %v901
        %v903 = vlaneseq
        %v904 = vshrl.u32 %v903, 7
        %v905 = vsub.s32 4, %v904
        %v906 = vrot.slane %v902, %v905
        %vm907 = vcmp.eq.f32.partialorder %v906, %v337
        %vm908 = vcmp.eq.f32.partialorder %v906, %v338
        %vm909 = vcmp.eq.f32.partialorder %v906, %v339
        %vm910 = vcmp.eq.f32.partialorder %v906, %v340
        %vm911 = vcmp.eq.f32.partialorder %v906, %v341
        %vm912 = vcmp.eq.f32.partialorder %v906, %v342
        %vm913 = vcmp.eq.f32.partialorder %v906, %v343
        %vm914 = vcmp.eq.f32.partialorder %v906, %v344
        %vm915 = vcmp.eq.f32.partialorder %v906, %v345
        %vm916 = vcmp.eq.f32.partialorder %v906, %v346
        %vm917 = vcmp.eq.f32.partialorder %v906, %v347
        %vm918 = vcmp.eq.f32.partialorder %v906, %v348
        %vm919 = vcmp.eq.f32.partialorder %v906, %v349
        %vm920 = vcmp.eq.f32.partialorder %v906, %v350
        %vm921 = vcmp.eq.f32.partialorder %v906, %v351
        %vm922 = vcmp.eq.f32.partialorder %v906, %v352
        %vm923 = vcmp.eq.f32.partialorder %v906, %v353
        %vm924 = vcmp.eq.f32.partialorder %v906, %v354
        %vm925 = vcmp.eq.f32.partialorder %v906, %v355
        %vm926 = vcmp.eq.f32.partialorder %v906, %v356
        %vm927 = vcmp.eq.f32.partialorder %v906, %v357
        %vm928 = vcmp.eq.f32.partialorder %v906, %v358
        %vm929 = vcmp.eq.f32.partialorder %v906, %v359
        %vm930 = vcmp.eq.f32.partialorder %v906, %v360
        %vm931 = vcmp.eq.f32.partialorder %v906, %v361
        %vm932 = vcmp.eq.f32.partialorder %v906, %v362
        %vm933 = vcmp.eq.f32.partialorder %v906, %v363
        %vm934 = vcmp.eq.f32.partialorder %v906, %v364
        %vm935 = vcmp.eq.f32.partialorder %v906, %v365
        %vm936 = vcmp.eq.f32.partialorder %v906, %v366
        %vm937 = vcmp.eq.f32.partialorder %v906, %v367
        %vm938 = vcmp.eq.f32.partialorder %v906, %v368
        %v939 = vsel %vm907, 1, 0
        %v940 = vsel %vm908, 1, 0
        %v941 = vsel %vm909, 1, 0
        %v942 = vsel %vm910, 1, 0
        %v943 = vsel %vm911, 1, 0
        %v944 = vsel %vm912, 1, 0
        %v945 = vsel %vm913, 1, 0
        %v946 = vsel %vm914, 1, 0
        %v947 = vsel %vm915, 1, 0
        %v948 = vsel %vm916, 1, 0
        %v949 = vsel %vm917, 1, 0
        %v950 = vsel %vm918, 1, 0
        %v951 = vsel %vm919, 1, 0
        %v952 = vsel %vm920, 1, 0
        %v953 = vsel %vm921, 1, 0
        %v954 = vsel %vm922, 1, 0
        %v955 = vsel %vm923, 1, 0
        %v956 = vsel %vm924, 1, 0
        %v957 = vsel %vm925, 1, 0
        %v958 = vsel %vm926, 1, 0
        %v959 = vsel %vm927, 1, 0
        %v960 = vsel %vm928, 1, 0
        %v961 = vsel %vm929, 1, 0
        %v962 = vsel %vm930, 1, 0
        %v963 = vsel %vm931, 1, 0
        %v964 = vsel %vm932, 1, 0
        %v965 = vsel %vm933, 1, 0
        %v966 = vsel %vm934, 1, 0
        %v967 = vsel %vm935, 1, 0
        %v968 = vsel %vm936, 1, 0
        %v969 = vsel %vm937, 1, 0
        %v970 = vsel %vm938, 1, 0
        %v971 = vcvt.s32.f32 %v939
        %v972 = vcvt.s32.f32 %v940
        %v973 = vcvt.s32.f32 %v941
        %v974 = vcvt.s32.f32 %v942
        %v975 = vcvt.s32.f32 %v943
        %v976 = vcvt.s32.f32 %v944
        %v977 = vcvt.s32.f32 %v945
        %v978 = vcvt.s32.f32 %v946
        %v979 = vcvt.s32.f32 %v947
        %v980 = vcvt.s32.f32 %v948
        %v981 = vcvt.s32.f32 %v949
        %v982 = vcvt.s32.f32 %v950
        %v983 = vcvt.s32.f32 %v951
        %v984 = vcvt.s32.f32 %v952
        %v985 = vcvt.s32.f32 %v953
        %v986 = vcvt.s32.f32 %v954
        %v987 = vcvt.s32.f32 %v955
        %v988 = vcvt.s32.f32 %v956
        %v989 = vcvt.s32.f32 %v957
        %v990 = vcvt.s32.f32 %v958
        %v991 = vcvt.s32.f32 %v959
        %v992 = vcvt.s32.f32 %v960
        %v993 = vcvt.s32.f32 %v961
        %v994 = vcvt.s32.f32 %v962
        %v995 = vcvt.s32.f32 %v963
        %v996 = vcvt.s32.f32 %v964
        %v997 = vcvt.s32.f32 %v965
        %v998 = vcvt.s32.f32 %v966
        %v999 = vcvt.s32.f32 %v967
        %v1000 = vcvt.s32.f32 %v968
        %v1001 = vcvt.s32.f32 %v969
        %v1002 = vcvt.s32.f32 %v970
        %v1003 = vadd.f32 %v868, %v971
        %v1004 = vadd.f32 %v869, %v972
        %v1005 = vadd.f32 %v870, %v973
        %v1006 = vadd.f32 %v871, %v974
        %v1007 = vadd.f32 %v872, %v975
        %v1008 = vadd.f32 %v873, %v976
        %v1009 = vadd.f32 %v874, %v977
        %v1010 = vadd.f32 %v875, %v978
        %v1011 = vadd.f32 %v876, %v979
        %v1012 = vadd.f32 %v877, %v980
        %v1013 = vadd.f32 %v878, %v981
        %v1014 = vadd.f32 %v879, %v982
        %v1015 = vadd.f32 %v880, %v983
        %v1016 = vadd.f32 %v881, %v984
        %v1017 = vadd.f32 %v882, %v985
        %v1018 = vadd.f32 %v883, %v986
        %v1019 = vadd.f32 %v884, %v987
        %v1020 = vadd.f32 %v885, %v988
        %v1021 = vadd.f32 %v886, %v989
        %v1022 = vadd.f32 %v887, %v990
        %v1023 = vadd.f32 %v888, %v991
        %v1024 = vadd.f32 %v889, %v992
        %v1025 = vadd.f32 %v890, %v993
        %v1026 = vadd.f32 %v891, %v994
        %v1027 = vadd.f32 %v892, %v995
        %v1028 = vadd.f32 %v893, %v996
        %v1029 = vadd.f32 %v894, %v997
        %v1030 = vadd.f32 %v895, %v998
        %v1031 = vadd.f32 %v896, %v999
        %v1032 = vadd.f32 %v897, %v1000
        %v1033 = vadd.f32 %v898, %v1001
        %v1034 = vadd.f32 %v899, %v1002
        %v1035 = vlaneseq
        %v1036 = vshrl.u32 %v1035, 7
        %v1037 = vsub.s32 5, %v1036
        %v1038 = vrot.slane %v902, %v1037
        %vm1039 = vcmp.eq.f32.partialorder %v1038, %v337
        %vm1040 = vcmp.eq.f32.partialorder %v1038, %v338
        %vm1041 = vcmp.eq.f32.partialorder %v1038, %v339
        %vm1042 = vcmp.eq.f32.partialorder %v1038, %v340
        %vm1043 = vcmp.eq.f32.partialorder %v1038, %v341
        %vm1044 = vcmp.eq.f32.partialorder %v1038, %v342
        %vm1045 = vcmp.eq.f32.partialorder %v1038, %v343
        %vm1046 = vcmp.eq.f32.partialorder %v1038, %v344
        %vm1047 = vcmp.eq.f32.partialorder %v1038, %v345
        %vm1048 = vcmp.eq.f32.partialorder %v1038, %v346
        %vm1049 = vcmp.eq.f32.partialorder %v1038, %v347
        %vm1050 = vcmp.eq.f32.partialorder %v1038, %v348
        %vm1051 = vcmp.eq.f32.partialorder %v1038, %v349
        %vm1052 = vcmp.eq.f32.partialorder %v1038, %v350
        %vm1053 = vcmp.eq.f32.partialorder %v1038, %v351
        %vm1054 = vcmp.eq.f32.partialorder %v1038, %v352
        %vm1055 = vcmp.eq.f32.partialorder %v1038, %v353
        %vm1056 = vcmp.eq.f32.partialorder %v1038, %v354
        %vm1057 = vcmp.eq.f32.partialorder %v1038, %v355
        %vm1058 = vcmp.eq.f32.partialorder %v1038, %v356
        %vm1059 = vcmp.eq.f32.partialorder %v1038, %v357
        %vm1060 = vcmp.eq.f32.partialorder %v1038, %v358
        %vm1061 = vcmp.eq.f32.partialorder %v1038, %v359
        %vm1062 = vcmp.eq.f32.partialorder %v1038, %v360
        %vm1063 = vcmp.eq.f32.partialorder %v1038, %v361
        %vm1064 = vcmp.eq.f32.partialorder %v1038, %v362
        %vm1065 = vcmp.eq.f32.partialorder %v1038, %v363
        %vm1066 = vcmp.eq.f32.partialorder %v1038, %v364
        %vm1067 = vcmp.eq.f32.partialorder %v1038, %v365
        %vm1068 = vcmp.eq.f32.partialorder %v1038, %v366
        %vm1069 = vcmp.eq.f32.partialorder %v1038, %v367
        %vm1070 = vcmp.eq.f32.partialorder %v1038, %v368
        %v1071 = vsel %vm1039, 1, 0
        %v1072 = vsel %vm1040, 1, 0
        %v1073 = vsel %vm1041, 1, 0
        %v1074 = vsel %vm1042, 1, 0
        %v1075 = vsel %vm1043, 1, 0
        %v1076 = vsel %vm1044, 1, 0
        %v1077 = vsel %vm1045, 1, 0
        %v1078 = vsel %vm1046, 1, 0
        %v1079 = vsel %vm1047, 1, 0
        %v1080 = vsel %vm1048, 1, 0
        %v1081 = vsel %vm1049, 1, 0
        %v1082 = vsel %vm1050, 1, 0
        %v1083 = vsel %vm1051, 1, 0
        %v1084 = vsel %vm1052, 1, 0
        %v1085 = vsel %vm1053, 1, 0
        %v1086 = vsel %vm1054, 1, 0
        %v1087 = vsel %vm1055, 1, 0
        %v1088 = vsel %vm1056, 1, 0
        %v1089 = vsel %vm1057, 1, 0
        %v1090 = vsel %vm1058, 1, 0
        %v1091 = vsel %vm1059, 1, 0
        %v1092 = vsel %vm1060, 1, 0
        %v1093 = vsel %vm1061, 1, 0
        %v1094 = vsel %vm1062, 1, 0
        %v1095 = vsel %vm1063, 1, 0
        %v1096 = vsel %vm1064, 1, 0
        %v1097 = vsel %vm1065, 1, 0
        %v1098 = vsel %vm1066, 1, 0
        %v1099 = vsel %vm1067, 1, 0
        %v1100 = vsel %vm1068, 1, 0
        %v1101 = vsel %vm1069, 1, 0
        %v1102 = vsel %vm1070, 1, 0
        %v1103 = vcvt.s32.f32 %v1071
        %v1104 = vcvt.s32.f32 %v1072
        %v1105 = vcvt.s32.f32 %v1073
        %v1106 = vcvt.s32.f32 %v1074
        %v1107 = vcvt.s32.f32 %v1075
        %v1108 = vcvt.s32.f32 %v1076
        %v1109 = vcvt.s32.f32 %v1077
        %v1110 = vcvt.s32.f32 %v1078
        %v1111 = vcvt.s32.f32 %v1079
        %v1112 = vcvt.s32.f32 %v1080
        %v1113 = vcvt.s32.f32 %v1081
        %v1114 = vcvt.s32.f32 %v1082
        %v1115 = vcvt.s32.f32 %v1083
        %v1116 = vcvt.s32.f32 %v1084
        %v1117 = vcvt.s32.f32 %v1085
        %v1118 = vcvt.s32.f32 %v1086
        %v1119 = vcvt.s32.f32 %v1087
        %v1120 = vcvt.s32.f32 %v1088
        %v1121 = vcvt.s32.f32 %v1089
        %v1122 = vcvt.s32.f32 %v1090
        %v1123 = vcvt.s32.f32 %v1091
        %v1124 = vcvt.s32.f32 %v1092
        %v1125 = vcvt.s32.f32 %v1093
        %v1126 = vcvt.s32.f32 %v1094
        %v1127 = vcvt.s32.f32 %v1095
        %v1128 = vcvt.s32.f32 %v1096
        %v1129 = vcvt.s32.f32 %v1097
        %v1130 = vcvt.s32.f32 %v1098
        %v1131 = vcvt.s32.f32 %v1099
        %v1132 = vcvt.s32.f32 %v1100
        %v1133 = vcvt.s32.f32 %v1101
        %v1134 = vcvt.s32.f32 %v1102
        %v1135 = vadd.f32 %v1003, %v1103
        %v1136 = vadd.f32 %v1004, %v1104
        %v1137 = vadd.f32 %v1005, %v1105
        %v1138 = vadd.f32 %v1006, %v1106
        %v1139 = vadd.f32 %v1007, %v1107
        %v1140 = vadd.f32 %v1008, %v1108
        %v1141 = vadd.f32 %v1009, %v1109
        %v1142 = vadd.f32 %v1010, %v1110
        %v1143 = vadd.f32 %v1011, %v1111
        %v1144 = vadd.f32 %v1012, %v1112
        %v1145 = vadd.f32 %v1013, %v1113
        %v1146 = vadd.f32 %v1014, %v1114
        %v1147 = vadd.f32 %v1015, %v1115
        %v1148 = vadd.f32 %v1016, %v1116
        %v1149 = vadd.f32 %v1017, %v1117
        %v1150 = vadd.f32 %v1018, %v1118
        %v1151 = vadd.f32 %v1019, %v1119
        %v1152 = vadd.f32 %v1020, %v1120
        %v1153 = vadd.f32 %v1021, %v1121
        %v1154 = vadd.f32 %v1022, %v1122
        %v1155 = vadd.f32 %v1023, %v1123
        %v1156 = vadd.f32 %v1024, %v1124
        %v1157 = vadd.f32 %v1025, %v1125
        %v1158 = vadd.f32 %v1026, %v1126
        %v1159 = vadd.f32 %v1027, %v1127
        %v1160 = vadd.f32 %v1028, %v1128
        %v1161 = vadd.f32 %v1029, %v1129
        %v1162 = vadd.f32 %v1030, %v1130
        %v1163 = vadd.f32 %v1031, %v1131
        %v1164 = vadd.f32 %v1032, %v1132
        %v1165 = vadd.f32 %v1033, %v1133
        %v1166 = vadd.f32 %v1034, %v1134
        %v1167 = vlaneseq
        %v1168 = vshrl.u32 %v1167, 7
        %v1169 = vsub.s32 6, %v1168
        %v1170 = vrot.slane %v902, %v1169
        %vm1171 = vcmp.eq.f32.partialorder %v1170, %v337
        %vm1172 = vcmp.eq.f32.partialorder %v1170, %v338
        %vm1173 = vcmp.eq.f32.partialorder %v1170, %v339
        %vm1174 = vcmp.eq.f32.partialorder %v1170, %v340
        %vm1175 = vcmp.eq.f32.partialorder %v1170, %v341
        %vm1176 = vcmp.eq.f32.partialorder %v1170, %v342
        %vm1177 = vcmp.eq.f32.partialorder %v1170, %v343
        %vm1178 = vcmp.eq.f32.partialorder %v1170, %v344
        %vm1179 = vcmp.eq.f32.partialorder %v1170, %v345
        %vm1180 = vcmp.eq.f32.partialorder %v1170, %v346
        %vm1181 = vcmp.eq.f32.partialorder %v1170, %v347
        %vm1182 = vcmp.eq.f32.partialorder %v1170, %v348
        %vm1183 = vcmp.eq.f32.partialorder %v1170, %v349
        %vm1184 = vcmp.eq.f32.partialorder %v1170, %v350
        %vm1185 = vcmp.eq.f32.partialorder %v1170, %v351
        %vm1186 = vcmp.eq.f32.partialorder %v1170, %v352
        %vm1187 = vcmp.eq.f32.partialorder %v1170, %v353
        %vm1188 = vcmp.eq.f32.partialorder %v1170, %v354
        %vm1189 = vcmp.eq.f32.partialorder %v1170, %v355
        %vm1190 = vcmp.eq.f32.partialorder %v1170, %v356
        %vm1191 = vcmp.eq.f32.partialorder %v1170, %v357
        %vm1192 = vcmp.eq.f32.partialorder %v1170, %v358
        %vm1193 = vcmp.eq.f32.partialorder %v1170, %v359
        %vm1194 = vcmp.eq.f32.partialorder %v1170, %v360
        %vm1195 = vcmp.eq.f32.partialorder %v1170, %v361
        %vm1196 = vcmp.eq.f32.partialorder %v1170, %v362
        %vm1197 = vcmp.eq.f32.partialorder %v1170, %v363
        %vm1198 = vcmp.eq.f32.partialorder %v1170, %v364
        %vm1199 = vcmp.eq.f32.partialorder %v1170, %v365
        %vm1200 = vcmp.eq.f32.partialorder %v1170, %v366
        %vm1201 = vcmp.eq.f32.partialorder %v1170, %v367
        %vm1202 = vcmp.eq.f32.partialorder %v1170, %v368
        %v1203 = vsel %vm1171, 1, 0
        %v1204 = vsel %vm1172, 1, 0
        %v1205 = vsel %vm1173, 1, 0
        %v1206 = vsel %vm1174, 1, 0
        %v1207 = vsel %vm1175, 1, 0
        %v1208 = vsel %vm1176, 1, 0
        %v1209 = vsel %vm1177, 1, 0
        %v1210 = vsel %vm1178, 1, 0
        %v1211 = vsel %vm1179, 1, 0
        %v1212 = vsel %vm1180, 1, 0
        %v1213 = vsel %vm1181, 1, 0
        %v1214 = vsel %vm1182, 1, 0
        %v1215 = vsel %vm1183, 1, 0
        %v1216 = vsel %vm1184, 1, 0
        %v1217 = vsel %vm1185, 1, 0
        %v1218 = vsel %vm1186, 1, 0
        %v1219 = vsel %vm1187, 1, 0
        %v1220 = vsel %vm1188, 1, 0
        %v1221 = vsel %vm1189, 1, 0
        %v1222 = vsel %vm1190, 1, 0
        %v1223 = vsel %vm1191, 1, 0
        %v1224 = vsel %vm1192, 1, 0
        %v1225 = vsel %vm1193, 1, 0
        %v1226 = vsel %vm1194, 1, 0
        %v1227 = vsel %vm1195, 1, 0
        %v1228 = vsel %vm1196, 1, 0
        %v1229 = vsel %vm1197, 1, 0
        %v1230 = vsel %vm1198, 1, 0
        %v1231 = vsel %vm1199, 1, 0
        %v1232 = vsel %vm1200, 1, 0
        %v1233 = vsel %vm1201, 1, 0
        %v1234 = vsel %vm1202, 1, 0
        %v1235 = vcvt.s32.f32 %v1203
        %v1236 = vcvt.s32.f32 %v1204
        %v1237 = vcvt.s32.f32 %v1205
        %v1238 = vcvt.s32.f32 %v1206
        %v1239 = vcvt.s32.f32 %v1207
        %v1240 = vcvt.s32.f32 %v1208
        %v1241 = vcvt.s32.f32 %v1209
        %v1242 = vcvt.s32.f32 %v1210
        %v1243 = vcvt.s32.f32 %v1211
        %v1244 = vcvt.s32.f32 %v1212
        %v1245 = vcvt.s32.f32 %v1213
        %v1246 = vcvt.s32.f32 %v1214
        %v1247 = vcvt.s32.f32 %v1215
        %v1248 = vcvt.s32.f32 %v1216
        %v1249 = vcvt.s32.f32 %v1217
        %v1250 = vcvt.s32.f32 %v1218
        %v1251 = vcvt.s32.f32 %v1219
        %v1252 = vcvt.s32.f32 %v1220
        %v1253 = vcvt.s32.f32 %v1221
        %v1254 = vcvt.s32.f32 %v1222
        %v1255 = vcvt.s32.f32 %v1223
        %v1256 = vcvt.s32.f32 %v1224
        %v1257 = vcvt.s32.f32 %v1225
        %v1258 = vcvt.s32.f32 %v1226
        %v1259 = vcvt.s32.f32 %v1227
        %v1260 = vcvt.s32.f32 %v1228
        %v1261 = vcvt.s32.f32 %v1229
        %v1262 = vcvt.s32.f32 %v1230
        %v1263 = vcvt.s32.f32 %v1231
        %v1264 = vcvt.s32.f32 %v1232
        %v1265 = vcvt.s32.f32 %v1233
        %v1266 = vcvt.s32.f32 %v1234
        %v1267 = vadd.f32 %v1135, %v1235
        %v1268 = vadd.f32 %v1136, %v1236
        %v1269 = vadd.f32 %v1137, %v1237
        %v1270 = vadd.f32 %v1138, %v1238
        %v1271 = vadd.f32 %v1139, %v1239
        %v1272 = vadd.f32 %v1140, %v1240
        %v1273 = vadd.f32 %v1141, %v1241
        %v1274 = vadd.f32 %v1142, %v1242
        %v1275 = vadd.f32 %v1143, %v1243
        %v1276 = vadd.f32 %v1144, %v1244
        %v1277 = vadd.f32 %v1145, %v1245
        %v1278 = vadd.f32 %v1146, %v1246
        %v1279 = vadd.f32 %v1147, %v1247
        %v1280 = vadd.f32 %v1148, %v1248
        %v1281 = vadd.f32 %v1149, %v1249
        %v1282 = vadd.f32 %v1150, %v1250
        %v1283 = vadd.f32 %v1151, %v1251
        %v1284 = vadd.f32 %v1152, %v1252
        %v1285 = vadd.f32 %v1153, %v1253
        %v1286 = vadd.f32 %v1154, %v1254
        %v1287 = vadd.f32 %v1155, %v1255
        %v1288 = vadd.f32 %v1156, %v1256
        %v1289 = vadd.f32 %v1157, %v1257
        %v1290 = vadd.f32 %v1158, %v1258
        %v1291 = vadd.f32 %v1159, %v1259
        %v1292 = vadd.f32 %v1160, %v1260
        %v1293 = vadd.f32 %v1161, %v1261
        %v1294 = vadd.f32 %v1162, %v1262
        %v1295 = vadd.f32 %v1163, %v1263
        %v1296 = vadd.f32 %v1164, %v1264
        %v1297 = vadd.f32 %v1165, %v1265
        %v1298 = vadd.f32 %v1166, %v1266
        %v1299 = vlaneseq
        %v1300 = vshrl.u32 %v1299, 7
        %v1301 = vsub.s32 7, %v1300
        %v1302 = vrot.slane %v902, %v1301
        %vm1303 = vcmp.eq.f32.partialorder %v1302, %v337
        %vm1304 = vcmp.eq.f32.partialorder %v1302, %v338
        %vm1305 = vcmp.eq.f32.partialorder %v1302, %v339
        %vm1306 = vcmp.eq.f32.partialorder %v1302, %v340
        %vm1307 = vcmp.eq.f32.partialorder %v1302, %v341
        %vm1308 = vcmp.eq.f32.partialorder %v1302, %v342
        %vm1309 = vcmp.eq.f32.partialorder %v1302, %v343
        %vm1310 = vcmp.eq.f32.partialorder %v1302, %v344
        %vm1311 = vcmp.eq.f32.partialorder %v1302, %v345
        %vm1312 = vcmp.eq.f32.partialorder %v1302, %v346
        %vm1313 = vcmp.eq.f32.partialorder %v1302, %v347
        %vm1314 = vcmp.eq.f32.partialorder %v1302, %v348
        %vm1315 = vcmp.eq.f32.partialorder %v1302, %v349
        %vm1316 = vcmp.eq.f32.partialorder %v1302, %v350
        %vm1317 = vcmp.eq.f32.partialorder %v1302, %v351
        %vm1318 = vcmp.eq.f32.partialorder %v1302, %v352
        %vm1319 = vcmp.eq.f32.partialorder %v1302, %v353
        %vm1320 = vcmp.eq.f32.partialorder %v1302, %v354
        %vm1321 = vcmp.eq.f32.partialorder %v1302, %v355
        %vm1322 = vcmp.eq.f32.partialorder %v1302, %v356
        %vm1323 = vcmp.eq.f32.partialorder %v1302, %v357
        %vm1324 = vcmp.eq.f32.partialorder %v1302, %v358
        %vm1325 = vcmp.eq.f32.partialorder %v1302, %v359
        %vm1326 = vcmp.eq.f32.partialorder %v1302, %v360
        %vm1327 = vcmp.eq.f32.partialorder %v1302, %v361
        %vm1328 = vcmp.eq.f32.partialorder %v1302, %v362
        %vm1329 = vcmp.eq.f32.partialorder %v1302, %v363
        %vm1330 = vcmp.eq.f32.partialorder %v1302, %v364
        %vm1331 = vcmp.eq.f32.partialorder %v1302, %v365
        %vm1332 = vcmp.eq.f32.partialorder %v1302, %v366
        %vm1333 = vcmp.eq.f32.partialorder %v1302, %v367
        %vm1334 = vcmp.eq.f32.partialorder %v1302, %v368
        %v1335 = vsel %vm1303, 1, 0
        %v1336 = vsel %vm1304, 1, 0
        %v1337 = vsel %vm1305, 1, 0
        %v1338 = vsel %vm1306, 1, 0
        %v1339 = vsel %vm1307, 1, 0
        %v1340 = vsel %vm1308, 1, 0
        %v1341 = vsel %vm1309, 1, 0
        %v1342 = vsel %vm1310, 1, 0
        %v1343 = vsel %vm1311, 1, 0
        %v1344 = vsel %vm1312, 1, 0
        %v1345 = vsel %vm1313, 1, 0
        %v1346 = vsel %vm1314, 1, 0
        %v1347 = vsel %vm1315, 1, 0
        %v1348 = vsel %vm1316, 1, 0
        %v1349 = vsel %vm1317, 1, 0
        %v1350 = vsel %vm1318, 1, 0
        %v1351 = vsel %vm1319, 1, 0
        %v1352 = vsel %vm1320, 1, 0
        %v1353 = vsel %vm1321, 1, 0
        %v1354 = vsel %vm1322, 1, 0
        %v1355 = vsel %vm1323, 1, 0
        %v1356 = vsel %vm1324, 1, 0
        %v1357 = vsel %vm1325, 1, 0
        %v1358 = vsel %vm1326, 1, 0
        %v1359 = vsel %vm1327, 1, 0
        %v1360 = vsel %vm1328, 1, 0
        %v1361 = vsel %vm1329, 1, 0
        %v1362 = vsel %vm1330, 1, 0
        %v1363 = vsel %vm1331, 1, 0
        %v1364 = vsel %vm1332, 1, 0
        %v1365 = vsel %vm1333, 1, 0
        %v1366 = vsel %vm1334, 1, 0
        %v1367 = vcvt.s32.f32 %v1335
        %v1368 = vcvt.s32.f32 %v1336
        %v1369 = vcvt.s32.f32 %v1337
        %v1370 = vcvt.s32.f32 %v1338
        %v1371 = vcvt.s32.f32 %v1339
        %v1372 = vcvt.s32.f32 %v1340
        %v1373 = vcvt.s32.f32 %v1341
        %v1374 = vcvt.s32.f32 %v1342
        %v1375 = vcvt.s32.f32 %v1343
        %v1376 = vcvt.s32.f32 %v1344
        %v1377 = vcvt.s32.f32 %v1345
        %v1378 = vcvt.s32.f32 %v1346
        %v1379 = vcvt.s32.f32 %v1347
        %v1380 = vcvt.s32.f32 %v1348
        %v1381 = vcvt.s32.f32 %v1349
        %v1382 = vcvt.s32.f32 %v1350
        %v1383 = vcvt.s32.f32 %v1351
        %v1384 = vcvt.s32.f32 %v1352
        %v1385 = vcvt.s32.f32 %v1353
        %v1386 = vcvt.s32.f32 %v1354
        %v1387 = vcvt.s32.f32 %v1355
        %v1388 = vcvt.s32.f32 %v1356
        %v1389 = vcvt.s32.f32 %v1357
        %v1390 = vcvt.s32.f32 %v1358
        %v1391 = vcvt.s32.f32 %v1359
        %v1392 = vcvt.s32.f32 %v1360
        %v1393 = vcvt.s32.f32 %v1361
        %v1394 = vcvt.s32.f32 %v1362
        %v1395 = vcvt.s32.f32 %v1363
        %v1396 = vcvt.s32.f32 %v1364
        %v1397 = vcvt.s32.f32 %v1365
        %v1398 = vcvt.s32.f32 %v1366
        %v1399 = vadd.f32 %v1267, %v1367
        %v1400 = vadd.f32 %v1268, %v1368
        %v1401 = vadd.f32 %v1269, %v1369
        %v1402 = vadd.f32 %v1270, %v1370
        %v1403 = vadd.f32 %v1271, %v1371
        %v1404 = vadd.f32 %v1272, %v1372
        %v1405 = vadd.f32 %v1273, %v1373
        %v1406 = vadd.f32 %v1274, %v1374
        %v1407 = vadd.f32 %v1275, %v1375
        %v1408 = vadd.f32 %v1276, %v1376
        %v1409 = vadd.f32 %v1277, %v1377
        %v1410 = vadd.f32 %v1278, %v1378
        %v1411 = vadd.f32 %v1279, %v1379
        %v1412 = vadd.f32 %v1280, %v1380
        %v1413 = vadd.f32 %v1281, %v1381
        %v1414 = vadd.f32 %v1282, %v1382
        %v1415 = vadd.f32 %v1283, %v1383
        %v1416 = vadd.f32 %v1284, %v1384
        %v1417 = vadd.f32 %v1285, %v1385
        %v1418 = vadd.f32 %v1286, %v1386
        %v1419 = vadd.f32 %v1287, %v1387
        %v1420 = vadd.f32 %v1288, %v1388
        %v1421 = vadd.f32 %v1289, %v1389
        %v1422 = vadd.f32 %v1290, %v1390
        %v1423 = vadd.f32 %v1291, %v1391
        %v1424 = vadd.f32 %v1292, %v1392
        %v1425 = vadd.f32 %v1293, %v1393
        %v1426 = vadd.f32 %v1294, %v1394
        %v1427 = vadd.f32 %v1295, %v1395
        %v1428 = vadd.f32 %v1296, %v1396
        %v1429 = vadd.f32 %v1297, %v1397
        %v1430 = vadd.f32 %v1298, %v1398
        %v1431 = vld [vmem:[%s250 + $0x2] sm:$0x1]
        %v1432 = vunpack.c.0.s8 %v1431
        %v1433 = vcvt.s32.f32 %v1432
        %v1434 = vlaneseq
        %v1435 = vshrl.u32 %v1434, 7
        %v1436 = vsub.s32 0, %v1435
        %v1437 = vrot.slane %v1433, %v1436
        %vm1438 = vcmp.eq.f32.partialorder %v1437, %v337
        %vm1439 = vcmp.eq.f32.partialorder %v1437, %v338
        %vm1440 = vcmp.eq.f32.partialorder %v1437, %v339
        %vm1441 = vcmp.eq.f32.partialorder %v1437, %v340
        %vm1442 = vcmp.eq.f32.partialorder %v1437, %v341
        %vm1443 = vcmp.eq.f32.partialorder %v1437, %v342
        %vm1444 = vcmp.eq.f32.partialorder %v1437, %v343
        %vm1445 = vcmp.eq.f32.partialorder %v1437, %v344
        %vm1446 = vcmp.eq.f32.partialorder %v1437, %v345
        %vm1447 = vcmp.eq.f32.partialorder %v1437, %v346
        %vm1448 = vcmp.eq.f32.partialorder %v1437, %v347
        %vm1449 = vcmp.eq.f32.partialorder %v1437, %v348
        %vm1450 = vcmp.eq.f32.partialorder %v1437, %v349
        %vm1451 = vcmp.eq.f32.partialorder %v1437, %v350
        %vm1452 = vcmp.eq.f32.partialorder %v1437, %v351
        %vm1453 = vcmp.eq.f32.partialorder %v1437, %v352
        %vm1454 = vcmp.eq.f32.partialorder %v1437, %v353
        %vm1455 = vcmp.eq.f32.partialorder %v1437, %v354
        %vm1456 = vcmp.eq.f32.partialorder %v1437, %v355
        %vm1457 = vcmp.eq.f32.partialorder %v1437, %v356
        %vm1458 = vcmp.eq.f32.partialorder %v1437, %v357
        %vm1459 = vcmp.eq.f32.partialorder %v1437, %v358
        %vm1460 = vcmp.eq.f32.partialorder %v1437, %v359
        %vm1461 = vcmp.eq.f32.partialorder %v1437, %v360
        %vm1462 = vcmp.eq.f32.partialorder %v1437, %v361
        %vm1463 = vcmp.eq.f32.partialorder %v1437, %v362
        %vm1464 = vcmp.eq.f32.partialorder %v1437, %v363
        %vm1465 = vcmp.eq.f32.partialorder %v1437, %v364
        %vm1466 = vcmp.eq.f32.partialorder %v1437, %v365
        %vm1467 = vcmp.eq.f32.partialorder %v1437, %v366
        %vm1468 = vcmp.eq.f32.partialorder %v1437, %v367
        %vm1469 = vcmp.eq.f32.partialorder %v1437, %v368
        %v1470 = vsel %vm1438, 1, 0
        %v1471 = vsel %vm1439, 1, 0
        %v1472 = vsel %vm1440, 1, 0
        %v1473 = vsel %vm1441, 1, 0
        %v1474 = vsel %vm1442, 1, 0
        %v1475 = vsel %vm1443, 1, 0
        %v1476 = vsel %vm1444, 1, 0
        %v1477 = vsel %vm1445, 1, 0
        %v1478 = vsel %vm1446, 1, 0
        %v1479 = vsel %vm1447, 1, 0
        %v1480 = vsel %vm1448, 1, 0
        %v1481 = vsel %vm1449, 1, 0
        %v1482 = vsel %vm1450, 1, 0
        %v1483 = vsel %vm1451, 1, 0
        %v1484 = vsel %vm1452, 1, 0
        %v1485 = vsel %vm1453, 1, 0
        %v1486 = vsel %vm1454, 1, 0
        %v1487 = vsel %vm1455, 1, 0
        %v1488 = vsel %vm1456, 1, 0
        %v1489 = vsel %vm1457, 1, 0
        %v1490 = vsel %vm1458, 1, 0
        %v1491 = vsel %vm1459, 1, 0
        %v1492 = vsel %vm1460, 1, 0
        %v1493 = vsel %vm1461, 1, 0
        %v1494 = vsel %vm1462, 1, 0
        %v1495 = vsel %vm1463, 1, 0
        %v1496 = vsel %vm1464, 1, 0
        %v1497 = vsel %vm1465, 1, 0
        %v1498 = vsel %vm1466, 1, 0
        %v1499 = vsel %vm1467, 1, 0
        %v1500 = vsel %vm1468, 1, 0
        %v1501 = vsel %vm1469, 1, 0
        %v1502 = vcvt.s32.f32 %v1470
        %v1503 = vcvt.s32.f32 %v1471
        %v1504 = vcvt.s32.f32 %v1472
        %v1505 = vcvt.s32.f32 %v1473
        %v1506 = vcvt.s32.f32 %v1474
        %v1507 = vcvt.s32.f32 %v1475
        %v1508 = vcvt.s32.f32 %v1476
        %v1509 = vcvt.s32.f32 %v1477
        %v1510 = vcvt.s32.f32 %v1478
        %v1511 = vcvt.s32.f32 %v1479
        %v1512 = vcvt.s32.f32 %v1480
        %v1513 = vcvt.s32.f32 %v1481
        %v1514 = vcvt.s32.f32 %v1482
        %v1515 = vcvt.s32.f32 %v1483
        %v1516 = vcvt.s32.f32 %v1484
        %v1517 = vcvt.s32.f32 %v1485
        %v1518 = vcvt.s32.f32 %v1486
        %v1519 = vcvt.s32.f32 %v1487
        %v1520 = vcvt.s32.f32 %v1488
        %v1521 = vcvt.s32.f32 %v1489
        %v1522 = vcvt.s32.f32 %v1490
        %v1523 = vcvt.s32.f32 %v1491
        %v1524 = vcvt.s32.f32 %v1492
        %v1525 = vcvt.s32.f32 %v1493
        %v1526 = vcvt.s32.f32 %v1494
        %v1527 = vcvt.s32.f32 %v1495
        %v1528 = vcvt.s32.f32 %v1496
        %v1529 = vcvt.s32.f32 %v1497
        %v1530 = vcvt.s32.f32 %v1498
        %v1531 = vcvt.s32.f32 %v1499
        %v1532 = vcvt.s32.f32 %v1500
        %v1533 = vcvt.s32.f32 %v1501
        %v1534 = vadd.f32 %v1399, %v1502
        %v1535 = vadd.f32 %v1400, %v1503
        %v1536 = vadd.f32 %v1401, %v1504
        %v1537 = vadd.f32 %v1402, %v1505
        %v1538 = vadd.f32 %v1403, %v1506
        %v1539 = vadd.f32 %v1404, %v1507
        %v1540 = vadd.f32 %v1405, %v1508
        %v1541 = vadd.f32 %v1406, %v1509
        %v1542 = vadd.f32 %v1407, %v1510
        %v1543 = vadd.f32 %v1408, %v1511
        %v1544 = vadd.f32 %v1409, %v1512
        %v1545 = vadd.f32 %v1410, %v1513
        %v1546 = vadd.f32 %v1411, %v1514
        %v1547 = vadd.f32 %v1412, %v1515
        %v1548 = vadd.f32 %v1413, %v1516
        %v1549 = vadd.f32 %v1414, %v1517
        %v1550 = vadd.f32 %v1415, %v1518
        %v1551 = vadd.f32 %v1416, %v1519
        %v1552 = vadd.f32 %v1417, %v1520
        %v1553 = vadd.f32 %v1418, %v1521
        %v1554 = vadd.f32 %v1419, %v1522
        %v1555 = vadd.f32 %v1420, %v1523
        %v1556 = vadd.f32 %v1421, %v1524
        %v1557 = vadd.f32 %v1422, %v1525
        %v1558 = vadd.f32 %v1423, %v1526
        %v1559 = vadd.f32 %v1424, %v1527
        %v1560 = vadd.f32 %v1425, %v1528
        %v1561 = vadd.f32 %v1426, %v1529
        %v1562 = vadd.f32 %v1427, %v1530
        %v1563 = vadd.f32 %v1428, %v1531
        %v1564 = vadd.f32 %v1429, %v1532
        %v1565 = vadd.f32 %v1430, %v1533
        %v1566 = vlaneseq
        %v1567 = vshrl.u32 %v1566, 7
        %v1568 = vsub.s32 1, %v1567
        %v1569 = vrot.slane %v1433, %v1568
        %vm1570 = vcmp.eq.f32.partialorder %v1569, %v337
        %vm1571 = vcmp.eq.f32.partialorder %v1569, %v338
        %vm1572 = vcmp.eq.f32.partialorder %v1569, %v339
        %vm1573 = vcmp.eq.f32.partialorder %v1569, %v340
        %vm1574 = vcmp.eq.f32.partialorder %v1569, %v341
        %vm1575 = vcmp.eq.f32.partialorder %v1569, %v342
        %vm1576 = vcmp.eq.f32.partialorder %v1569, %v343
        %vm1577 = vcmp.eq.f32.partialorder %v1569, %v344
        %vm1578 = vcmp.eq.f32.partialorder %v1569, %v345
        %vm1579 = vcmp.eq.f32.partialorder %v1569, %v346
        %vm1580 = vcmp.eq.f32.partialorder %v1569, %v347
        %vm1581 = vcmp.eq.f32.partialorder %v1569, %v348
        %vm1582 = vcmp.eq.f32.partialorder %v1569, %v349
        %vm1583 = vcmp.eq.f32.partialorder %v1569, %v350
        %vm1584 = vcmp.eq.f32.partialorder %v1569, %v351
        %vm1585 = vcmp.eq.f32.partialorder %v1569, %v352
        %vm1586 = vcmp.eq.f32.partialorder %v1569, %v353
        %vm1587 = vcmp.eq.f32.partialorder %v1569, %v354
        %vm1588 = vcmp.eq.f32.partialorder %v1569, %v355
        %vm1589 = vcmp.eq.f32.partialorder %v1569, %v356
        %vm1590 = vcmp.eq.f32.partialorder %v1569, %v357
        %vm1591 = vcmp.eq.f32.partialorder %v1569, %v358
        %vm1592 = vcmp.eq.f32.partialorder %v1569, %v359
        %vm1593 = vcmp.eq.f32.partialorder %v1569, %v360
        %vm1594 = vcmp.eq.f32.partialorder %v1569, %v361
        %vm1595 = vcmp.eq.f32.partialorder %v1569, %v362
        %vm1596 = vcmp.eq.f32.partialorder %v1569, %v363
        %vm1597 = vcmp.eq.f32.partialorder %v1569, %v364
        %vm1598 = vcmp.eq.f32.partialorder %v1569, %v365
        %vm1599 = vcmp.eq.f32.partialorder %v1569, %v366
        %vm1600 = vcmp.eq.f32.partialorder %v1569, %v367
        %vm1601 = vcmp.eq.f32.partialorder %v1569, %v368
        %v1602 = vsel %vm1570, 1, 0
        %v1603 = vsel %vm1571, 1, 0
        %v1604 = vsel %vm1572, 1, 0
        %v1605 = vsel %vm1573, 1, 0
        %v1606 = vsel %vm1574, 1, 0
        %v1607 = vsel %vm1575, 1, 0
        %v1608 = vsel %vm1576, 1, 0
        %v1609 = vsel %vm1577, 1, 0
        %v1610 = vsel %vm1578, 1, 0
        %v1611 = vsel %vm1579, 1, 0
        %v1612 = vsel %vm1580, 1, 0
        %v1613 = vsel %vm1581, 1, 0
        %v1614 = vsel %vm1582, 1, 0
        %v1615 = vsel %vm1583, 1, 0
        %v1616 = vsel %vm1584, 1, 0
        %v1617 = vsel %vm1585, 1, 0
        %v1618 = vsel %vm1586, 1, 0
        %v1619 = vsel %vm1587, 1, 0
        %v1620 = vsel %vm1588, 1, 0
        %v1621 = vsel %vm1589, 1, 0
        %v1622 = vsel %vm1590, 1, 0
        %v1623 = vsel %vm1591, 1, 0
        %v1624 = vsel %vm1592, 1, 0
        %v1625 = vsel %vm1593, 1, 0
        %v1626 = vsel %vm1594, 1, 0
        %v1627 = vsel %vm1595, 1, 0
        %v1628 = vsel %vm1596, 1, 0
        %v1629 = vsel %vm1597, 1, 0
        %v1630 = vsel %vm1598, 1, 0
        %v1631 = vsel %vm1599, 1, 0
        %v1632 = vsel %vm1600, 1, 0
        %v1633 = vsel %vm1601, 1, 0
        %v1634 = vcvt.s32.f32 %v1602
        %v1635 = vcvt.s32.f32 %v1603
        %v1636 = vcvt.s32.f32 %v1604
        %v1637 = vcvt.s32.f32 %v1605
        %v1638 = vcvt.s32.f32 %v1606
        %v1639 = vcvt.s32.f32 %v1607
        %v1640 = vcvt.s32.f32 %v1608
        %v1641 = vcvt.s32.f32 %v1609
        %v1642 = vcvt.s32.f32 %v1610
        %v1643 = vcvt.s32.f32 %v1611
        %v1644 = vcvt.s32.f32 %v1612
        %v1645 = vcvt.s32.f32 %v1613
        %v1646 = vcvt.s32.f32 %v1614
        %v1647 = vcvt.s32.f32 %v1615
        %v1648 = vcvt.s32.f32 %v1616
        %v1649 = vcvt.s32.f32 %v1617
        %v1650 = vcvt.s32.f32 %v1618
        %v1651 = vcvt.s32.f32 %v1619
        %v1652 = vcvt.s32.f32 %v1620
        %v1653 = vcvt.s32.f32 %v1621
        %v1654 = vcvt.s32.f32 %v1622
        %v1655 = vcvt.s32.f32 %v1623
        %v1656 = vcvt.s32.f32 %v1624
        %v1657 = vcvt.s32.f32 %v1625
        %v1658 = vcvt.s32.f32 %v1626
        %v1659 = vcvt.s32.f32 %v1627
        %v1660 = vcvt.s32.f32 %v1628
        %v1661 = vcvt.s32.f32 %v1629
        %v1662 = vcvt.s32.f32 %v1630
        %v1663 = vcvt.s32.f32 %v1631
        %v1664 = vcvt.s32.f32 %v1632
        %v1665 = vcvt.s32.f32 %v1633
        %v1666 = vadd.f32 %v1534, %v1634
        %v1667 = vadd.f32 %v1535, %v1635
        %v1668 = vadd.f32 %v1536, %v1636
        %v1669 = vadd.f32 %v1537, %v1637
        %v1670 = vadd.f32 %v1538, %v1638
        %v1671 = vadd.f32 %v1539, %v1639
        %v1672 = vadd.f32 %v1540, %v1640
        %v1673 = vadd.f32 %v1541, %v1641
        %v1674 = vadd.f32 %v1542, %v1642
        %v1675 = vadd.f32 %v1543, %v1643
        %v1676 = vadd.f32 %v1544, %v1644
        %v1677 = vadd.f32 %v1545, %v1645
        %v1678 = vadd.f32 %v1546, %v1646
        %v1679 = vadd.f32 %v1547, %v1647
        %v1680 = vadd.f32 %v1548, %v1648
        %v1681 = vadd.f32 %v1549, %v1649
        %v1682 = vadd.f32 %v1550, %v1650
        %v1683 = vadd.f32 %v1551, %v1651
        %v1684 = vadd.f32 %v1552, %v1652
        %v1685 = vadd.f32 %v1553, %v1653
        %v1686 = vadd.f32 %v1554, %v1654
        %v1687 = vadd.f32 %v1555, %v1655
        %v1688 = vadd.f32 %v1556, %v1656
        %v1689 = vadd.f32 %v1557, %v1657
        %v1690 = vadd.f32 %v1558, %v1658
        %v1691 = vadd.f32 %v1559, %v1659
        %v1692 = vadd.f32 %v1560, %v1660
        %v1693 = vadd.f32 %v1561, %v1661
        %v1694 = vadd.f32 %v1562, %v1662
        %v1695 = vadd.f32 %v1563, %v1663
        %v1696 = vadd.f32 %v1564, %v1664
        %v1697 = vadd.f32 %v1565, %v1665
        %v1698 = vlaneseq
        %v1699 = vshrl.u32 %v1698, 7
        %v1700 = vsub.s32 2, %v1699
        %v1701 = vrot.slane %v1433, %v1700
        %vm1702 = vcmp.eq.f32.partialorder %v1701, %v337
        %vm1703 = vcmp.eq.f32.partialorder %v1701, %v338
        %vm1704 = vcmp.eq.f32.partialorder %v1701, %v339
        %vm1705 = vcmp.eq.f32.partialorder %v1701, %v340
        %vm1706 = vcmp.eq.f32.partialorder %v1701, %v341
        %vm1707 = vcmp.eq.f32.partialorder %v1701, %v342
        %vm1708 = vcmp.eq.f32.partialorder %v1701, %v343
        %vm1709 = vcmp.eq.f32.partialorder %v1701, %v344
        %vm1710 = vcmp.eq.f32.partialorder %v1701, %v345
        %vm1711 = vcmp.eq.f32.partialorder %v1701, %v346
        %vm1712 = vcmp.eq.f32.partialorder %v1701, %v347
        %vm1713 = vcmp.eq.f32.partialorder %v1701, %v348
        %vm1714 = vcmp.eq.f32.partialorder %v1701, %v349
        %vm1715 = vcmp.eq.f32.partialorder %v1701, %v350
        %vm1716 = vcmp.eq.f32.partialorder %v1701, %v351
        %vm1717 = vcmp.eq.f32.partialorder %v1701, %v352
        %vm1718 = vcmp.eq.f32.partialorder %v1701, %v353
        %vm1719 = vcmp.eq.f32.partialorder %v1701, %v354
        %vm1720 = vcmp.eq.f32.partialorder %v1701, %v355
        %vm1721 = vcmp.eq.f32.partialorder %v1701, %v356
        %vm1722 = vcmp.eq.f32.partialorder %v1701, %v357
        %vm1723 = vcmp.eq.f32.partialorder %v1701, %v358
        %vm1724 = vcmp.eq.f32.partialorder %v1701, %v359
        %vm1725 = vcmp.eq.f32.partialorder %v1701, %v360
        %vm1726 = vcmp.eq.f32.partialorder %v1701, %v361
        %vm1727 = vcmp.eq.f32.partialorder %v1701, %v362
        %vm1728 = vcmp.eq.f32.partialorder %v1701, %v363
        %vm1729 = vcmp.eq.f32.partialorder %v1701, %v364
        %vm1730 = vcmp.eq.f32.partialorder %v1701, %v365
        %vm1731 = vcmp.eq.f32.partialorder %v1701, %v366
        %vm1732 = vcmp.eq.f32.partialorder %v1701, %v367
        %vm1733 = vcmp.eq.f32.partialorder %v1701, %v368
        %v1734 = vsel %vm1702, 1, 0
        %v1735 = vsel %vm1703, 1, 0
        %v1736 = vsel %vm1704, 1, 0
        %v1737 = vsel %vm1705, 1, 0
        %v1738 = vsel %vm1706, 1, 0
        %v1739 = vsel %vm1707, 1, 0
        %v1740 = vsel %vm1708, 1, 0
        %v1741 = vsel %vm1709, 1, 0
        %v1742 = vsel %vm1710, 1, 0
        %v1743 = vsel %vm1711, 1, 0
        %v1744 = vsel %vm1712, 1, 0
        %v1745 = vsel %vm1713, 1, 0
        %v1746 = vsel %vm1714, 1, 0
        %v1747 = vsel %vm1715, 1, 0
        %v1748 = vsel %vm1716, 1, 0
        %v1749 = vsel %vm1717, 1, 0
        %v1750 = vsel %vm1718, 1, 0
        %v1751 = vsel %vm1719, 1, 0
        %v1752 = vsel %vm1720, 1, 0
        %v1753 = vsel %vm1721, 1, 0
        %v1754 = vsel %vm1722, 1, 0
        %v1755 = vsel %vm1723, 1, 0
        %v1756 = vsel %vm1724, 1, 0
        %v1757 = vsel %vm1725, 1, 0
        %v1758 = vsel %vm1726, 1, 0
        %v1759 = vsel %vm1727, 1, 0
        %v1760 = vsel %vm1728, 1, 0
        %v1761 = vsel %vm1729, 1, 0
        %v1762 = vsel %vm1730, 1, 0
        %v1763 = vsel %vm1731, 1, 0
        %v1764 = vsel %vm1732, 1, 0
        %v1765 = vsel %vm1733, 1, 0
        %v1766 = vcvt.s32.f32 %v1734
        %v1767 = vcvt.s32.f32 %v1735
        %v1768 = vcvt.s32.f32 %v1736
        %v1769 = vcvt.s32.f32 %v1737
        %v1770 = vcvt.s32.f32 %v1738
        %v1771 = vcvt.s32.f32 %v1739
        %v1772 = vcvt.s32.f32 %v1740
        %v1773 = vcvt.s32.f32 %v1741
        %v1774 = vcvt.s32.f32 %v1742
        %v1775 = vcvt.s32.f32 %v1743
        %v1776 = vcvt.s32.f32 %v1744
        %v1777 = vcvt.s32.f32 %v1745
        %v1778 = vcvt.s32.f32 %v1746
        %v1779 = vcvt.s32.f32 %v1747
        %v1780 = vcvt.s32.f32 %v1748
        %v1781 = vcvt.s32.f32 %v1749
        %v1782 = vcvt.s32.f32 %v1750
        %v1783 = vcvt.s32.f32 %v1751
        %v1784 = vcvt.s32.f32 %v1752
        %v1785 = vcvt.s32.f32 %v1753
        %v1786 = vcvt.s32.f32 %v1754
        %v1787 = vcvt.s32.f32 %v1755
        %v1788 = vcvt.s32.f32 %v1756
        %v1789 = vcvt.s32.f32 %v1757
        %v1790 = vcvt.s32.f32 %v1758
        %v1791 = vcvt.s32.f32 %v1759
        %v1792 = vcvt.s32.f32 %v1760
        %v1793 = vcvt.s32.f32 %v1761
        %v1794 = vcvt.s32.f32 %v1762
        %v1795 = vcvt.s32.f32 %v1763
        %v1796 = vcvt.s32.f32 %v1764
        %v1797 = vcvt.s32.f32 %v1765
        %v1798 = vadd.f32 %v1666, %v1766
        %v1799 = vadd.f32 %v1667, %v1767
        %v1800 = vadd.f32 %v1668, %v1768
        %v1801 = vadd.f32 %v1669, %v1769
        %v1802 = vadd.f32 %v1670, %v1770
        %v1803 = vadd.f32 %v1671, %v1771
        %v1804 = vadd.f32 %v1672, %v1772
        %v1805 = vadd.f32 %v1673, %v1773
        %v1806 = vadd.f32 %v1674, %v1774
        %v1807 = vadd.f32 %v1675, %v1775
        %v1808 = vadd.f32 %v1676, %v1776
        %v1809 = vadd.f32 %v1677, %v1777
        %v1810 = vadd.f32 %v1678, %v1778
        %v1811 = vadd.f32 %v1679, %v1779
        %v1812 = vadd.f32 %v1680, %v1780
        %v1813 = vadd.f32 %v1681, %v1781
        %v1814 = vadd.f32 %v1682, %v1782
        %v1815 = vadd.f32 %v1683, %v1783
        %v1816 = vadd.f32 %v1684, %v1784
        %v1817 = vadd.f32 %v1685, %v1785
        %v1818 = vadd.f32 %v1686, %v1786
        %v1819 = vadd.f32 %v1687, %v1787
        %v1820 = vadd.f32 %v1688, %v1788
        %v1821 = vadd.f32 %v1689, %v1789
        %v1822 = vadd.f32 %v1690, %v1790
        %v1823 = vadd.f32 %v1691, %v1791
        %v1824 = vadd.f32 %v1692, %v1792
        %v1825 = vadd.f32 %v1693, %v1793
        %v1826 = vadd.f32 %v1694, %v1794
        %v1827 = vadd.f32 %v1695, %v1795
        %v1828 = vadd.f32 %v1696, %v1796
        %v1829 = vadd.f32 %v1697, %v1797
        %v1830 = vlaneseq
        %v1831 = vshrl.u32 %v1830, 7
        %v1832 = vsub.s32 3, %v1831
        %v1833 = vrot.slane %v1433, %v1832
        %vm1834 = vcmp.eq.f32.partialorder %v1833, %v337
        %vm1835 = vcmp.eq.f32.partialorder %v1833, %v338
        %vm1836 = vcmp.eq.f32.partialorder %v1833, %v339
        %vm1837 = vcmp.eq.f32.partialorder %v1833, %v340
        %vm1838 = vcmp.eq.f32.partialorder %v1833, %v341
        %vm1839 = vcmp.eq.f32.partialorder %v1833, %v342
        %vm1840 = vcmp.eq.f32.partialorder %v1833, %v343
        %vm1841 = vcmp.eq.f32.partialorder %v1833, %v344
        %vm1842 = vcmp.eq.f32.partialorder %v1833, %v345
        %vm1843 = vcmp.eq.f32.partialorder %v1833, %v346
        %vm1844 = vcmp.eq.f32.partialorder %v1833, %v347
        %vm1845 = vcmp.eq.f32.partialorder %v1833, %v348
        %vm1846 = vcmp.eq.f32.partialorder %v1833, %v349
        %vm1847 = vcmp.eq.f32.partialorder %v1833, %v350
        %vm1848 = vcmp.eq.f32.partialorder %v1833, %v351
        %vm1849 = vcmp.eq.f32.partialorder %v1833, %v352
        %vm1850 = vcmp.eq.f32.partialorder %v1833, %v353
        %vm1851 = vcmp.eq.f32.partialorder %v1833, %v354
        %vm1852 = vcmp.eq.f32.partialorder %v1833, %v355
        %vm1853 = vcmp.eq.f32.partialorder %v1833, %v356
        %vm1854 = vcmp.eq.f32.partialorder %v1833, %v357
        %vm1855 = vcmp.eq.f32.partialorder %v1833, %v358
        %vm1856 = vcmp.eq.f32.partialorder %v1833, %v359
        %vm1857 = vcmp.eq.f32.partialorder %v1833, %v360
        %vm1858 = vcmp.eq.f32.partialorder %v1833, %v361
        %vm1859 = vcmp.eq.f32.partialorder %v1833, %v362
        %vm1860 = vcmp.eq.f32.partialorder %v1833, %v363
        %vm1861 = vcmp.eq.f32.partialorder %v1833, %v364
        %vm1862 = vcmp.eq.f32.partialorder %v1833, %v365
        %vm1863 = vcmp.eq.f32.partialorder %v1833, %v366
        %vm1864 = vcmp.eq.f32.partialorder %v1833, %v367
        %vm1865 = vcmp.eq.f32.partialorder %v1833, %v368
        %v1866 = vsel %vm1834, 1, 0
        %v1867 = vsel %vm1835, 1, 0
        %v1868 = vsel %vm1836, 1, 0
        %v1869 = vsel %vm1837, 1, 0
        %v1870 = vsel %vm1838, 1, 0
        %v1871 = vsel %vm1839, 1, 0
        %v1872 = vsel %vm1840, 1, 0
        %v1873 = vsel %vm1841, 1, 0
        %v1874 = vsel %vm1842, 1, 0
        %v1875 = vsel %vm1843, 1, 0
        %v1876 = vsel %vm1844, 1, 0
        %v1877 = vsel %vm1845, 1, 0
        %v1878 = vsel %vm1846, 1, 0
        %v1879 = vsel %vm1847, 1, 0
        %v1880 = vsel %vm1848, 1, 0
        %v1881 = vsel %vm1849, 1, 0
        %v1882 = vsel %vm1850, 1, 0
        %v1883 = vsel %vm1851, 1, 0
        %v1884 = vsel %vm1852, 1, 0
        %v1885 = vsel %vm1853, 1, 0
        %v1886 = vsel %vm1854, 1, 0
        %v1887 = vsel %vm1855, 1, 0
        %v1888 = vsel %vm1856, 1, 0
        %v1889 = vsel %vm1857, 1, 0
        %v1890 = vsel %vm1858, 1, 0
        %v1891 = vsel %vm1859, 1, 0
        %v1892 = vsel %vm1860, 1, 0
        %v1893 = vsel %vm1861, 1, 0
        %v1894 = vsel %vm1862, 1, 0
        %v1895 = vsel %vm1863, 1, 0
        %v1896 = vsel %vm1864, 1, 0
        %v1897 = vsel %vm1865, 1, 0
        %v1898 = vcvt.s32.f32 %v1866
        %v1899 = vcvt.s32.f32 %v1867
        %v1900 = vcvt.s32.f32 %v1868
        %v1901 = vcvt.s32.f32 %v1869
        %v1902 = vcvt.s32.f32 %v1870
        %v1903 = vcvt.s32.f32 %v1871
        %v1904 = vcvt.s32.f32 %v1872
        %v1905 = vcvt.s32.f32 %v1873
        %v1906 = vcvt.s32.f32 %v1874
        %v1907 = vcvt.s32.f32 %v1875
        %v1908 = vcvt.s32.f32 %v1876
        %v1909 = vcvt.s32.f32 %v1877
        %v1910 = vcvt.s32.f32 %v1878
        %v1911 = vcvt.s32.f32 %v1879
        %v1912 = vcvt.s32.f32 %v1880
        %v1913 = vcvt.s32.f32 %v1881
        %v1914 = vcvt.s32.f32 %v1882
        %v1915 = vcvt.s32.f32 %v1883
        %v1916 = vcvt.s32.f32 %v1884
        %v1917 = vcvt.s32.f32 %v1885
        %v1918 = vcvt.s32.f32 %v1886
        %v1919 = vcvt.s32.f32 %v1887
        %v1920 = vcvt.s32.f32 %v1888
        %v1921 = vcvt.s32.f32 %v1889
        %v1922 = vcvt.s32.f32 %v1890
        %v1923 = vcvt.s32.f32 %v1891
        %v1924 = vcvt.s32.f32 %v1892
        %v1925 = vcvt.s32.f32 %v1893
        %v1926 = vcvt.s32.f32 %v1894
        %v1927 = vcvt.s32.f32 %v1895
        %v1928 = vcvt.s32.f32 %v1896
        %v1929 = vcvt.s32.f32 %v1897
        %v1930 = vadd.f32 %v1798, %v1898
        %v1931 = vadd.f32 %v1799, %v1899
        %v1932 = vadd.f32 %v1800, %v1900
        %v1933 = vadd.f32 %v1801, %v1901
        %v1934 = vadd.f32 %v1802, %v1902
        %v1935 = vadd.f32 %v1803, %v1903
        %v1936 = vadd.f32 %v1804, %v1904
        %v1937 = vadd.f32 %v1805, %v1905
        %v1938 = vadd.f32 %v1806, %v1906
        %v1939 = vadd.f32 %v1807, %v1907
        %v1940 = vadd.f32 %v1808, %v1908
        %v1941 = vadd.f32 %v1809, %v1909
        %v1942 = vadd.f32 %v1810, %v1910
        %v1943 = vadd.f32 %v1811, %v1911
        %v1944 = vadd.f32 %v1812, %v1912
        %v1945 = vadd.f32 %v1813, %v1913
        %v1946 = vadd.f32 %v1814, %v1914
        %v1947 = vadd.f32 %v1815, %v1915
        %v1948 = vadd.f32 %v1816, %v1916
        %v1949 = vadd.f32 %v1817, %v1917
        %v1950 = vadd.f32 %v1818, %v1918
        %v1951 = vadd.f32 %v1819, %v1919
        %v1952 = vadd.f32 %v1820, %v1920
        %v1953 = vadd.f32 %v1821, %v1921
        %v1954 = vadd.f32 %v1822, %v1922
        %v1955 = vadd.f32 %v1823, %v1923
        %v1956 = vadd.f32 %v1824, %v1924
        %v1957 = vadd.f32 %v1825, %v1925
        %v1958 = vadd.f32 %v1826, %v1926
        %v1959 = vadd.f32 %v1827, %v1927
        %v1960 = vadd.f32 %v1828, %v1928
        %v1961 = vadd.f32 %v1829, %v1929
        %v1962 = vld [vmem:[%s250 + $0x2] sm:$0x2]
        %v1963 = vunpack.c.0.s8 %v1962
        %v1964 = vcvt.s32.f32 %v1963
        %v1965 = vlaneseq
        %v1966 = vshrl.u32 %v1965, 7
        %v1967 = vsub.s32 4, %v1966
        %v1968 = vrot.slane %v1964, %v1967
        %vm1969 = vcmp.eq.f32.partialorder %v1968, %v337
        %vm1970 = vcmp.eq.f32.partialorder %v1968, %v338
        %vm1971 = vcmp.eq.f32.partialorder %v1968, %v339
        %vm1972 = vcmp.eq.f32.partialorder %v1968, %v340
        %vm1973 = vcmp.eq.f32.partialorder %v1968, %v341
        %vm1974 = vcmp.eq.f32.partialorder %v1968, %v342
        %vm1975 = vcmp.eq.f32.partialorder %v1968, %v343
        %vm1976 = vcmp.eq.f32.partialorder %v1968, %v344
        %vm1977 = vcmp.eq.f32.partialorder %v1968, %v345
        %vm1978 = vcmp.eq.f32.partialorder %v1968, %v346
        %vm1979 = vcmp.eq.f32.partialorder %v1968, %v347
        %vm1980 = vcmp.eq.f32.partialorder %v1968, %v348
        %vm1981 = vcmp.eq.f32.partialorder %v1968, %v349
        %vm1982 = vcmp.eq.f32.partialorder %v1968, %v350
        %vm1983 = vcmp.eq.f32.partialorder %v1968, %v351
        %vm1984 = vcmp.eq.f32.partialorder %v1968, %v352
        %vm1985 = vcmp.eq.f32.partialorder %v1968, %v353
        %vm1986 = vcmp.eq.f32.partialorder %v1968, %v354
        %vm1987 = vcmp.eq.f32.partialorder %v1968, %v355
        %vm1988 = vcmp.eq.f32.partialorder %v1968, %v356
        %vm1989 = vcmp.eq.f32.partialorder %v1968, %v357
        %vm1990 = vcmp.eq.f32.partialorder %v1968, %v358
        %vm1991 = vcmp.eq.f32.partialorder %v1968, %v359
        %vm1992 = vcmp.eq.f32.partialorder %v1968, %v360
        %vm1993 = vcmp.eq.f32.partialorder %v1968, %v361
        %vm1994 = vcmp.eq.f32.partialorder %v1968, %v362
        %vm1995 = vcmp.eq.f32.partialorder %v1968, %v363
        %vm1996 = vcmp.eq.f32.partialorder %v1968, %v364
        %vm1997 = vcmp.eq.f32.partialorder %v1968, %v365
        %vm1998 = vcmp.eq.f32.partialorder %v1968, %v366
        %vm1999 = vcmp.eq.f32.partialorder %v1968, %v367
        %vm2000 = vcmp.eq.f32.partialorder %v1968, %v368
        %v2001 = vsel %vm1969, 1, 0
        %v2002 = vsel %vm1970, 1, 0
        %v2003 = vsel %vm1971, 1, 0
        %v2004 = vsel %vm1972, 1, 0
        %v2005 = vsel %vm1973, 1, 0
        %v2006 = vsel %vm1974, 1, 0
        %v2007 = vsel %vm1975, 1, 0
        %v2008 = vsel %vm1976, 1, 0
        %v2009 = vsel %vm1977, 1, 0
        %v2010 = vsel %vm1978, 1, 0
        %v2011 = vsel %vm1979, 1, 0
        %v2012 = vsel %vm1980, 1, 0
        %v2013 = vsel %vm1981, 1, 0
        %v2014 = vsel %vm1982, 1, 0
        %v2015 = vsel %vm1983, 1, 0
        %v2016 = vsel %vm1984, 1, 0
        %v2017 = vsel %vm1985, 1, 0
        %v2018 = vsel %vm1986, 1, 0
        %v2019 = vsel %vm1987, 1, 0
        %v2020 = vsel %vm1988, 1, 0
        %v2021 = vsel %vm1989, 1, 0
        %v2022 = vsel %vm1990, 1, 0
        %v2023 = vsel %vm1991, 1, 0
        %v2024 = vsel %vm1992, 1, 0
        %v2025 = vsel %vm1993, 1, 0
        %v2026 = vsel %vm1994, 1, 0
        %v2027 = vsel %vm1995, 1, 0
        %v2028 = vsel %vm1996, 1, 0
        %v2029 = vsel %vm1997, 1, 0
        %v2030 = vsel %vm1998, 1, 0
        %v2031 = vsel %vm1999, 1, 0
        %v2032 = vsel %vm2000, 1, 0
        %v2033 = vcvt.s32.f32 %v2001
        %v2034 = vcvt.s32.f32 %v2002
        %v2035 = vcvt.s32.f32 %v2003
        %v2036 = vcvt.s32.f32 %v2004
        %v2037 = vcvt.s32.f32 %v2005
        %v2038 = vcvt.s32.f32 %v2006
        %v2039 = vcvt.s32.f32 %v2007
        %v2040 = vcvt.s32.f32 %v2008
        %v2041 = vcvt.s32.f32 %v2009
        %v2042 = vcvt.s32.f32 %v2010
        %v2043 = vcvt.s32.f32 %v2011
        %v2044 = vcvt.s32.f32 %v2012
        %v2045 = vcvt.s32.f32 %v2013
        %v2046 = vcvt.s32.f32 %v2014
        %v2047 = vcvt.s32.f32 %v2015
        %v2048 = vcvt.s32.f32 %v2016
        %v2049 = vcvt.s32.f32 %v2017
        %v2050 = vcvt.s32.f32 %v2018
        %v2051 = vcvt.s32.f32 %v2019
        %v2052 = vcvt.s32.f32 %v2020
        %v2053 = vcvt.s32.f32 %v2021
        %v2054 = vcvt.s32.f32 %v2022
        %v2055 = vcvt.s32.f32 %v2023
        %v2056 = vcvt.s32.f32 %v2024
        %v2057 = vcvt.s32.f32 %v2025
        %v2058 = vcvt.s32.f32 %v2026
        %v2059 = vcvt.s32.f32 %v2027
        %v2060 = vcvt.s32.f32 %v2028
        %v2061 = vcvt.s32.f32 %v2029
        %v2062 = vcvt.s32.f32 %v2030
        %v2063 = vcvt.s32.f32 %v2031
        %v2064 = vcvt.s32.f32 %v2032
        %v2065 = vadd.f32 %v1930, %v2033
        %v2066 = vadd.f32 %v1931, %v2034
        %v2067 = vadd.f32 %v1932, %v2035
        %v2068 = vadd.f32 %v1933, %v2036
        %v2069 = vadd.f32 %v1934, %v2037
        %v2070 = vadd.f32 %v1935, %v2038
        %v2071 = vadd.f32 %v1936, %v2039
        %v2072 = vadd.f32 %v1937, %v2040
        %v2073 = vadd.f32 %v1938, %v2041
        %v2074 = vadd.f32 %v1939, %v2042
        %v2075 = vadd.f32 %v1940, %v2043
        %v2076 = vadd.f32 %v1941, %v2044
        %v2077 = vadd.f32 %v1942, %v2045
        %v2078 = vadd.f32 %v1943, %v2046
        %v2079 = vadd.f32 %v1944, %v2047
        %v2080 = vadd.f32 %v1945, %v2048
        %v2081 = vadd.f32 %v1946, %v2049
        %v2082 = vadd.f32 %v1947, %v2050
        %v2083 = vadd.f32 %v1948, %v2051
        %v2084 = vadd.f32 %v1949, %v2052
        %v2085 = vadd.f32 %v1950, %v2053
        %v2086 = vadd.f32 %v1951, %v2054
        %v2087 = vadd.f32 %v1952, %v2055
        %v2088 = vadd.f32 %v1953, %v2056
        %v2089 = vadd.f32 %v1954, %v2057
        %v2090 = vadd.f32 %v1955, %v2058
        %v2091 = vadd.f32 %v1956, %v2059
        %v2092 = vadd.f32 %v1957, %v2060
        %v2093 = vadd.f32 %v1958, %v2061
        %v2094 = vadd.f32 %v1959, %v2062
        %v2095 = vadd.f32 %v1960, %v2063
        %v2096 = vadd.f32 %v1961, %v2064
        %v2097 = vlaneseq
        %v2098 = vshrl.u32 %v2097, 7
        %v2099 = vsub.s32 5, %v2098
        %v2100 = vrot.slane %v1964, %v2099
        %vm2101 = vcmp.eq.f32.partialorder %v2100, %v337
        %vm2102 = vcmp.eq.f32.partialorder %v2100, %v338
        %vm2103 = vcmp.eq.f32.partialorder %v2100, %v339
        %vm2104 = vcmp.eq.f32.partialorder %v2100, %v340
        %vm2105 = vcmp.eq.f32.partialorder %v2100, %v341
        %vm2106 = vcmp.eq.f32.partialorder %v2100, %v342
        %vm2107 = vcmp.eq.f32.partialorder %v2100, %v343
        %vm2108 = vcmp.eq.f32.partialorder %v2100, %v344
        %vm2109 = vcmp.eq.f32.partialorder %v2100, %v345
        %vm2110 = vcmp.eq.f32.partialorder %v2100, %v346
        %vm2111 = vcmp.eq.f32.partialorder %v2100, %v347
        %vm2112 = vcmp.eq.f32.partialorder %v2100, %v348
        %vm2113 = vcmp.eq.f32.partialorder %v2100, %v349
        %vm2114 = vcmp.eq.f32.partialorder %v2100, %v350
        %vm2115 = vcmp.eq.f32.partialorder %v2100, %v351
        %vm2116 = vcmp.eq.f32.partialorder %v2100, %v352
        %vm2117 = vcmp.eq.f32.partialorder %v2100, %v353
        %vm2118 = vcmp.eq.f32.partialorder %v2100, %v354
        %vm2119 = vcmp.eq.f32.partialorder %v2100, %v355
        %vm2120 = vcmp.eq.f32.partialorder %v2100, %v356
        %vm2121 = vcmp.eq.f32.partialorder %v2100, %v357
        %vm2122 = vcmp.eq.f32.partialorder %v2100, %v358
        %vm2123 = vcmp.eq.f32.partialorder %v2100, %v359
        %vm2124 = vcmp.eq.f32.partialorder %v2100, %v360
        %vm2125 = vcmp.eq.f32.partialorder %v2100, %v361
        %vm2126 = vcmp.eq.f32.partialorder %v2100, %v362
        %vm2127 = vcmp.eq.f32.partialorder %v2100, %v363
        %vm2128 = vcmp.eq.f32.partialorder %v2100, %v364
        %vm2129 = vcmp.eq.f32.partialorder %v2100, %v365
        %vm2130 = vcmp.eq.f32.partialorder %v2100, %v366
        %vm2131 = vcmp.eq.f32.partialorder %v2100, %v367
        %vm2132 = vcmp.eq.f32.partialorder %v2100, %v368
        %v2133 = vsel %vm2101, 1, 0
        %v2134 = vsel %vm2102, 1, 0
        %v2135 = vsel %vm2103, 1, 0
        %v2136 = vsel %vm2104, 1, 0
        %v2137 = vsel %vm2105, 1, 0
        %v2138 = vsel %vm2106, 1, 0
        %v2139 = vsel %vm2107, 1, 0
        %v2140 = vsel %vm2108, 1, 0
        %v2141 = vsel %vm2109, 1, 0
        %v2142 = vsel %vm2110, 1, 0
        %v2143 = vsel %vm2111, 1, 0
        %v2144 = vsel %vm2112, 1, 0
        %v2145 = vsel %vm2113, 1, 0
        %v2146 = vsel %vm2114, 1, 0
        %v2147 = vsel %vm2115, 1, 0
        %v2148 = vsel %vm2116, 1, 0
        %v2149 = vsel %vm2117, 1, 0
        %v2150 = vsel %vm2118, 1, 0
        %v2151 = vsel %vm2119, 1, 0
        %v2152 = vsel %vm2120, 1, 0
        %v2153 = vsel %vm2121, 1, 0
        %v2154 = vsel %vm2122, 1, 0
        %v2155 = vsel %vm2123, 1, 0
        %v2156 = vsel %vm2124, 1, 0
        %v2157 = vsel %vm2125, 1, 0
        %v2158 = vsel %vm2126, 1, 0
        %v2159 = vsel %vm2127, 1, 0
        %v2160 = vsel %vm2128, 1, 0
        %v2161 = vsel %vm2129, 1, 0
        %v2162 = vsel %vm2130, 1, 0
        %v2163 = vsel %vm2131, 1, 0
        %v2164 = vsel %vm2132, 1, 0
        %v2165 = vcvt.s32.f32 %v2133
        %v2166 = vcvt.s32.f32 %v2134
        %v2167 = vcvt.s32.f32 %v2135
        %v2168 = vcvt.s32.f32 %v2136
        %v2169 = vcvt.s32.f32 %v2137
        %v2170 = vcvt.s32.f32 %v2138
        %v2171 = vcvt.s32.f32 %v2139
        %v2172 = vcvt.s32.f32 %v2140
        %v2173 = vcvt.s32.f32 %v2141
        %v2174 = vcvt.s32.f32 %v2142
        %v2175 = vcvt.s32.f32 %v2143
        %v2176 = vcvt.s32.f32 %v2144
        %v2177 = vcvt.s32.f32 %v2145
        %v2178 = vcvt.s32.f32 %v2146
        %v2179 = vcvt.s32.f32 %v2147
        %v2180 = vcvt.s32.f32 %v2148
        %v2181 = vcvt.s32.f32 %v2149
        %v2182 = vcvt.s32.f32 %v2150
        %v2183 = vcvt.s32.f32 %v2151
        %v2184 = vcvt.s32.f32 %v2152
        %v2185 = vcvt.s32.f32 %v2153
        %v2186 = vcvt.s32.f32 %v2154
        %v2187 = vcvt.s32.f32 %v2155
        %v2188 = vcvt.s32.f32 %v2156
        %v2189 = vcvt.s32.f32 %v2157
        %v2190 = vcvt.s32.f32 %v2158
        %v2191 = vcvt.s32.f32 %v2159
        %v2192 = vcvt.s32.f32 %v2160
        %v2193 = vcvt.s32.f32 %v2161
        %v2194 = vcvt.s32.f32 %v2162
        %v2195 = vcvt.s32.f32 %v2163
        %v2196 = vcvt.s32.f32 %v2164
        %v2197 = vadd.f32 %v2065, %v2165
        %v2198 = vadd.f32 %v2066, %v2166
        %v2199 = vadd.f32 %v2067, %v2167
        %v2200 = vadd.f32 %v2068, %v2168
        %v2201 = vadd.f32 %v2069, %v2169
        %v2202 = vadd.f32 %v2070, %v2170
        %v2203 = vadd.f32 %v2071, %v2171
        %v2204 = vadd.f32 %v2072, %v2172
        %v2205 = vadd.f32 %v2073, %v2173
        %v2206 = vadd.f32 %v2074, %v2174
        %v2207 = vadd.f32 %v2075, %v2175
        %v2208 = vadd.f32 %v2076, %v2176
        %v2209 = vadd.f32 %v2077, %v2177
        %v2210 = vadd.f32 %v2078, %v2178
        %v2211 = vadd.f32 %v2079, %v2179
        %v2212 = vadd.f32 %v2080, %v2180
        %v2213 = vadd.f32 %v2081, %v2181
        %v2214 = vadd.f32 %v2082, %v2182
        %v2215 = vadd.f32 %v2083, %v2183
        %v2216 = vadd.f32 %v2084, %v2184
        %v2217 = vadd.f32 %v2085, %v2185
        %v2218 = vadd.f32 %v2086, %v2186
        %v2219 = vadd.f32 %v2087, %v2187
        %v2220 = vadd.f32 %v2088, %v2188
        %v2221 = vadd.f32 %v2089, %v2189
        %v2222 = vadd.f32 %v2090, %v2190
        %v2223 = vadd.f32 %v2091, %v2191
        %v2224 = vadd.f32 %v2092, %v2192
        %v2225 = vadd.f32 %v2093, %v2193
        %v2226 = vadd.f32 %v2094, %v2194
        %v2227 = vadd.f32 %v2095, %v2195
        %v2228 = vadd.f32 %v2096, %v2196
        %v2229 = vlaneseq
        %v2230 = vshrl.u32 %v2229, 7
        %v2231 = vsub.s32 6, %v2230
        %v2232 = vrot.slane %v1964, %v2231
        %vm2233 = vcmp.eq.f32.partialorder %v2232, %v337
        %vm2234 = vcmp.eq.f32.partialorder %v2232, %v338
        %vm2235 = vcmp.eq.f32.partialorder %v2232, %v339
        %vm2236 = vcmp.eq.f32.partialorder %v2232, %v340
        %vm2237 = vcmp.eq.f32.partialorder %v2232, %v341
        %vm2238 = vcmp.eq.f32.partialorder %v2232, %v342
        %vm2239 = vcmp.eq.f32.partialorder %v2232, %v343
        %vm2240 = vcmp.eq.f32.partialorder %v2232, %v344
        %vm2241 = vcmp.eq.f32.partialorder %v2232, %v345
        %vm2242 = vcmp.eq.f32.partialorder %v2232, %v346
        %vm2243 = vcmp.eq.f32.partialorder %v2232, %v347
        %vm2244 = vcmp.eq.f32.partialorder %v2232, %v348
        %vm2245 = vcmp.eq.f32.partialorder %v2232, %v349
        %vm2246 = vcmp.eq.f32.partialorder %v2232, %v350
        %vm2247 = vcmp.eq.f32.partialorder %v2232, %v351
        %vm2248 = vcmp.eq.f32.partialorder %v2232, %v352
        %vm2249 = vcmp.eq.f32.partialorder %v2232, %v353
        %vm2250 = vcmp.eq.f32.partialorder %v2232, %v354
        %vm2251 = vcmp.eq.f32.partialorder %v2232, %v355
        %vm2252 = vcmp.eq.f32.partialorder %v2232, %v356
        %vm2253 = vcmp.eq.f32.partialorder %v2232, %v357
        %vm2254 = vcmp.eq.f32.partialorder %v2232, %v358
        %vm2255 = vcmp.eq.f32.partialorder %v2232, %v359
        %vm2256 = vcmp.eq.f32.partialorder %v2232, %v360
        %vm2257 = vcmp.eq.f32.partialorder %v2232, %v361
        %vm2258 = vcmp.eq.f32.partialorder %v2232, %v362
        %vm2259 = vcmp.eq.f32.partialorder %v2232, %v363
        %vm2260 = vcmp.eq.f32.partialorder %v2232, %v364
        %vm2261 = vcmp.eq.f32.partialorder %v2232, %v365
        %vm2262 = vcmp.eq.f32.partialorder %v2232, %v366
        %vm2263 = vcmp.eq.f32.partialorder %v2232, %v367
        %vm2264 = vcmp.eq.f32.partialorder %v2232, %v368
        %v2265 = vsel %vm2233, 1, 0
        %v2266 = vsel %vm2234, 1, 0
        %v2267 = vsel %vm2235, 1, 0
        %v2268 = vsel %vm2236, 1, 0
        %v2269 = vsel %vm2237, 1, 0
        %v2270 = vsel %vm2238, 1, 0
        %v2271 = vsel %vm2239, 1, 0
        %v2272 = vsel %vm2240, 1, 0
        %v2273 = vsel %vm2241, 1, 0
        %v2274 = vsel %vm2242, 1, 0
        %v2275 = vsel %vm2243, 1, 0
        %v2276 = vsel %vm2244, 1, 0
        %v2277 = vsel %vm2245, 1, 0
        %v2278 = vsel %vm2246, 1, 0
        %v2279 = vsel %vm2247, 1, 0
        %v2280 = vsel %vm2248, 1, 0
        %v2281 = vsel %vm2249, 1, 0
        %v2282 = vsel %vm2250, 1, 0
        %v2283 = vsel %vm2251, 1, 0
        %v2284 = vsel %vm2252, 1, 0
        %v2285 = vsel %vm2253, 1, 0
        %v2286 = vsel %vm2254, 1, 0
        %v2287 = vsel %vm2255, 1, 0
        %v2288 = vsel %vm2256, 1, 0
        %v2289 = vsel %vm2257, 1, 0
        %v2290 = vsel %vm2258, 1, 0
        %v2291 = vsel %vm2259, 1, 0
        %v2292 = vsel %vm2260, 1, 0
        %v2293 = vsel %vm2261, 1, 0
        %v2294 = vsel %vm2262, 1, 0
        %v2295 = vsel %vm2263, 1, 0
        %v2296 = vsel %vm2264, 1, 0
        %v2297 = vcvt.s32.f32 %v2265
        %v2298 = vcvt.s32.f32 %v2266
        %v2299 = vcvt.s32.f32 %v2267
        %v2300 = vcvt.s32.f32 %v2268
        %v2301 = vcvt.s32.f32 %v2269
        %v2302 = vcvt.s32.f32 %v2270
        %v2303 = vcvt.s32.f32 %v2271
        %v2304 = vcvt.s32.f32 %v2272
        %v2305 = vcvt.s32.f32 %v2273
        %v2306 = vcvt.s32.f32 %v2274
        %v2307 = vcvt.s32.f32 %v2275
        %v2308 = vcvt.s32.f32 %v2276
        %v2309 = vcvt.s32.f32 %v2277
        %v2310 = vcvt.s32.f32 %v2278
        %v2311 = vcvt.s32.f32 %v2279
        %v2312 = vcvt.s32.f32 %v2280
        %v2313 = vcvt.s32.f32 %v2281
        %v2314 = vcvt.s32.f32 %v2282
        %v2315 = vcvt.s32.f32 %v2283
        %v2316 = vcvt.s32.f32 %v2284
        %v2317 = vcvt.s32.f32 %v2285
        %v2318 = vcvt.s32.f32 %v2286
        %v2319 = vcvt.s32.f32 %v2287
        %v2320 = vcvt.s32.f32 %v2288
        %v2321 = vcvt.s32.f32 %v2289
        %v2322 = vcvt.s32.f32 %v2290
        %v2323 = vcvt.s32.f32 %v2291
        %v2324 = vcvt.s32.f32 %v2292
        %v2325 = vcvt.s32.f32 %v2293
        %v2326 = vcvt.s32.f32 %v2294
        %v2327 = vcvt.s32.f32 %v2295
        %v2328 = vcvt.s32.f32 %v2296
        %v2329 = vadd.f32 %v2197, %v2297
        %v2330 = vadd.f32 %v2198, %v2298
        %v2331 = vadd.f32 %v2199, %v2299
        %v2332 = vadd.f32 %v2200, %v2300
        %v2333 = vadd.f32 %v2201, %v2301
        %v2334 = vadd.f32 %v2202, %v2302
        %v2335 = vadd.f32 %v2203, %v2303
        %v2336 = vadd.f32 %v2204, %v2304
        %v2337 = vadd.f32 %v2205, %v2305
        %v2338 = vadd.f32 %v2206, %v2306
        %v2339 = vadd.f32 %v2207, %v2307
        %v2340 = vadd.f32 %v2208, %v2308
        %v2341 = vadd.f32 %v2209, %v2309
        %v2342 = vadd.f32 %v2210, %v2310
        %v2343 = vadd.f32 %v2211, %v2311
        %v2344 = vadd.f32 %v2212, %v2312
        %v2345 = vadd.f32 %v2213, %v2313
        %v2346 = vadd.f32 %v2214, %v2314
        %v2347 = vadd.f32 %v2215, %v2315
        %v2348 = vadd.f32 %v2216, %v2316
        %v2349 = vadd.f32 %v2217, %v2317
        %v2350 = vadd.f32 %v2218, %v2318
        %v2351 = vadd.f32 %v2219, %v2319
        %v2352 = vadd.f32 %v2220, %v2320
        %v2353 = vadd.f32 %v2221, %v2321
        %v2354 = vadd.f32 %v2222, %v2322
        %v2355 = vadd.f32 %v2223, %v2323
        %v2356 = vadd.f32 %v2224, %v2324
        %v2357 = vadd.f32 %v2225, %v2325
        %v2358 = vadd.f32 %v2226, %v2326
        %v2359 = vadd.f32 %v2227, %v2327
        %v2360 = vadd.f32 %v2228, %v2328
        %v2361 = vlaneseq
        %v2362 = vshrl.u32 %v2361, 7
        %v2363 = vsub.s32 7, %v2362
        %v2364 = vrot.slane %v1964, %v2363
        %vm2365 = vcmp.eq.f32.partialorder %v2364, %v337
        %vm2366 = vcmp.eq.f32.partialorder %v2364, %v338
        %vm2367 = vcmp.eq.f32.partialorder %v2364, %v339
        %vm2368 = vcmp.eq.f32.partialorder %v2364, %v340
        %vm2369 = vcmp.eq.f32.partialorder %v2364, %v341
        %vm2370 = vcmp.eq.f32.partialorder %v2364, %v342
        %vm2371 = vcmp.eq.f32.partialorder %v2364, %v343
        %vm2372 = vcmp.eq.f32.partialorder %v2364, %v344
        %vm2373 = vcmp.eq.f32.partialorder %v2364, %v345
        %vm2374 = vcmp.eq.f32.partialorder %v2364, %v346
        %vm2375 = vcmp.eq.f32.partialorder %v2364, %v347
        %vm2376 = vcmp.eq.f32.partialorder %v2364, %v348
        %vm2377 = vcmp.eq.f32.partialorder %v2364, %v349
        %vm2378 = vcmp.eq.f32.partialorder %v2364, %v350
        %vm2379 = vcmp.eq.f32.partialorder %v2364, %v351
        %vm2380 = vcmp.eq.f32.partialorder %v2364, %v352
        %vm2381 = vcmp.eq.f32.partialorder %v2364, %v353
        %vm2382 = vcmp.eq.f32.partialorder %v2364, %v354
        %vm2383 = vcmp.eq.f32.partialorder %v2364, %v355
        %vm2384 = vcmp.eq.f32.partialorder %v2364, %v356
        %vm2385 = vcmp.eq.f32.partialorder %v2364, %v357
        %vm2386 = vcmp.eq.f32.partialorder %v2364, %v358
        %vm2387 = vcmp.eq.f32.partialorder %v2364, %v359
        %vm2388 = vcmp.eq.f32.partialorder %v2364, %v360
        %vm2389 = vcmp.eq.f32.partialorder %v2364, %v361
        %vm2390 = vcmp.eq.f32.partialorder %v2364, %v362
        %vm2391 = vcmp.eq.f32.partialorder %v2364, %v363
        %vm2392 = vcmp.eq.f32.partialorder %v2364, %v364
        %vm2393 = vcmp.eq.f32.partialorder %v2364, %v365
        %vm2394 = vcmp.eq.f32.partialorder %v2364, %v366
        %vm2395 = vcmp.eq.f32.partialorder %v2364, %v367
        %vm2396 = vcmp.eq.f32.partialorder %v2364, %v368
        %v2397 = vsel %vm2365, 1, 0
        %v2398 = vsel %vm2366, 1, 0
        %v2399 = vsel %vm2367, 1, 0
        %v2400 = vsel %vm2368, 1, 0
        %v2401 = vsel %vm2369, 1, 0
        %v2402 = vsel %vm2370, 1, 0
        %v2403 = vsel %vm2371, 1, 0
        %v2404 = vsel %vm2372, 1, 0
        %v2405 = vsel %vm2373, 1, 0
        %v2406 = vsel %vm2374, 1, 0
        %v2407 = vsel %vm2375, 1, 0
        %v2408 = vsel %vm2376, 1, 0
        %v2409 = vsel %vm2377, 1, 0
        %v2410 = vsel %vm2378, 1, 0
        %v2411 = vsel %vm2379, 1, 0
        %v2412 = vsel %vm2380, 1, 0
        %v2413 = vsel %vm2381, 1, 0
        %v2414 = vsel %vm2382, 1, 0
        %v2415 = vsel %vm2383, 1, 0
        %v2416 = vsel %vm2384, 1, 0
        %v2417 = vsel %vm2385, 1, 0
        %v2418 = vsel %vm2386, 1, 0
        %v2419 = vsel %vm2387, 1, 0
        %v2420 = vsel %vm2388, 1, 0
        %v2421 = vsel %vm2389, 1, 0
        %v2422 = vsel %vm2390, 1, 0
        %v2423 = vsel %vm2391, 1, 0
        %v2424 = vsel %vm2392, 1, 0
        %v2425 = vsel %vm2393, 1, 0
        %v2426 = vsel %vm2394, 1, 0
        %v2427 = vsel %vm2395, 1, 0
        %v2428 = vsel %vm2396, 1, 0
        %v2429 = vcvt.s32.f32 %v2397
        %v2430 = vcvt.s32.f32 %v2398
        %v2431 = vcvt.s32.f32 %v2399
        %v2432 = vcvt.s32.f32 %v2400
        %v2433 = vcvt.s32.f32 %v2401
        %v2434 = vcvt.s32.f32 %v2402
        %v2435 = vcvt.s32.f32 %v2403
        %v2436 = vcvt.s32.f32 %v2404
        %v2437 = vcvt.s32.f32 %v2405
        %v2438 = vcvt.s32.f32 %v2406
        %v2439 = vcvt.s32.f32 %v2407
        %v2440 = vcvt.s32.f32 %v2408
        %v2441 = vcvt.s32.f32 %v2409
        %v2442 = vcvt.s32.f32 %v2410
        %v2443 = vcvt.s32.f32 %v2411
        %v2444 = vcvt.s32.f32 %v2412
        %v2445 = vcvt.s32.f32 %v2413
        %v2446 = vcvt.s32.f32 %v2414
        %v2447 = vcvt.s32.f32 %v2415
        %v2448 = vcvt.s32.f32 %v2416
        %v2449 = vcvt.s32.f32 %v2417
        %v2450 = vcvt.s32.f32 %v2418
        %v2451 = vcvt.s32.f32 %v2419
        %v2452 = vcvt.s32.f32 %v2420
        %v2453 = vcvt.s32.f32 %v2421
        %v2454 = vcvt.s32.f32 %v2422
        %v2455 = vcvt.s32.f32 %v2423
        %v2456 = vcvt.s32.f32 %v2424
        %v2457 = vcvt.s32.f32 %v2425
        %v2458 = vcvt.s32.f32 %v2426
        %v2459 = vcvt.s32.f32 %v2427
        %v2460 = vcvt.s32.f32 %v2428
        %v2461 = vadd.f32 %v2329, %v2429
        %v2462 = vadd.f32 %v2330, %v2430
        %v2463 = vadd.f32 %v2331, %v2431
        %v2464 = vadd.f32 %v2332, %v2432
        %v2465 = vadd.f32 %v2333, %v2433
        %v2466 = vadd.f32 %v2334, %v2434
        %v2467 = vadd.f32 %v2335, %v2435
        %v2468 = vadd.f32 %v2336, %v2436
        %v2469 = vadd.f32 %v2337, %v2437
        %v2470 = vadd.f32 %v2338, %v2438
        %v2471 = vadd.f32 %v2339, %v2439
        %v2472 = vadd.f32 %v2340, %v2440
        %v2473 = vadd.f32 %v2341, %v2441
        %v2474 = vadd.f32 %v2342, %v2442
        %v2475 = vadd.f32 %v2343, %v2443
        %v2476 = vadd.f32 %v2344, %v2444
        %v2477 = vadd.f32 %v2345, %v2445
        %v2478 = vadd.f32 %v2346, %v2446
        %v2479 = vadd.f32 %v2347, %v2447
        %v2480 = vadd.f32 %v2348, %v2448
        %v2481 = vadd.f32 %v2349, %v2449
        %v2482 = vadd.f32 %v2350, %v2450
        %v2483 = vadd.f32 %v2351, %v2451
        %v2484 = vadd.f32 %v2352, %v2452
        %v2485 = vadd.f32 %v2353, %v2453
        %v2486 = vadd.f32 %v2354, %v2454
        %v2487 = vadd.f32 %v2355, %v2455
        %v2488 = vadd.f32 %v2356, %v2456
        %v2489 = vadd.f32 %v2357, %v2457
        %v2490 = vadd.f32 %v2358, %v2458
        %v2491 = vadd.f32 %v2359, %v2459
        %v2492 = vadd.f32 %v2360, %v2460
        %v2493 = vld [vmem:[%s250 + $0x4] sm:$0x1]
        %v2494 = vunpack.c.0.s8 %v2493
        %v2495 = vcvt.s32.f32 %v2494
        %v2496 = vlaneseq
        %v2497 = vshrl.u32 %v2496, 7
        %v2498 = vsub.s32 0, %v2497
        %v2499 = vrot.slane %v2495, %v2498
        %vm2500 = vcmp.eq.f32.partialorder %v2499, %v337
        %vm2501 = vcmp.eq.f32.partialorder %v2499, %v338
        %vm2502 = vcmp.eq.f32.partialorder %v2499, %v339
        %vm2503 = vcmp.eq.f32.partialorder %v2499, %v340
        %vm2504 = vcmp.eq.f32.partialorder %v2499, %v341
        %vm2505 = vcmp.eq.f32.partialorder %v2499, %v342
        %vm2506 = vcmp.eq.f32.partialorder %v2499, %v343
        %vm2507 = vcmp.eq.f32.partialorder %v2499, %v344
        %vm2508 = vcmp.eq.f32.partialorder %v2499, %v345
        %vm2509 = vcmp.eq.f32.partialorder %v2499, %v346
        %vm2510 = vcmp.eq.f32.partialorder %v2499, %v347
        %vm2511 = vcmp.eq.f32.partialorder %v2499, %v348
        %vm2512 = vcmp.eq.f32.partialorder %v2499, %v349
        %vm2513 = vcmp.eq.f32.partialorder %v2499, %v350
        %vm2514 = vcmp.eq.f32.partialorder %v2499, %v351
        %vm2515 = vcmp.eq.f32.partialorder %v2499, %v352
        %vm2516 = vcmp.eq.f32.partialorder %v2499, %v353
        %vm2517 = vcmp.eq.f32.partialorder %v2499, %v354
        %vm2518 = vcmp.eq.f32.partialorder %v2499, %v355
        %vm2519 = vcmp.eq.f32.partialorder %v2499, %v356
        %vm2520 = vcmp.eq.f32.partialorder %v2499, %v357
        %vm2521 = vcmp.eq.f32.partialorder %v2499, %v358
        %vm2522 = vcmp.eq.f32.partialorder %v2499, %v359
        %vm2523 = vcmp.eq.f32.partialorder %v2499, %v360
        %vm2524 = vcmp.eq.f32.partialorder %v2499, %v361
        %vm2525 = vcmp.eq.f32.partialorder %v2499, %v362
        %vm2526 = vcmp.eq.f32.partialorder %v2499, %v363
        %vm2527 = vcmp.eq.f32.partialorder %v2499, %v364
        %vm2528 = vcmp.eq.f32.partialorder %v2499, %v365
        %vm2529 = vcmp.eq.f32.partialorder %v2499, %v366
        %vm2530 = vcmp.eq.f32.partialorder %v2499, %v367
        %vm2531 = vcmp.eq.f32.partialorder %v2499, %v368
        %v2532 = vsel %vm2500, 1, 0
        %v2533 = vsel %vm2501, 1, 0
        %v2534 = vsel %vm2502, 1, 0
        %v2535 = vsel %vm2503, 1, 0
        %v2536 = vsel %vm2504, 1, 0
        %v2537 = vsel %vm2505, 1, 0
        %v2538 = vsel %vm2506, 1, 0
        %v2539 = vsel %vm2507, 1, 0
        %v2540 = vsel %vm2508, 1, 0
        %v2541 = vsel %vm2509, 1, 0
        %v2542 = vsel %vm2510, 1, 0
        %v2543 = vsel %vm2511, 1, 0
        %v2544 = vsel %vm2512, 1, 0
        %v2545 = vsel %vm2513, 1, 0
        %v2546 = vsel %vm2514, 1, 0
        %v2547 = vsel %vm2515, 1, 0
        %v2548 = vsel %vm2516, 1, 0
        %v2549 = vsel %vm2517, 1, 0
        %v2550 = vsel %vm2518, 1, 0
        %v2551 = vsel %vm2519, 1, 0
        %v2552 = vsel %vm2520, 1, 0
        %v2553 = vsel %vm2521, 1, 0
        %v2554 = vsel %vm2522, 1, 0
        %v2555 = vsel %vm2523, 1, 0
        %v2556 = vsel %vm2524, 1, 0
        %v2557 = vsel %vm2525, 1, 0
        %v2558 = vsel %vm2526, 1, 0
        %v2559 = vsel %vm2527, 1, 0
        %v2560 = vsel %vm2528, 1, 0
        %v2561 = vsel %vm2529, 1, 0
        %v2562 = vsel %vm2530, 1, 0
        %v2563 = vsel %vm2531, 1, 0
        %v2564 = vcvt.s32.f32 %v2532
        %v2565 = vcvt.s32.f32 %v2533
        %v2566 = vcvt.s32.f32 %v2534
        %v2567 = vcvt.s32.f32 %v2535
        %v2568 = vcvt.s32.f32 %v2536
        %v2569 = vcvt.s32.f32 %v2537
        %v2570 = vcvt.s32.f32 %v2538
        %v2571 = vcvt.s32.f32 %v2539
        %v2572 = vcvt.s32.f32 %v2540
        %v2573 = vcvt.s32.f32 %v2541
        %v2574 = vcvt.s32.f32 %v2542
        %v2575 = vcvt.s32.f32 %v2543
        %v2576 = vcvt.s32.f32 %v2544
        %v2577 = vcvt.s32.f32 %v2545
        %v2578 = vcvt.s32.f32 %v2546
        %v2579 = vcvt.s32.f32 %v2547
        %v2580 = vcvt.s32.f32 %v2548
        %v2581 = vcvt.s32.f32 %v2549
        %v2582 = vcvt.s32.f32 %v2550
        %v2583 = vcvt.s32.f32 %v2551
        %v2584 = vcvt.s32.f32 %v2552
        %v2585 = vcvt.s32.f32 %v2553
        %v2586 = vcvt.s32.f32 %v2554
        %v2587 = vcvt.s32.f32 %v2555
        %v2588 = vcvt.s32.f32 %v2556
        %v2589 = vcvt.s32.f32 %v2557
        %v2590 = vcvt.s32.f32 %v2558
        %v2591 = vcvt.s32.f32 %v2559
        %v2592 = vcvt.s32.f32 %v2560
        %v2593 = vcvt.s32.f32 %v2561
        %v2594 = vcvt.s32.f32 %v2562
        %v2595 = vcvt.s32.f32 %v2563
        %v2596 = vadd.f32 %v2461, %v2564
        %v2597 = vadd.f32 %v2462, %v2565
        %v2598 = vadd.f32 %v2463, %v2566
        %v2599 = vadd.f32 %v2464, %v2567
        %v2600 = vadd.f32 %v2465, %v2568
        %v2601 = vadd.f32 %v2466, %v2569
        %v2602 = vadd.f32 %v2467, %v2570
        %v2603 = vadd.f32 %v2468, %v2571
        %v2604 = vadd.f32 %v2469, %v2572
        %v2605 = vadd.f32 %v2470, %v2573
        %v2606 = vadd.f32 %v2471, %v2574
        %v2607 = vadd.f32 %v2472, %v2575
        %v2608 = vadd.f32 %v2473, %v2576
        %v2609 = vadd.f32 %v2474, %v2577
        %v2610 = vadd.f32 %v2475, %v2578
        %v2611 = vadd.f32 %v2476, %v2579
        %v2612 = vadd.f32 %v2477, %v2580
        %v2613 = vadd.f32 %v2478, %v2581
        %v2614 = vadd.f32 %v2479, %v2582
        %v2615 = vadd.f32 %v2480, %v2583
        %v2616 = vadd.f32 %v2481, %v2584
        %v2617 = vadd.f32 %v2482, %v2585
        %v2618 = vadd.f32 %v2483, %v2586
        %v2619 = vadd.f32 %v2484, %v2587
        %v2620 = vadd.f32 %v2485, %v2588
        %v2621 = vadd.f32 %v2486, %v2589
        %v2622 = vadd.f32 %v2487, %v2590
        %v2623 = vadd.f32 %v2488, %v2591
        %v2624 = vadd.f32 %v2489, %v2592
        %v2625 = vadd.f32 %v2490, %v2593
        %v2626 = vadd.f32 %v2491, %v2594
        %v2627 = vadd.f32 %v2492, %v2595
        %v2628 = vlaneseq
        %v2629 = vshrl.u32 %v2628, 7
        %v2630 = vsub.s32 1, %v2629
        %v2631 = vrot.slane %v2495, %v2630
        %vm2632 = vcmp.eq.f32.partialorder %v2631, %v337
        %vm2633 = vcmp.eq.f32.partialorder %v2631, %v338
        %vm2634 = vcmp.eq.f32.partialorder %v2631, %v339
        %vm2635 = vcmp.eq.f32.partialorder %v2631, %v340
        %vm2636 = vcmp.eq.f32.partialorder %v2631, %v341
        %vm2637 = vcmp.eq.f32.partialorder %v2631, %v342
        %vm2638 = vcmp.eq.f32.partialorder %v2631, %v343
        %vm2639 = vcmp.eq.f32.partialorder %v2631, %v344
        %vm2640 = vcmp.eq.f32.partialorder %v2631, %v345
        %vm2641 = vcmp.eq.f32.partialorder %v2631, %v346
        %vm2642 = vcmp.eq.f32.partialorder %v2631, %v347
        %vm2643 = vcmp.eq.f32.partialorder %v2631, %v348
        %vm2644 = vcmp.eq.f32.partialorder %v2631, %v349
        %vm2645 = vcmp.eq.f32.partialorder %v2631, %v350
        %vm2646 = vcmp.eq.f32.partialorder %v2631, %v351
        %vm2647 = vcmp.eq.f32.partialorder %v2631, %v352
        %vm2648 = vcmp.eq.f32.partialorder %v2631, %v353
        %vm2649 = vcmp.eq.f32.partialorder %v2631, %v354
        %vm2650 = vcmp.eq.f32.partialorder %v2631, %v355
        %vm2651 = vcmp.eq.f32.partialorder %v2631, %v356
        %vm2652 = vcmp.eq.f32.partialorder %v2631, %v357
        %vm2653 = vcmp.eq.f32.partialorder %v2631, %v358
        %vm2654 = vcmp.eq.f32.partialorder %v2631, %v359
        %vm2655 = vcmp.eq.f32.partialorder %v2631, %v360
        %vm2656 = vcmp.eq.f32.partialorder %v2631, %v361
        %vm2657 = vcmp.eq.f32.partialorder %v2631, %v362
        %vm2658 = vcmp.eq.f32.partialorder %v2631, %v363
        %vm2659 = vcmp.eq.f32.partialorder %v2631, %v364
        %vm2660 = vcmp.eq.f32.partialorder %v2631, %v365
        %vm2661 = vcmp.eq.f32.partialorder %v2631, %v366
        %vm2662 = vcmp.eq.f32.partialorder %v2631, %v367
        %vm2663 = vcmp.eq.f32.partialorder %v2631, %v368
        %v2664 = vsel %vm2632, 1, 0
        %v2665 = vsel %vm2633, 1, 0
        %v2666 = vsel %vm2634, 1, 0
        %v2667 = vsel %vm2635, 1, 0
        %v2668 = vsel %vm2636, 1, 0
        %v2669 = vsel %vm2637, 1, 0
        %v2670 = vsel %vm2638, 1, 0
        %v2671 = vsel %vm2639, 1, 0
        %v2672 = vsel %vm2640, 1, 0
        %v2673 = vsel %vm2641, 1, 0
        %v2674 = vsel %vm2642, 1, 0
        %v2675 = vsel %vm2643, 1, 0
        %v2676 = vsel %vm2644, 1, 0
        %v2677 = vsel %vm2645, 1, 0
        %v2678 = vsel %vm2646, 1, 0
        %v2679 = vsel %vm2647, 1, 0
        %v2680 = vsel %vm2648, 1, 0
        %v2681 = vsel %vm2649, 1, 0
        %v2682 = vsel %vm2650, 1, 0
        %v2683 = vsel %vm2651, 1, 0
        %v2684 = vsel %vm2652, 1, 0
        %v2685 = vsel %vm2653, 1, 0
        %v2686 = vsel %vm2654, 1, 0
        %v2687 = vsel %vm2655, 1, 0
        %v2688 = vsel %vm2656, 1, 0
        %v2689 = vsel %vm2657, 1, 0
        %v2690 = vsel %vm2658, 1, 0
        %v2691 = vsel %vm2659, 1, 0
        %v2692 = vsel %vm2660, 1, 0
        %v2693 = vsel %vm2661, 1, 0
        %v2694 = vsel %vm2662, 1, 0
        %v2695 = vsel %vm2663, 1, 0
        %v2696 = vcvt.s32.f32 %v2664
        %v2697 = vcvt.s32.f32 %v2665
        %v2698 = vcvt.s32.f32 %v2666
        %v2699 = vcvt.s32.f32 %v2667
        %v2700 = vcvt.s32.f32 %v2668
        %v2701 = vcvt.s32.f32 %v2669
        %v2702 = vcvt.s32.f32 %v2670
        %v2703 = vcvt.s32.f32 %v2671
        %v2704 = vcvt.s32.f32 %v2672
        %v2705 = vcvt.s32.f32 %v2673
        %v2706 = vcvt.s32.f32 %v2674
        %v2707 = vcvt.s32.f32 %v2675
        %v2708 = vcvt.s32.f32 %v2676
        %v2709 = vcvt.s32.f32 %v2677
        %v2710 = vcvt.s32.f32 %v2678
        %v2711 = vcvt.s32.f32 %v2679
        %v2712 = vcvt.s32.f32 %v2680
        %v2713 = vcvt.s32.f32 %v2681
        %v2714 = vcvt.s32.f32 %v2682
        %v2715 = vcvt.s32.f32 %v2683
        %v2716 = vcvt.s32.f32 %v2684
        %v2717 = vcvt.s32.f32 %v2685
        %v2718 = vcvt.s32.f32 %v2686
        %v2719 = vcvt.s32.f32 %v2687
        %v2720 = vcvt.s32.f32 %v2688
        %v2721 = vcvt.s32.f32 %v2689
        %v2722 = vcvt.s32.f32 %v2690
        %v2723 = vcvt.s32.f32 %v2691
        %v2724 = vcvt.s32.f32 %v2692
        %v2725 = vcvt.s32.f32 %v2693
        %v2726 = vcvt.s32.f32 %v2694
        %v2727 = vcvt.s32.f32 %v2695
        %v2728 = vadd.f32 %v2596, %v2696
        %v2729 = vadd.f32 %v2597, %v2697
        %v2730 = vadd.f32 %v2598, %v2698
        %v2731 = vadd.f32 %v2599, %v2699
        %v2732 = vadd.f32 %v2600, %v2700
        %v2733 = vadd.f32 %v2601, %v2701
        %v2734 = vadd.f32 %v2602, %v2702
        %v2735 = vadd.f32 %v2603, %v2703
        %v2736 = vadd.f32 %v2604, %v2704
        %v2737 = vadd.f32 %v2605, %v2705
        %v2738 = vadd.f32 %v2606, %v2706
        %v2739 = vadd.f32 %v2607, %v2707
        %v2740 = vadd.f32 %v2608, %v2708
        %v2741 = vadd.f32 %v2609, %v2709
        %v2742 = vadd.f32 %v2610, %v2710
        %v2743 = vadd.f32 %v2611, %v2711
        %v2744 = vadd.f32 %v2612, %v2712
        %v2745 = vadd.f32 %v2613, %v2713
        %v2746 = vadd.f32 %v2614, %v2714
        %v2747 = vadd.f32 %v2615, %v2715
        %v2748 = vadd.f32 %v2616, %v2716
        %v2749 = vadd.f32 %v2617, %v2717
        %v2750 = vadd.f32 %v2618, %v2718
        %v2751 = vadd.f32 %v2619, %v2719
        %v2752 = vadd.f32 %v2620, %v2720
        %v2753 = vadd.f32 %v2621, %v2721
        %v2754 = vadd.f32 %v2622, %v2722
        %v2755 = vadd.f32 %v2623, %v2723
        %v2756 = vadd.f32 %v2624, %v2724
        %v2757 = vadd.f32 %v2625, %v2725
        %v2758 = vadd.f32 %v2626, %v2726
        %v2759 = vadd.f32 %v2627, %v2727
        %v2760 = vlaneseq
        %v2761 = vshrl.u32 %v2760, 7
        %v2762 = vsub.s32 2, %v2761
        %v2763 = vrot.slane %v2495, %v2762
        %vm2764 = vcmp.eq.f32.partialorder %v2763, %v337
        %vm2765 = vcmp.eq.f32.partialorder %v2763, %v338
        %vm2766 = vcmp.eq.f32.partialorder %v2763, %v339
        %vm2767 = vcmp.eq.f32.partialorder %v2763, %v340
        %vm2768 = vcmp.eq.f32.partialorder %v2763, %v341
        %vm2769 = vcmp.eq.f32.partialorder %v2763, %v342
        %vm2770 = vcmp.eq.f32.partialorder %v2763, %v343
        %vm2771 = vcmp.eq.f32.partialorder %v2763, %v344
        %vm2772 = vcmp.eq.f32.partialorder %v2763, %v345
        %vm2773 = vcmp.eq.f32.partialorder %v2763, %v346
        %vm2774 = vcmp.eq.f32.partialorder %v2763, %v347
        %vm2775 = vcmp.eq.f32.partialorder %v2763, %v348
        %vm2776 = vcmp.eq.f32.partialorder %v2763, %v349
        %vm2777 = vcmp.eq.f32.partialorder %v2763, %v350
        %vm2778 = vcmp.eq.f32.partialorder %v2763, %v351
        %vm2779 = vcmp.eq.f32.partialorder %v2763, %v352
        %vm2780 = vcmp.eq.f32.partialorder %v2763, %v353
        %vm2781 = vcmp.eq.f32.partialorder %v2763, %v354
        %vm2782 = vcmp.eq.f32.partialorder %v2763, %v355
        %vm2783 = vcmp.eq.f32.partialorder %v2763, %v356
        %vm2784 = vcmp.eq.f32.partialorder %v2763, %v357
        %vm2785 = vcmp.eq.f32.partialorder %v2763, %v358
        %vm2786 = vcmp.eq.f32.partialorder %v2763, %v359
        %vm2787 = vcmp.eq.f32.partialorder %v2763, %v360
        %vm2788 = vcmp.eq.f32.partialorder %v2763, %v361
        %vm2789 = vcmp.eq.f32.partialorder %v2763, %v362
        %vm2790 = vcmp.eq.f32.partialorder %v2763, %v363
        %vm2791 = vcmp.eq.f32.partialorder %v2763, %v364
        %vm2792 = vcmp.eq.f32.partialorder %v2763, %v365
        %vm2793 = vcmp.eq.f32.partialorder %v2763, %v366
        %vm2794 = vcmp.eq.f32.partialorder %v2763, %v367
        %vm2795 = vcmp.eq.f32.partialorder %v2763, %v368
        %v2796 = vsel %vm2764, 1, 0
        %v2797 = vsel %vm2765, 1, 0
        %v2798 = vsel %vm2766, 1, 0
        %v2799 = vsel %vm2767, 1, 0
        %v2800 = vsel %vm2768, 1, 0
        %v2801 = vsel %vm2769, 1, 0
        %v2802 = vsel %vm2770, 1, 0
        %v2803 = vsel %vm2771, 1, 0
        %v2804 = vsel %vm2772, 1, 0
        %v2805 = vsel %vm2773, 1, 0
        %v2806 = vsel %vm2774, 1, 0
        %v2807 = vsel %vm2775, 1, 0
        %v2808 = vsel %vm2776, 1, 0
        %v2809 = vsel %vm2777, 1, 0
        %v2810 = vsel %vm2778, 1, 0
        %v2811 = vsel %vm2779, 1, 0
        %v2812 = vsel %vm2780, 1, 0
        %v2813 = vsel %vm2781, 1, 0
        %v2814 = vsel %vm2782, 1, 0
        %v2815 = vsel %vm2783, 1, 0
        %v2816 = vsel %vm2784, 1, 0
        %v2817 = vsel %vm2785, 1, 0
        %v2818 = vsel %vm2786, 1, 0
        %v2819 = vsel %vm2787, 1, 0
        %v2820 = vsel %vm2788, 1, 0
        %v2821 = vsel %vm2789, 1, 0
        %v2822 = vsel %vm2790, 1, 0
        %v2823 = vsel %vm2791, 1, 0
        %v2824 = vsel %vm2792, 1, 0
        %v2825 = vsel %vm2793, 1, 0
        %v2826 = vsel %vm2794, 1, 0
        %v2827 = vsel %vm2795, 1, 0
        %v2828 = vcvt.s32.f32 %v2796
        %v2829 = vcvt.s32.f32 %v2797
        %v2830 = vcvt.s32.f32 %v2798
        %v2831 = vcvt.s32.f32 %v2799
        %v2832 = vcvt.s32.f32 %v2800
        %v2833 = vcvt.s32.f32 %v2801
        %v2834 = vcvt.s32.f32 %v2802
        %v2835 = vcvt.s32.f32 %v2803
        %v2836 = vcvt.s32.f32 %v2804
        %v2837 = vcvt.s32.f32 %v2805
        %v2838 = vcvt.s32.f32 %v2806
        %v2839 = vcvt.s32.f32 %v2807
        %v2840 = vcvt.s32.f32 %v2808
        %v2841 = vcvt.s32.f32 %v2809
        %v2842 = vcvt.s32.f32 %v2810
        %v2843 = vcvt.s32.f32 %v2811
        %v2844 = vcvt.s32.f32 %v2812
        %v2845 = vcvt.s32.f32 %v2813
        %v2846 = vcvt.s32.f32 %v2814
        %v2847 = vcvt.s32.f32 %v2815
        %v2848 = vcvt.s32.f32 %v2816
        %v2849 = vcvt.s32.f32 %v2817
        %v2850 = vcvt.s32.f32 %v2818
        %v2851 = vcvt.s32.f32 %v2819
        %v2852 = vcvt.s32.f32 %v2820
        %v2853 = vcvt.s32.f32 %v2821
        %v2854 = vcvt.s32.f32 %v2822
        %v2855 = vcvt.s32.f32 %v2823
        %v2856 = vcvt.s32.f32 %v2824
        %v2857 = vcvt.s32.f32 %v2825
        %v2858 = vcvt.s32.f32 %v2826
        %v2859 = vcvt.s32.f32 %v2827
        %v2860 = vadd.f32 %v2728, %v2828
        %v2861 = vadd.f32 %v2729, %v2829
        %v2862 = vadd.f32 %v2730, %v2830
        %v2863 = vadd.f32 %v2731, %v2831
        %v2864 = vadd.f32 %v2732, %v2832
        %v2865 = vadd.f32 %v2733, %v2833
        %v2866 = vadd.f32 %v2734, %v2834
        %v2867 = vadd.f32 %v2735, %v2835
        %v2868 = vadd.f32 %v2736, %v2836
        %v2869 = vadd.f32 %v2737, %v2837
        %v2870 = vadd.f32 %v2738, %v2838
        %v2871 = vadd.f32 %v2739, %v2839
        %v2872 = vadd.f32 %v2740, %v2840
        %v2873 = vadd.f32 %v2741, %v2841
        %v2874 = vadd.f32 %v2742, %v2842
        %v2875 = vadd.f32 %v2743, %v2843
        %v2876 = vadd.f32 %v2744, %v2844
        %v2877 = vadd.f32 %v2745, %v2845
        %v2878 = vadd.f32 %v2746, %v2846
        %v2879 = vadd.f32 %v2747, %v2847
        %v2880 = vadd.f32 %v2748, %v2848
        %v2881 = vadd.f32 %v2749, %v2849
        %v2882 = vadd.f32 %v2750, %v2850
        %v2883 = vadd.f32 %v2751, %v2851
        %v2884 = vadd.f32 %v2752, %v2852
        %v2885 = vadd.f32 %v2753, %v2853
        %v2886 = vadd.f32 %v2754, %v2854
        %v2887 = vadd.f32 %v2755, %v2855
        %v2888 = vadd.f32 %v2756, %v2856
        %v2889 = vadd.f32 %v2757, %v2857
        %v2890 = vadd.f32 %v2758, %v2858
        %v2891 = vadd.f32 %v2759, %v2859
        %v2892 = vlaneseq
        %v2893 = vshrl.u32 %v2892, 7
        %v2894 = vsub.s32 3, %v2893
        %v2895 = vrot.slane %v2495, %v2894
        %vm2896 = vcmp.eq.f32.partialorder %v2895, %v337
        %vm2897 = vcmp.eq.f32.partialorder %v2895, %v338
        %vm2898 = vcmp.eq.f32.partialorder %v2895, %v339
        %vm2899 = vcmp.eq.f32.partialorder %v2895, %v340
        %vm2900 = vcmp.eq.f32.partialorder %v2895, %v341
        %vm2901 = vcmp.eq.f32.partialorder %v2895, %v342
        %vm2902 = vcmp.eq.f32.partialorder %v2895, %v343
        %vm2903 = vcmp.eq.f32.partialorder %v2895, %v344
        %vm2904 = vcmp.eq.f32.partialorder %v2895, %v345
        %vm2905 = vcmp.eq.f32.partialorder %v2895, %v346
        %vm2906 = vcmp.eq.f32.partialorder %v2895, %v347
        %vm2907 = vcmp.eq.f32.partialorder %v2895, %v348
        %vm2908 = vcmp.eq.f32.partialorder %v2895, %v349
        %vm2909 = vcmp.eq.f32.partialorder %v2895, %v350
        %vm2910 = vcmp.eq.f32.partialorder %v2895, %v351
        %vm2911 = vcmp.eq.f32.partialorder %v2895, %v352
        %vm2912 = vcmp.eq.f32.partialorder %v2895, %v353
        %vm2913 = vcmp.eq.f32.partialorder %v2895, %v354
        %vm2914 = vcmp.eq.f32.partialorder %v2895, %v355
        %vm2915 = vcmp.eq.f32.partialorder %v2895, %v356
        %vm2916 = vcmp.eq.f32.partialorder %v2895, %v357
        %vm2917 = vcmp.eq.f32.partialorder %v2895, %v358
        %vm2918 = vcmp.eq.f32.partialorder %v2895, %v359
        %vm2919 = vcmp.eq.f32.partialorder %v2895, %v360
        %vm2920 = vcmp.eq.f32.partialorder %v2895, %v361
        %vm2921 = vcmp.eq.f32.partialorder %v2895, %v362
        %vm2922 = vcmp.eq.f32.partialorder %v2895, %v363
        %vm2923 = vcmp.eq.f32.partialorder %v2895, %v364
        %vm2924 = vcmp.eq.f32.partialorder %v2895, %v365
        %vm2925 = vcmp.eq.f32.partialorder %v2895, %v366
        %vm2926 = vcmp.eq.f32.partialorder %v2895, %v367
        %vm2927 = vcmp.eq.f32.partialorder %v2895, %v368
        %v2928 = vsel %vm2896, 1, 0
        %v2929 = vsel %vm2897, 1, 0
        %v2930 = vsel %vm2898, 1, 0
        %v2931 = vsel %vm2899, 1, 0
        %v2932 = vsel %vm2900, 1, 0
        %v2933 = vsel %vm2901, 1, 0
        %v2934 = vsel %vm2902, 1, 0
        %v2935 = vsel %vm2903, 1, 0
        %v2936 = vsel %vm2904, 1, 0
        %v2937 = vsel %vm2905, 1, 0
        %v2938 = vsel %vm2906, 1, 0
        %v2939 = vsel %vm2907, 1, 0
        %v2940 = vsel %vm2908, 1, 0
        %v2941 = vsel %vm2909, 1, 0
        %v2942 = vsel %vm2910, 1, 0
        %v2943 = vsel %vm2911, 1, 0
        %v2944 = vsel %vm2912, 1, 0
        %v2945 = vsel %vm2913, 1, 0
        %v2946 = vsel %vm2914, 1, 0
        %v2947 = vsel %vm2915, 1, 0
        %v2948 = vsel %vm2916, 1, 0
        %v2949 = vsel %vm2917, 1, 0
        %v2950 = vsel %vm2918, 1, 0
        %v2951 = vsel %vm2919, 1, 0
        %v2952 = vsel %vm2920, 1, 0
        %v2953 = vsel %vm2921, 1, 0
        %v2954 = vsel %vm2922, 1, 0
        %v2955 = vsel %vm2923, 1, 0
        %v2956 = vsel %vm2924, 1, 0
        %v2957 = vsel %vm2925, 1, 0
        %v2958 = vsel %vm2926, 1, 0
        %v2959 = vsel %vm2927, 1, 0
        %v2960 = vcvt.s32.f32 %v2928
        %v2961 = vcvt.s32.f32 %v2929
        %v2962 = vcvt.s32.f32 %v2930
        %v2963 = vcvt.s32.f32 %v2931
        %v2964 = vcvt.s32.f32 %v2932
        %v2965 = vcvt.s32.f32 %v2933
        %v2966 = vcvt.s32.f32 %v2934
        %v2967 = vcvt.s32.f32 %v2935
        %v2968 = vcvt.s32.f32 %v2936
        %v2969 = vcvt.s32.f32 %v2937
        %v2970 = vcvt.s32.f32 %v2938
        %v2971 = vcvt.s32.f32 %v2939
        %v2972 = vcvt.s32.f32 %v2940
        %v2973 = vcvt.s32.f32 %v2941
        %v2974 = vcvt.s32.f32 %v2942
        %v2975 = vcvt.s32.f32 %v2943
        %v2976 = vcvt.s32.f32 %v2944
        %v2977 = vcvt.s32.f32 %v2945
        %v2978 = vcvt.s32.f32 %v2946
        %v2979 = vcvt.s32.f32 %v2947
        %v2980 = vcvt.s32.f32 %v2948
        %v2981 = vcvt.s32.f32 %v2949
        %v2982 = vcvt.s32.f32 %v2950
        %v2983 = vcvt.s32.f32 %v2951
        %v2984 = vcvt.s32.f32 %v2952
        %v2985 = vcvt.s32.f32 %v2953
        %v2986 = vcvt.s32.f32 %v2954
        %v2987 = vcvt.s32.f32 %v2955
        %v2988 = vcvt.s32.f32 %v2956
        %v2989 = vcvt.s32.f32 %v2957
        %v2990 = vcvt.s32.f32 %v2958
        %v2991 = vcvt.s32.f32 %v2959
        %v2992 = vadd.f32 %v2860, %v2960
        %v2993 = vadd.f32 %v2861, %v2961
        %v2994 = vadd.f32 %v2862, %v2962
        %v2995 = vadd.f32 %v2863, %v2963
        %v2996 = vadd.f32 %v2864, %v2964
        %v2997 = vadd.f32 %v2865, %v2965
        %v2998 = vadd.f32 %v2866, %v2966
        %v2999 = vadd.f32 %v2867, %v2967
        %v3000 = vadd.f32 %v2868, %v2968
        %v3001 = vadd.f32 %v2869, %v2969
        %v3002 = vadd.f32 %v2870, %v2970
        %v3003 = vadd.f32 %v2871, %v2971
        %v3004 = vadd.f32 %v2872, %v2972
        %v3005 = vadd.f32 %v2873, %v2973
        %v3006 = vadd.f32 %v2874, %v2974
        %v3007 = vadd.f32 %v2875, %v2975
        %v3008 = vadd.f32 %v2876, %v2976
        %v3009 = vadd.f32 %v2877, %v2977
        %v3010 = vadd.f32 %v2878, %v2978
        %v3011 = vadd.f32 %v2879, %v2979
        %v3012 = vadd.f32 %v2880, %v2980
        %v3013 = vadd.f32 %v2881, %v2981
        %v3014 = vadd.f32 %v2882, %v2982
        %v3015 = vadd.f32 %v2883, %v2983
        %v3016 = vadd.f32 %v2884, %v2984
        %v3017 = vadd.f32 %v2885, %v2985
        %v3018 = vadd.f32 %v2886, %v2986
        %v3019 = vadd.f32 %v2887, %v2987
        %v3020 = vadd.f32 %v2888, %v2988
        %v3021 = vadd.f32 %v2889, %v2989
        %v3022 = vadd.f32 %v2890, %v2990
        %v3023 = vadd.f32 %v2891, %v2991
        %v3024 = vld [vmem:[%s250 + $0x4] sm:$0x2]
        %v3025 = vunpack.c.0.s8 %v3024
        %v3026 = vcvt.s32.f32 %v3025
        %v3027 = vlaneseq
        %v3028 = vshrl.u32 %v3027, 7
        %v3029 = vsub.s32 4, %v3028
        %v3030 = vrot.slane %v3026, %v3029
        %vm3031 = vcmp.eq.f32.partialorder %v3030, %v337
        %vm3032 = vcmp.eq.f32.partialorder %v3030, %v338
        %vm3033 = vcmp.eq.f32.partialorder %v3030, %v339
        %vm3034 = vcmp.eq.f32.partialorder %v3030, %v340
        %vm3035 = vcmp.eq.f32.partialorder %v3030, %v341
        %vm3036 = vcmp.eq.f32.partialorder %v3030, %v342
        %vm3037 = vcmp.eq.f32.partialorder %v3030, %v343
        %vm3038 = vcmp.eq.f32.partialorder %v3030, %v344
        %vm3039 = vcmp.eq.f32.partialorder %v3030, %v345
        %vm3040 = vcmp.eq.f32.partialorder %v3030, %v346
        %vm3041 = vcmp.eq.f32.partialorder %v3030, %v347
        %vm3042 = vcmp.eq.f32.partialorder %v3030, %v348
        %vm3043 = vcmp.eq.f32.partialorder %v3030, %v349
        %vm3044 = vcmp.eq.f32.partialorder %v3030, %v350
        %vm3045 = vcmp.eq.f32.partialorder %v3030, %v351
        %vm3046 = vcmp.eq.f32.partialorder %v3030, %v352
        %vm3047 = vcmp.eq.f32.partialorder %v3030, %v353
        %vm3048 = vcmp.eq.f32.partialorder %v3030, %v354
        %vm3049 = vcmp.eq.f32.partialorder %v3030, %v355
        %vm3050 = vcmp.eq.f32.partialorder %v3030, %v356
        %vm3051 = vcmp.eq.f32.partialorder %v3030, %v357
        %vm3052 = vcmp.eq.f32.partialorder %v3030, %v358
        %vm3053 = vcmp.eq.f32.partialorder %v3030, %v359
        %vm3054 = vcmp.eq.f32.partialorder %v3030, %v360
        %vm3055 = vcmp.eq.f32.partialorder %v3030, %v361
        %vm3056 = vcmp.eq.f32.partialorder %v3030, %v362
        %vm3057 = vcmp.eq.f32.partialorder %v3030, %v363
        %vm3058 = vcmp.eq.f32.partialorder %v3030, %v364
        %vm3059 = vcmp.eq.f32.partialorder %v3030, %v365
        %vm3060 = vcmp.eq.f32.partialorder %v3030, %v366
        %vm3061 = vcmp.eq.f32.partialorder %v3030, %v367
        %vm3062 = vcmp.eq.f32.partialorder %v3030, %v368
        %v3063 = vsel %vm3031, 1, 0
        %v3064 = vsel %vm3032, 1, 0
        %v3065 = vsel %vm3033, 1, 0
        %v3066 = vsel %vm3034, 1, 0
        %v3067 = vsel %vm3035, 1, 0
        %v3068 = vsel %vm3036, 1, 0
        %v3069 = vsel %vm3037, 1, 0
        %v3070 = vsel %vm3038, 1, 0
        %v3071 = vsel %vm3039, 1, 0
        %v3072 = vsel %vm3040, 1, 0
        %v3073 = vsel %vm3041, 1, 0
        %v3074 = vsel %vm3042, 1, 0
        %v3075 = vsel %vm3043, 1, 0
        %v3076 = vsel %vm3044, 1, 0
        %v3077 = vsel %vm3045, 1, 0
        %v3078 = vsel %vm3046, 1, 0
        %v3079 = vsel %vm3047, 1, 0
        %v3080 = vsel %vm3048, 1, 0
        %v3081 = vsel %vm3049, 1, 0
        %v3082 = vsel %vm3050, 1, 0
        %v3083 = vsel %vm3051, 1, 0
        %v3084 = vsel %vm3052, 1, 0
        %v3085 = vsel %vm3053, 1, 0
        %v3086 = vsel %vm3054, 1, 0
        %v3087 = vsel %vm3055, 1, 0
        %v3088 = vsel %vm3056, 1, 0
        %v3089 = vsel %vm3057, 1, 0
        %v3090 = vsel %vm3058, 1, 0
        %v3091 = vsel %vm3059, 1, 0
        %v3092 = vsel %vm3060, 1, 0
        %v3093 = vsel %vm3061, 1, 0
        %v3094 = vsel %vm3062, 1, 0
        %v3095 = vcvt.s32.f32 %v3063
        %v3096 = vcvt.s32.f32 %v3064
        %v3097 = vcvt.s32.f32 %v3065
        %v3098 = vcvt.s32.f32 %v3066
        %v3099 = vcvt.s32.f32 %v3067
        %v3100 = vcvt.s32.f32 %v3068
        %v3101 = vcvt.s32.f32 %v3069
        %v3102 = vcvt.s32.f32 %v3070
        %v3103 = vcvt.s32.f32 %v3071
        %v3104 = vcvt.s32.f32 %v3072
        %v3105 = vcvt.s32.f32 %v3073
        %v3106 = vcvt.s32.f32 %v3074
        %v3107 = vcvt.s32.f32 %v3075
        %v3108 = vcvt.s32.f32 %v3076
        %v3109 = vcvt.s32.f32 %v3077
        %v3110 = vcvt.s32.f32 %v3078
        %v3111 = vcvt.s32.f32 %v3079
        %v3112 = vcvt.s32.f32 %v3080
        %v3113 = vcvt.s32.f32 %v3081
        %v3114 = vcvt.s32.f32 %v3082
        %v3115 = vcvt.s32.f32 %v3083
        %v3116 = vcvt.s32.f32 %v3084
        %v3117 = vcvt.s32.f32 %v3085
        %v3118 = vcvt.s32.f32 %v3086
        %v3119 = vcvt.s32.f32 %v3087
        %v3120 = vcvt.s32.f32 %v3088
        %v3121 = vcvt.s32.f32 %v3089
        %v3122 = vcvt.s32.f32 %v3090
        %v3123 = vcvt.s32.f32 %v3091
        %v3124 = vcvt.s32.f32 %v3092
        %v3125 = vcvt.s32.f32 %v3093
        %v3126 = vcvt.s32.f32 %v3094
        %v3127 = vadd.f32 %v2992, %v3095
        %v3128 = vadd.f32 %v2993, %v3096
        %v3129 = vadd.f32 %v2994, %v3097
        %v3130 = vadd.f32 %v2995, %v3098
        %v3131 = vadd.f32 %v2996, %v3099
        %v3132 = vadd.f32 %v2997, %v3100
        %v3133 = vadd.f32 %v2998, %v3101
        %v3134 = vadd.f32 %v2999, %v3102
        %v3135 = vadd.f32 %v3000, %v3103
        %v3136 = vadd.f32 %v3001, %v3104
        %v3137 = vadd.f32 %v3002, %v3105
        %v3138 = vadd.f32 %v3003, %v3106
        %v3139 = vadd.f32 %v3004, %v3107
        %v3140 = vadd.f32 %v3005, %v3108
        %v3141 = vadd.f32 %v3006, %v3109
        %v3142 = vadd.f32 %v3007, %v3110
        %v3143 = vadd.f32 %v3008, %v3111
        %v3144 = vadd.f32 %v3009, %v3112
        %v3145 = vadd.f32 %v3010, %v3113
        %v3146 = vadd.f32 %v3011, %v3114
        %v3147 = vadd.f32 %v3012, %v3115
        %v3148 = vadd.f32 %v3013, %v3116
        %v3149 = vadd.f32 %v3014, %v3117
        %v3150 = vadd.f32 %v3015, %v3118
        %v3151 = vadd.f32 %v3016, %v3119
        %v3152 = vadd.f32 %v3017, %v3120
        %v3153 = vadd.f32 %v3018, %v3121
        %v3154 = vadd.f32 %v3019, %v3122
        %v3155 = vadd.f32 %v3020, %v3123
        %v3156 = vadd.f32 %v3021, %v3124
        %v3157 = vadd.f32 %v3022, %v3125
        %v3158 = vadd.f32 %v3023, %v3126
        %v3159 = vlaneseq
        %v3160 = vshrl.u32 %v3159, 7
        %v3161 = vsub.s32 5, %v3160
        %v3162 = vrot.slane %v3026, %v3161
        %vm3163 = vcmp.eq.f32.partialorder %v3162, %v337
        %vm3164 = vcmp.eq.f32.partialorder %v3162, %v338
        %vm3165 = vcmp.eq.f32.partialorder %v3162, %v339
        %vm3166 = vcmp.eq.f32.partialorder %v3162, %v340
        %vm3167 = vcmp.eq.f32.partialorder %v3162, %v341
        %vm3168 = vcmp.eq.f32.partialorder %v3162, %v342
        %vm3169 = vcmp.eq.f32.partialorder %v3162, %v343
        %vm3170 = vcmp.eq.f32.partialorder %v3162, %v344
        %vm3171 = vcmp.eq.f32.partialorder %v3162, %v345
        %vm3172 = vcmp.eq.f32.partialorder %v3162, %v346
        %vm3173 = vcmp.eq.f32.partialorder %v3162, %v347
        %vm3174 = vcmp.eq.f32.partialorder %v3162, %v348
        %vm3175 = vcmp.eq.f32.partialorder %v3162, %v349
        %vm3176 = vcmp.eq.f32.partialorder %v3162, %v350
        %vm3177 = vcmp.eq.f32.partialorder %v3162, %v351
        %vm3178 = vcmp.eq.f32.partialorder %v3162, %v352
        %vm3179 = vcmp.eq.f32.partialorder %v3162, %v353
        %vm3180 = vcmp.eq.f32.partialorder %v3162, %v354
        %vm3181 = vcmp.eq.f32.partialorder %v3162, %v355
        %vm3182 = vcmp.eq.f32.partialorder %v3162, %v356
        %vm3183 = vcmp.eq.f32.partialorder %v3162, %v357
        %vm3184 = vcmp.eq.f32.partialorder %v3162, %v358
        %vm3185 = vcmp.eq.f32.partialorder %v3162, %v359
        %vm3186 = vcmp.eq.f32.partialorder %v3162, %v360
        %vm3187 = vcmp.eq.f32.partialorder %v3162, %v361
        %vm3188 = vcmp.eq.f32.partialorder %v3162, %v362
        %vm3189 = vcmp.eq.f32.partialorder %v3162, %v363
        %vm3190 = vcmp.eq.f32.partialorder %v3162, %v364
        %vm3191 = vcmp.eq.f32.partialorder %v3162, %v365
        %vm3192 = vcmp.eq.f32.partialorder %v3162, %v366
        %vm3193 = vcmp.eq.f32.partialorder %v3162, %v367
        %vm3194 = vcmp.eq.f32.partialorder %v3162, %v368
        %v3195 = vsel %vm3163, 1, 0
        %v3196 = vsel %vm3164, 1, 0
        %v3197 = vsel %vm3165, 1, 0
        %v3198 = vsel %vm3166, 1, 0
        %v3199 = vsel %vm3167, 1, 0
        %v3200 = vsel %vm3168, 1, 0
        %v3201 = vsel %vm3169, 1, 0
        %v3202 = vsel %vm3170, 1, 0
        %v3203 = vsel %vm3171, 1, 0
        %v3204 = vsel %vm3172, 1, 0
        %v3205 = vsel %vm3173, 1, 0
        %v3206 = vsel %vm3174, 1, 0
        %v3207 = vsel %vm3175, 1, 0
        %v3208 = vsel %vm3176, 1, 0
        %v3209 = vsel %vm3177, 1, 0
        %v3210 = vsel %vm3178, 1, 0
        %v3211 = vsel %vm3179, 1, 0
        %v3212 = vsel %vm3180, 1, 0
        %v3213 = vsel %vm3181, 1, 0
        %v3214 = vsel %vm3182, 1, 0
        %v3215 = vsel %vm3183, 1, 0
        %v3216 = vsel %vm3184, 1, 0
        %v3217 = vsel %vm3185, 1, 0
        %v3218 = vsel %vm3186, 1, 0
        %v3219 = vsel %vm3187, 1, 0
        %v3220 = vsel %vm3188, 1, 0
        %v3221 = vsel %vm3189, 1, 0
        %v3222 = vsel %vm3190, 1, 0
        %v3223 = vsel %vm3191, 1, 0
        %v3224 = vsel %vm3192, 1, 0
        %v3225 = vsel %vm3193, 1, 0
        %v3226 = vsel %vm3194, 1, 0
        %v3227 = vcvt.s32.f32 %v3195
        %v3228 = vcvt.s32.f32 %v3196
        %v3229 = vcvt.s32.f32 %v3197
        %v3230 = vcvt.s32.f32 %v3198
        %v3231 = vcvt.s32.f32 %v3199
        %v3232 = vcvt.s32.f32 %v3200
        %v3233 = vcvt.s32.f32 %v3201
        %v3234 = vcvt.s32.f32 %v3202
        %v3235 = vcvt.s32.f32 %v3203
        %v3236 = vcvt.s32.f32 %v3204
        %v3237 = vcvt.s32.f32 %v3205
        %v3238 = vcvt.s32.f32 %v3206
        %v3239 = vcvt.s32.f32 %v3207
        %v3240 = vcvt.s32.f32 %v3208
        %v3241 = vcvt.s32.f32 %v3209
        %v3242 = vcvt.s32.f32 %v3210
        %v3243 = vcvt.s32.f32 %v3211
        %v3244 = vcvt.s32.f32 %v3212
        %v3245 = vcvt.s32.f32 %v3213
        %v3246 = vcvt.s32.f32 %v3214
        %v3247 = vcvt.s32.f32 %v3215
        %v3248 = vcvt.s32.f32 %v3216
        %v3249 = vcvt.s32.f32 %v3217
        %v3250 = vcvt.s32.f32 %v3218
        %v3251 = vcvt.s32.f32 %v3219
        %v3252 = vcvt.s32.f32 %v3220
        %v3253 = vcvt.s32.f32 %v3221
        %v3254 = vcvt.s32.f32 %v3222
        %v3255 = vcvt.s32.f32 %v3223
        %v3256 = vcvt.s32.f32 %v3224
        %v3257 = vcvt.s32.f32 %v3225
        %v3258 = vcvt.s32.f32 %v3226
        %v3259 = vadd.f32 %v3127, %v3227
        %v3260 = vadd.f32 %v3128, %v3228
        %v3261 = vadd.f32 %v3129, %v3229
        %v3262 = vadd.f32 %v3130, %v3230
        %v3263 = vadd.f32 %v3131, %v3231
        %v3264 = vadd.f32 %v3132, %v3232
        %v3265 = vadd.f32 %v3133, %v3233
        %v3266 = vadd.f32 %v3134, %v3234
        %v3267 = vadd.f32 %v3135, %v3235
        %v3268 = vadd.f32 %v3136, %v3236
        %v3269 = vadd.f32 %v3137, %v3237
        %v3270 = vadd.f32 %v3138, %v3238
        %v3271 = vadd.f32 %v3139, %v3239
        %v3272 = vadd.f32 %v3140, %v3240
        %v3273 = vadd.f32 %v3141, %v3241
        %v3274 = vadd.f32 %v3142, %v3242
        %v3275 = vadd.f32 %v3143, %v3243
        %v3276 = vadd.f32 %v3144, %v3244
        %v3277 = vadd.f32 %v3145, %v3245
        %v3278 = vadd.f32 %v3146, %v3246
        %v3279 = vadd.f32 %v3147, %v3247
        %v3280 = vadd.f32 %v3148, %v3248
        %v3281 = vadd.f32 %v3149, %v3249
        %v3282 = vadd.f32 %v3150, %v3250
        %v3283 = vadd.f32 %v3151, %v3251
        %v3284 = vadd.f32 %v3152, %v3252
        %v3285 = vadd.f32 %v3153, %v3253
        %v3286 = vadd.f32 %v3154, %v3254
        %v3287 = vadd.f32 %v3155, %v3255
        %v3288 = vadd.f32 %v3156, %v3256
        %v3289 = vadd.f32 %v3157, %v3257
        %v3290 = vadd.f32 %v3158, %v3258
        %v3291 = vlaneseq
        %v3292 = vshrl.u32 %v3291, 7
        %v3293 = vsub.s32 6, %v3292
        %v3294 = vrot.slane %v3026, %v3293
        %vm3295 = vcmp.eq.f32.partialorder %v3294, %v337
        %vm3296 = vcmp.eq.f32.partialorder %v3294, %v338
        %vm3297 = vcmp.eq.f32.partialorder %v3294, %v339
        %vm3298 = vcmp.eq.f32.partialorder %v3294, %v340
        %vm3299 = vcmp.eq.f32.partialorder %v3294, %v341
        %vm3300 = vcmp.eq.f32.partialorder %v3294, %v342
        %vm3301 = vcmp.eq.f32.partialorder %v3294, %v343
        %vm3302 = vcmp.eq.f32.partialorder %v3294, %v344
        %vm3303 = vcmp.eq.f32.partialorder %v3294, %v345
        %vm3304 = vcmp.eq.f32.partialorder %v3294, %v346
        %vm3305 = vcmp.eq.f32.partialorder %v3294, %v347
        %vm3306 = vcmp.eq.f32.partialorder %v3294, %v348
        %vm3307 = vcmp.eq.f32.partialorder %v3294, %v349
        %vm3308 = vcmp.eq.f32.partialorder %v3294, %v350
        %vm3309 = vcmp.eq.f32.partialorder %v3294, %v351
        %vm3310 = vcmp.eq.f32.partialorder %v3294, %v352
        %vm3311 = vcmp.eq.f32.partialorder %v3294, %v353
        %vm3312 = vcmp.eq.f32.partialorder %v3294, %v354
        %vm3313 = vcmp.eq.f32.partialorder %v3294, %v355
        %vm3314 = vcmp.eq.f32.partialorder %v3294, %v356
        %vm3315 = vcmp.eq.f32.partialorder %v3294, %v357
        %vm3316 = vcmp.eq.f32.partialorder %v3294, %v358
        %vm3317 = vcmp.eq.f32.partialorder %v3294, %v359
        %vm3318 = vcmp.eq.f32.partialorder %v3294, %v360
        %vm3319 = vcmp.eq.f32.partialorder %v3294, %v361
        %vm3320 = vcmp.eq.f32.partialorder %v3294, %v362
        %vm3321 = vcmp.eq.f32.partialorder %v3294, %v363
        %vm3322 = vcmp.eq.f32.partialorder %v3294, %v364
        %vm3323 = vcmp.eq.f32.partialorder %v3294, %v365
        %vm3324 = vcmp.eq.f32.partialorder %v3294, %v366
        %vm3325 = vcmp.eq.f32.partialorder %v3294, %v367
        %vm3326 = vcmp.eq.f32.partialorder %v3294, %v368
        %v3327 = vsel %vm3295, 1, 0
        %v3328 = vsel %vm3296, 1, 0
        %v3329 = vsel %vm3297, 1, 0
        %v3330 = vsel %vm3298, 1, 0
        %v3331 = vsel %vm3299, 1, 0
        %v3332 = vsel %vm3300, 1, 0
        %v3333 = vsel %vm3301, 1, 0
        %v3334 = vsel %vm3302, 1, 0
        %v3335 = vsel %vm3303, 1, 0
        %v3336 = vsel %vm3304, 1, 0
        %v3337 = vsel %vm3305, 1, 0
        %v3338 = vsel %vm3306, 1, 0
        %v3339 = vsel %vm3307, 1, 0
        %v3340 = vsel %vm3308, 1, 0
        %v3341 = vsel %vm3309, 1, 0
        %v3342 = vsel %vm3310, 1, 0
        %v3343 = vsel %vm3311, 1, 0
        %v3344 = vsel %vm3312, 1, 0
        %v3345 = vsel %vm3313, 1, 0
        %v3346 = vsel %vm3314, 1, 0
        %v3347 = vsel %vm3315, 1, 0
        %v3348 = vsel %vm3316, 1, 0
        %v3349 = vsel %vm3317, 1, 0
        %v3350 = vsel %vm3318, 1, 0
        %v3351 = vsel %vm3319, 1, 0
        %v3352 = vsel %vm3320, 1, 0
        %v3353 = vsel %vm3321, 1, 0
        %v3354 = vsel %vm3322, 1, 0
        %v3355 = vsel %vm3323, 1, 0
        %v3356 = vsel %vm3324, 1, 0
        %v3357 = vsel %vm3325, 1, 0
        %v3358 = vsel %vm3326, 1, 0
        %v3359 = vcvt.s32.f32 %v3327
        %v3360 = vcvt.s32.f32 %v3328
        %v3361 = vcvt.s32.f32 %v3329
        %v3362 = vcvt.s32.f32 %v3330
        %v3363 = vcvt.s32.f32 %v3331
        %v3364 = vcvt.s32.f32 %v3332
        %v3365 = vcvt.s32.f32 %v3333
        %v3366 = vcvt.s32.f32 %v3334
        %v3367 = vcvt.s32.f32 %v3335
        %v3368 = vcvt.s32.f32 %v3336
        %v3369 = vcvt.s32.f32 %v3337
        %v3370 = vcvt.s32.f32 %v3338
        %v3371 = vcvt.s32.f32 %v3339
        %v3372 = vcvt.s32.f32 %v3340
        %v3373 = vcvt.s32.f32 %v3341
        %v3374 = vcvt.s32.f32 %v3342
        %v3375 = vcvt.s32.f32 %v3343
        %v3376 = vcvt.s32.f32 %v3344
        %v3377 = vcvt.s32.f32 %v3345
        %v3378 = vcvt.s32.f32 %v3346
        %v3379 = vcvt.s32.f32 %v3347
        %v3380 = vcvt.s32.f32 %v3348
        %v3381 = vcvt.s32.f32 %v3349
        %v3382 = vcvt.s32.f32 %v3350
        %v3383 = vcvt.s32.f32 %v3351
        %v3384 = vcvt.s32.f32 %v3352
        %v3385 = vcvt.s32.f32 %v3353
        %v3386 = vcvt.s32.f32 %v3354
        %v3387 = vcvt.s32.f32 %v3355
        %v3388 = vcvt.s32.f32 %v3356
        %v3389 = vcvt.s32.f32 %v3357
        %v3390 = vcvt.s32.f32 %v3358
        %v3391 = vadd.f32 %v3259, %v3359
        %v3392 = vadd.f32 %v3260, %v3360
        %v3393 = vadd.f32 %v3261, %v3361
        %v3394 = vadd.f32 %v3262, %v3362
        %v3395 = vadd.f32 %v3263, %v3363
        %v3396 = vadd.f32 %v3264, %v3364
        %v3397 = vadd.f32 %v3265, %v3365
        %v3398 = vadd.f32 %v3266, %v3366
        %v3399 = vadd.f32 %v3267, %v3367
        %v3400 = vadd.f32 %v3268, %v3368
        %v3401 = vadd.f32 %v3269, %v3369
        %v3402 = vadd.f32 %v3270, %v3370
        %v3403 = vadd.f32 %v3271, %v3371
        %v3404 = vadd.f32 %v3272, %v3372
        %v3405 = vadd.f32 %v3273, %v3373
        %v3406 = vadd.f32 %v3274, %v3374
        %v3407 = vadd.f32 %v3275, %v3375
        %v3408 = vadd.f32 %v3276, %v3376
        %v3409 = vadd.f32 %v3277, %v3377
        %v3410 = vadd.f32 %v3278, %v3378
        %v3411 = vadd.f32 %v3279, %v3379
        %v3412 = vadd.f32 %v3280, %v3380
        %v3413 = vadd.f32 %v3281, %v3381
        %v3414 = vadd.f32 %v3282, %v3382
        %v3415 = vadd.f32 %v3283, %v3383
        %v3416 = vadd.f32 %v3284, %v3384
        %v3417 = vadd.f32 %v3285, %v3385
        %v3418 = vadd.f32 %v3286, %v3386
        %v3419 = vadd.f32 %v3287, %v3387
        %v3420 = vadd.f32 %v3288, %v3388
        %v3421 = vadd.f32 %v3289, %v3389
        %v3422 = vadd.f32 %v3290, %v3390
        %v3423 = vlaneseq
        %v3424 = vshrl.u32 %v3423, 7
        %v3425 = vsub.s32 7, %v3424
        %v3426 = vrot.slane %v3026, %v3425
        %vm3427 = vcmp.eq.f32.partialorder %v3426, %v337
        %vm3428 = vcmp.eq.f32.partialorder %v3426, %v338
        %vm3429 = vcmp.eq.f32.partialorder %v3426, %v339
        %vm3430 = vcmp.eq.f32.partialorder %v3426, %v340
        %vm3431 = vcmp.eq.f32.partialorder %v3426, %v341
        %vm3432 = vcmp.eq.f32.partialorder %v3426, %v342
        %vm3433 = vcmp.eq.f32.partialorder %v3426, %v343
        %vm3434 = vcmp.eq.f32.partialorder %v3426, %v344
        %vm3435 = vcmp.eq.f32.partialorder %v3426, %v345
        %vm3436 = vcmp.eq.f32.partialorder %v3426, %v346
        %vm3437 = vcmp.eq.f32.partialorder %v3426, %v347
        %vm3438 = vcmp.eq.f32.partialorder %v3426, %v348
        %vm3439 = vcmp.eq.f32.partialorder %v3426, %v349
        %vm3440 = vcmp.eq.f32.partialorder %v3426, %v350
        %vm3441 = vcmp.eq.f32.partialorder %v3426, %v351
        %vm3442 = vcmp.eq.f32.partialorder %v3426, %v352
        %vm3443 = vcmp.eq.f32.partialorder %v3426, %v353
        %vm3444 = vcmp.eq.f32.partialorder %v3426, %v354
        %vm3445 = vcmp.eq.f32.partialorder %v3426, %v355
        %vm3446 = vcmp.eq.f32.partialorder %v3426, %v356
        %vm3447 = vcmp.eq.f32.partialorder %v3426, %v357
        %vm3448 = vcmp.eq.f32.partialorder %v3426, %v358
        %vm3449 = vcmp.eq.f32.partialorder %v3426, %v359
        %vm3450 = vcmp.eq.f32.partialorder %v3426, %v360
        %vm3451 = vcmp.eq.f32.partialorder %v3426, %v361
        %vm3452 = vcmp.eq.f32.partialorder %v3426, %v362
        %vm3453 = vcmp.eq.f32.partialorder %v3426, %v363
        %vm3454 = vcmp.eq.f32.partialorder %v3426, %v364
        %vm3455 = vcmp.eq.f32.partialorder %v3426, %v365
        %vm3456 = vcmp.eq.f32.partialorder %v3426, %v366
        %vm3457 = vcmp.eq.f32.partialorder %v3426, %v367
        %vm3458 = vcmp.eq.f32.partialorder %v3426, %v368
        %v3459 = vsel %vm3427, 1, 0
        %v3460 = vsel %vm3428, 1, 0
        %v3461 = vsel %vm3429, 1, 0
        %v3462 = vsel %vm3430, 1, 0
        %v3463 = vsel %vm3431, 1, 0
        %v3464 = vsel %vm3432, 1, 0
        %v3465 = vsel %vm3433, 1, 0
        %v3466 = vsel %vm3434, 1, 0
        %v3467 = vsel %vm3435, 1, 0
        %v3468 = vsel %vm3436, 1, 0
        %v3469 = vsel %vm3437, 1, 0
        %v3470 = vsel %vm3438, 1, 0
        %v3471 = vsel %vm3439, 1, 0
        %v3472 = vsel %vm3440, 1, 0
        %v3473 = vsel %vm3441, 1, 0
        %v3474 = vsel %vm3442, 1, 0
        %v3475 = vsel %vm3443, 1, 0
        %v3476 = vsel %vm3444, 1, 0
        %v3477 = vsel %vm3445, 1, 0
        %v3478 = vsel %vm3446, 1, 0
        %v3479 = vsel %vm3447, 1, 0
        %v3480 = vsel %vm3448, 1, 0
        %v3481 = vsel %vm3449, 1, 0
        %v3482 = vsel %vm3450, 1, 0
        %v3483 = vsel %vm3451, 1, 0
        %v3484 = vsel %vm3452, 1, 0
        %v3485 = vsel %vm3453, 1, 0
        %v3486 = vsel %vm3454, 1, 0
        %v3487 = vsel %vm3455, 1, 0
        %v3488 = vsel %vm3456, 1, 0
        %v3489 = vsel %vm3457, 1, 0
        %v3490 = vsel %vm3458, 1, 0
        %v3491 = vcvt.s32.f32 %v3459
        %v3492 = vcvt.s32.f32 %v3460
        %v3493 = vcvt.s32.f32 %v3461
        %v3494 = vcvt.s32.f32 %v3462
        %v3495 = vcvt.s32.f32 %v3463
        %v3496 = vcvt.s32.f32 %v3464
        %v3497 = vcvt.s32.f32 %v3465
        %v3498 = vcvt.s32.f32 %v3466
        %v3499 = vcvt.s32.f32 %v3467
        %v3500 = vcvt.s32.f32 %v3468
        %v3501 = vcvt.s32.f32 %v3469
        %v3502 = vcvt.s32.f32 %v3470
        %v3503 = vcvt.s32.f32 %v3471
        %v3504 = vcvt.s32.f32 %v3472
        %v3505 = vcvt.s32.f32 %v3473
        %v3506 = vcvt.s32.f32 %v3474
        %v3507 = vcvt.s32.f32 %v3475
        %v3508 = vcvt.s32.f32 %v3476
        %v3509 = vcvt.s32.f32 %v3477
        %v3510 = vcvt.s32.f32 %v3478
        %v3511 = vcvt.s32.f32 %v3479
        %v3512 = vcvt.s32.f32 %v3480
        %v3513 = vcvt.s32.f32 %v3481
        %v3514 = vcvt.s32.f32 %v3482
        %v3515 = vcvt.s32.f32 %v3483
        %v3516 = vcvt.s32.f32 %v3484
        %v3517 = vcvt.s32.f32 %v3485
        %v3518 = vcvt.s32.f32 %v3486
        %v3519 = vcvt.s32.f32 %v3487
        %v3520 = vcvt.s32.f32 %v3488
        %v3521 = vcvt.s32.f32 %v3489
        %v3522 = vcvt.s32.f32 %v3490
        %v3523 = vadd.f32 %v3391, %v3491
        %v3524 = vadd.f32 %v3392, %v3492
        %v3525 = vadd.f32 %v3393, %v3493
        %v3526 = vadd.f32 %v3394, %v3494
        %v3527 = vadd.f32 %v3395, %v3495
        %v3528 = vadd.f32 %v3396, %v3496
        %v3529 = vadd.f32 %v3397, %v3497
        %v3530 = vadd.f32 %v3398, %v3498
        %v3531 = vadd.f32 %v3399, %v3499
        %v3532 = vadd.f32 %v3400, %v3500
        %v3533 = vadd.f32 %v3401, %v3501
        %v3534 = vadd.f32 %v3402, %v3502
        %v3535 = vadd.f32 %v3403, %v3503
        %v3536 = vadd.f32 %v3404, %v3504
        %v3537 = vadd.f32 %v3405, %v3505
        %v3538 = vadd.f32 %v3406, %v3506
        %v3539 = vadd.f32 %v3407, %v3507
        %v3540 = vadd.f32 %v3408, %v3508
        %v3541 = vadd.f32 %v3409, %v3509
        %v3542 = vadd.f32 %v3410, %v3510
        %v3543 = vadd.f32 %v3411, %v3511
        %v3544 = vadd.f32 %v3412, %v3512
        %v3545 = vadd.f32 %v3413, %v3513
        %v3546 = vadd.f32 %v3414, %v3514
        %v3547 = vadd.f32 %v3415, %v3515
        %v3548 = vadd.f32 %v3416, %v3516
        %v3549 = vadd.f32 %v3417, %v3517
        %v3550 = vadd.f32 %v3418, %v3518
        %v3551 = vadd.f32 %v3419, %v3519
        %v3552 = vadd.f32 %v3420, %v3520
        %v3553 = vadd.f32 %v3421, %v3521
        %v3554 = vadd.f32 %v3422, %v3522
        %v3555 = vld [vmem:[%s250 + $0x6] sm:$0x1]
        %v3556 = vunpack.c.0.s8 %v3555
        %v3557 = vcvt.s32.f32 %v3556
        %v3558 = vlaneseq
        %v3559 = vshrl.u32 %v3558, 7
        %v3560 = vsub.s32 0, %v3559
        %v3561 = vrot.slane %v3557, %v3560
        %vm3562 = vcmp.eq.f32.partialorder %v3561, %v337
        %vm3563 = vcmp.eq.f32.partialorder %v3561, %v338
        %vm3564 = vcmp.eq.f32.partialorder %v3561, %v339
        %vm3565 = vcmp.eq.f32.partialorder %v3561, %v340
        %vm3566 = vcmp.eq.f32.partialorder %v3561, %v341
        %vm3567 = vcmp.eq.f32.partialorder %v3561, %v342
        %vm3568 = vcmp.eq.f32.partialorder %v3561, %v343
        %vm3569 = vcmp.eq.f32.partialorder %v3561, %v344
        %vm3570 = vcmp.eq.f32.partialorder %v3561, %v345
        %vm3571 = vcmp.eq.f32.partialorder %v3561, %v346
        %vm3572 = vcmp.eq.f32.partialorder %v3561, %v347
        %vm3573 = vcmp.eq.f32.partialorder %v3561, %v348
        %vm3574 = vcmp.eq.f32.partialorder %v3561, %v349
        %vm3575 = vcmp.eq.f32.partialorder %v3561, %v350
        %vm3576 = vcmp.eq.f32.partialorder %v3561, %v351
        %vm3577 = vcmp.eq.f32.partialorder %v3561, %v352
        %vm3578 = vcmp.eq.f32.partialorder %v3561, %v353
        %vm3579 = vcmp.eq.f32.partialorder %v3561, %v354
        %vm3580 = vcmp.eq.f32.partialorder %v3561, %v355
        %vm3581 = vcmp.eq.f32.partialorder %v3561, %v356
        %vm3582 = vcmp.eq.f32.partialorder %v3561, %v357
        %vm3583 = vcmp.eq.f32.partialorder %v3561, %v358
        %vm3584 = vcmp.eq.f32.partialorder %v3561, %v359
        %vm3585 = vcmp.eq.f32.partialorder %v3561, %v360
        %vm3586 = vcmp.eq.f32.partialorder %v3561, %v361
        %vm3587 = vcmp.eq.f32.partialorder %v3561, %v362
        %vm3588 = vcmp.eq.f32.partialorder %v3561, %v363
        %vm3589 = vcmp.eq.f32.partialorder %v3561, %v364
        %vm3590 = vcmp.eq.f32.partialorder %v3561, %v365
        %vm3591 = vcmp.eq.f32.partialorder %v3561, %v366
        %vm3592 = vcmp.eq.f32.partialorder %v3561, %v367
        %vm3593 = vcmp.eq.f32.partialorder %v3561, %v368
        %v3594 = vsel %vm3562, 1, 0
        %v3595 = vsel %vm3563, 1, 0
        %v3596 = vsel %vm3564, 1, 0
        %v3597 = vsel %vm3565, 1, 0
        %v3598 = vsel %vm3566, 1, 0
        %v3599 = vsel %vm3567, 1, 0
        %v3600 = vsel %vm3568, 1, 0
        %v3601 = vsel %vm3569, 1, 0
        %v3602 = vsel %vm3570, 1, 0
        %v3603 = vsel %vm3571, 1, 0
        %v3604 = vsel %vm3572, 1, 0
        %v3605 = vsel %vm3573, 1, 0
        %v3606 = vsel %vm3574, 1, 0
        %v3607 = vsel %vm3575, 1, 0
        %v3608 = vsel %vm3576, 1, 0
        %v3609 = vsel %vm3577, 1, 0
        %v3610 = vsel %vm3578, 1, 0
        %v3611 = vsel %vm3579, 1, 0
        %v3612 = vsel %vm3580, 1, 0
        %v3613 = vsel %vm3581, 1, 0
        %v3614 = vsel %vm3582, 1, 0
        %v3615 = vsel %vm3583, 1, 0
        %v3616 = vsel %vm3584, 1, 0
        %v3617 = vsel %vm3585, 1, 0
        %v3618 = vsel %vm3586, 1, 0
        %v3619 = vsel %vm3587, 1, 0
        %v3620 = vsel %vm3588, 1, 0
        %v3621 = vsel %vm3589, 1, 0
        %v3622 = vsel %vm3590, 1, 0
        %v3623 = vsel %vm3591, 1, 0
        %v3624 = vsel %vm3592, 1, 0
        %v3625 = vsel %vm3593, 1, 0
        %v3626 = vcvt.s32.f32 %v3594
        %v3627 = vcvt.s32.f32 %v3595
        %v3628 = vcvt.s32.f32 %v3596
        %v3629 = vcvt.s32.f32 %v3597
        %v3630 = vcvt.s32.f32 %v3598
        %v3631 = vcvt.s32.f32 %v3599
        %v3632 = vcvt.s32.f32 %v3600
        %v3633 = vcvt.s32.f32 %v3601
        %v3634 = vcvt.s32.f32 %v3602
        %v3635 = vcvt.s32.f32 %v3603
        %v3636 = vcvt.s32.f32 %v3604
        %v3637 = vcvt.s32.f32 %v3605
        %v3638 = vcvt.s32.f32 %v3606
        %v3639 = vcvt.s32.f32 %v3607
        %v3640 = vcvt.s32.f32 %v3608
        %v3641 = vcvt.s32.f32 %v3609
        %v3642 = vcvt.s32.f32 %v3610
        %v3643 = vcvt.s32.f32 %v3611
        %v3644 = vcvt.s32.f32 %v3612
        %v3645 = vcvt.s32.f32 %v3613
        %v3646 = vcvt.s32.f32 %v3614
        %v3647 = vcvt.s32.f32 %v3615
        %v3648 = vcvt.s32.f32 %v3616
        %v3649 = vcvt.s32.f32 %v3617
        %v3650 = vcvt.s32.f32 %v3618
        %v3651 = vcvt.s32.f32 %v3619
        %v3652 = vcvt.s32.f32 %v3620
        %v3653 = vcvt.s32.f32 %v3621
        %v3654 = vcvt.s32.f32 %v3622
        %v3655 = vcvt.s32.f32 %v3623
        %v3656 = vcvt.s32.f32 %v3624
        %v3657 = vcvt.s32.f32 %v3625
        %v3658 = vadd.f32 %v3523, %v3626
        %v3659 = vadd.f32 %v3524, %v3627
        %v3660 = vadd.f32 %v3525, %v3628
        %v3661 = vadd.f32 %v3526, %v3629
        %v3662 = vadd.f32 %v3527, %v3630
        %v3663 = vadd.f32 %v3528, %v3631
        %v3664 = vadd.f32 %v3529, %v3632
        %v3665 = vadd.f32 %v3530, %v3633
        %v3666 = vadd.f32 %v3531, %v3634
        %v3667 = vadd.f32 %v3532, %v3635
        %v3668 = vadd.f32 %v3533, %v3636
        %v3669 = vadd.f32 %v3534, %v3637
        %v3670 = vadd.f32 %v3535, %v3638
        %v3671 = vadd.f32 %v3536, %v3639
        %v3672 = vadd.f32 %v3537, %v3640
        %v3673 = vadd.f32 %v3538, %v3641
        %v3674 = vadd.f32 %v3539, %v3642
        %v3675 = vadd.f32 %v3540, %v3643
        %v3676 = vadd.f32 %v3541, %v3644
        %v3677 = vadd.f32 %v3542, %v3645
        %v3678 = vadd.f32 %v3543, %v3646
        %v3679 = vadd.f32 %v3544, %v3647
        %v3680 = vadd.f32 %v3545, %v3648
        %v3681 = vadd.f32 %v3546, %v3649
        %v3682 = vadd.f32 %v3547, %v3650
        %v3683 = vadd.f32 %v3548, %v3651
        %v3684 = vadd.f32 %v3549, %v3652
        %v3685 = vadd.f32 %v3550, %v3653
        %v3686 = vadd.f32 %v3551, %v3654
        %v3687 = vadd.f32 %v3552, %v3655
        %v3688 = vadd.f32 %v3553, %v3656
        %v3689 = vadd.f32 %v3554, %v3657
        %v3690 = vlaneseq
        %v3691 = vshrl.u32 %v3690, 7
        %v3692 = vsub.s32 1, %v3691
        %v3693 = vrot.slane %v3557, %v3692
        %vm3694 = vcmp.eq.f32.partialorder %v3693, %v337
        %vm3695 = vcmp.eq.f32.partialorder %v3693, %v338
        %vm3696 = vcmp.eq.f32.partialorder %v3693, %v339
        %vm3697 = vcmp.eq.f32.partialorder %v3693, %v340
        %vm3698 = vcmp.eq.f32.partialorder %v3693, %v341
        %vm3699 = vcmp.eq.f32.partialorder %v3693, %v342
        %vm3700 = vcmp.eq.f32.partialorder %v3693, %v343
        %vm3701 = vcmp.eq.f32.partialorder %v3693, %v344
        %vm3702 = vcmp.eq.f32.partialorder %v3693, %v345
        %vm3703 = vcmp.eq.f32.partialorder %v3693, %v346
        %vm3704 = vcmp.eq.f32.partialorder %v3693, %v347
        %vm3705 = vcmp.eq.f32.partialorder %v3693, %v348
        %vm3706 = vcmp.eq.f32.partialorder %v3693, %v349
        %vm3707 = vcmp.eq.f32.partialorder %v3693, %v350
        %vm3708 = vcmp.eq.f32.partialorder %v3693, %v351
        %vm3709 = vcmp.eq.f32.partialorder %v3693, %v352
        %vm3710 = vcmp.eq.f32.partialorder %v3693, %v353
        %vm3711 = vcmp.eq.f32.partialorder %v3693, %v354
        %vm3712 = vcmp.eq.f32.partialorder %v3693, %v355
        %vm3713 = vcmp.eq.f32.partialorder %v3693, %v356
        %vm3714 = vcmp.eq.f32.partialorder %v3693, %v357
        %vm3715 = vcmp.eq.f32.partialorder %v3693, %v358
        %vm3716 = vcmp.eq.f32.partialorder %v3693, %v359
        %vm3717 = vcmp.eq.f32.partialorder %v3693, %v360
        %vm3718 = vcmp.eq.f32.partialorder %v3693, %v361
        %vm3719 = vcmp.eq.f32.partialorder %v3693, %v362
        %vm3720 = vcmp.eq.f32.partialorder %v3693, %v363
        %vm3721 = vcmp.eq.f32.partialorder %v3693, %v364
        %vm3722 = vcmp.eq.f32.partialorder %v3693, %v365
        %vm3723 = vcmp.eq.f32.partialorder %v3693, %v366
        %vm3724 = vcmp.eq.f32.partialorder %v3693, %v367
        %vm3725 = vcmp.eq.f32.partialorder %v3693, %v368
        %v3726 = vsel %vm3694, 1, 0
        %v3727 = vsel %vm3695, 1, 0
        %v3728 = vsel %vm3696, 1, 0
        %v3729 = vsel %vm3697, 1, 0
        %v3730 = vsel %vm3698, 1, 0
        %v3731 = vsel %vm3699, 1, 0
        %v3732 = vsel %vm3700, 1, 0
        %v3733 = vsel %vm3701, 1, 0
        %v3734 = vsel %vm3702, 1, 0
        %v3735 = vsel %vm3703, 1, 0
        %v3736 = vsel %vm3704, 1, 0
        %v3737 = vsel %vm3705, 1, 0
        %v3738 = vsel %vm3706, 1, 0
        %v3739 = vsel %vm3707, 1, 0
        %v3740 = vsel %vm3708, 1, 0
        %v3741 = vsel %vm3709, 1, 0
        %v3742 = vsel %vm3710, 1, 0
        %v3743 = vsel %vm3711, 1, 0
        %v3744 = vsel %vm3712, 1, 0
        %v3745 = vsel %vm3713, 1, 0
        %v3746 = vsel %vm3714, 1, 0
        %v3747 = vsel %vm3715, 1, 0
        %v3748 = vsel %vm3716, 1, 0
        %v3749 = vsel %vm3717, 1, 0
        %v3750 = vsel %vm3718, 1, 0
        %v3751 = vsel %vm3719, 1, 0
        %v3752 = vsel %vm3720, 1, 0
        %v3753 = vsel %vm3721, 1, 0
        %v3754 = vsel %vm3722, 1, 0
        %v3755 = vsel %vm3723, 1, 0
        %v3756 = vsel %vm3724, 1, 0
        %v3757 = vsel %vm3725, 1, 0
        %v3758 = vcvt.s32.f32 %v3726
        %v3759 = vcvt.s32.f32 %v3727
        %v3760 = vcvt.s32.f32 %v3728
        %v3761 = vcvt.s32.f32 %v3729
        %v3762 = vcvt.s32.f32 %v3730
        %v3763 = vcvt.s32.f32 %v3731
        %v3764 = vcvt.s32.f32 %v3732
        %v3765 = vcvt.s32.f32 %v3733
        %v3766 = vcvt.s32.f32 %v3734
        %v3767 = vcvt.s32.f32 %v3735
        %v3768 = vcvt.s32.f32 %v3736
        %v3769 = vcvt.s32.f32 %v3737
        %v3770 = vcvt.s32.f32 %v3738
        %v3771 = vcvt.s32.f32 %v3739
        %v3772 = vcvt.s32.f32 %v3740
        %v3773 = vcvt.s32.f32 %v3741
        %v3774 = vcvt.s32.f32 %v3742
        %v3775 = vcvt.s32.f32 %v3743
        %v3776 = vcvt.s32.f32 %v3744
        %v3777 = vcvt.s32.f32 %v3745
        %v3778 = vcvt.s32.f32 %v3746
        %v3779 = vcvt.s32.f32 %v3747
        %v3780 = vcvt.s32.f32 %v3748
        %v3781 = vcvt.s32.f32 %v3749
        %v3782 = vcvt.s32.f32 %v3750
        %v3783 = vcvt.s32.f32 %v3751
        %v3784 = vcvt.s32.f32 %v3752
        %v3785 = vcvt.s32.f32 %v3753
        %v3786 = vcvt.s32.f32 %v3754
        %v3787 = vcvt.s32.f32 %v3755
        %v3788 = vcvt.s32.f32 %v3756
        %v3789 = vcvt.s32.f32 %v3757
        %v3790 = vadd.f32 %v3658, %v3758
        %v3791 = vadd.f32 %v3659, %v3759
        %v3792 = vadd.f32 %v3660, %v3760
        %v3793 = vadd.f32 %v3661, %v3761
        %v3794 = vadd.f32 %v3662, %v3762
        %v3795 = vadd.f32 %v3663, %v3763
        %v3796 = vadd.f32 %v3664, %v3764
        %v3797 = vadd.f32 %v3665, %v3765
        %v3798 = vadd.f32 %v3666, %v3766
        %v3799 = vadd.f32 %v3667, %v3767
        %v3800 = vadd.f32 %v3668, %v3768
        %v3801 = vadd.f32 %v3669, %v3769
        %v3802 = vadd.f32 %v3670, %v3770
        %v3803 = vadd.f32 %v3671, %v3771
        %v3804 = vadd.f32 %v3672, %v3772
        %v3805 = vadd.f32 %v3673, %v3773
        %v3806 = vadd.f32 %v3674, %v3774
        %v3807 = vadd.f32 %v3675, %v3775
        %v3808 = vadd.f32 %v3676, %v3776
        %v3809 = vadd.f32 %v3677, %v3777
        %v3810 = vadd.f32 %v3678, %v3778
        %v3811 = vadd.f32 %v3679, %v3779
        %v3812 = vadd.f32 %v3680, %v3780
        %v3813 = vadd.f32 %v3681, %v3781
        %v3814 = vadd.f32 %v3682, %v3782
        %v3815 = vadd.f32 %v3683, %v3783
        %v3816 = vadd.f32 %v3684, %v3784
        %v3817 = vadd.f32 %v3685, %v3785
        %v3818 = vadd.f32 %v3686, %v3786
        %v3819 = vadd.f32 %v3687, %v3787
        %v3820 = vadd.f32 %v3688, %v3788
        %v3821 = vadd.f32 %v3689, %v3789
        %v3822 = vlaneseq
        %v3823 = vshrl.u32 %v3822, 7
        %v3824 = vsub.s32 2, %v3823
        %v3825 = vrot.slane %v3557, %v3824
        %vm3826 = vcmp.eq.f32.partialorder %v3825, %v337
        %vm3827 = vcmp.eq.f32.partialorder %v3825, %v338
        %vm3828 = vcmp.eq.f32.partialorder %v3825, %v339
        %vm3829 = vcmp.eq.f32.partialorder %v3825, %v340
        %vm3830 = vcmp.eq.f32.partialorder %v3825, %v341
        %vm3831 = vcmp.eq.f32.partialorder %v3825, %v342
        %vm3832 = vcmp.eq.f32.partialorder %v3825, %v343
        %vm3833 = vcmp.eq.f32.partialorder %v3825, %v344
        %vm3834 = vcmp.eq.f32.partialorder %v3825, %v345
        %vm3835 = vcmp.eq.f32.partialorder %v3825, %v346
        %vm3836 = vcmp.eq.f32.partialorder %v3825, %v347
        %vm3837 = vcmp.eq.f32.partialorder %v3825, %v348
        %vm3838 = vcmp.eq.f32.partialorder %v3825, %v349
        %vm3839 = vcmp.eq.f32.partialorder %v3825, %v350
        %vm3840 = vcmp.eq.f32.partialorder %v3825, %v351
        %vm3841 = vcmp.eq.f32.partialorder %v3825, %v352
        %vm3842 = vcmp.eq.f32.partialorder %v3825, %v353
        %vm3843 = vcmp.eq.f32.partialorder %v3825, %v354
        %vm3844 = vcmp.eq.f32.partialorder %v3825, %v355
        %vm3845 = vcmp.eq.f32.partialorder %v3825, %v356
        %vm3846 = vcmp.eq.f32.partialorder %v3825, %v357
        %vm3847 = vcmp.eq.f32.partialorder %v3825, %v358
        %vm3848 = vcmp.eq.f32.partialorder %v3825, %v359
        %vm3849 = vcmp.eq.f32.partialorder %v3825, %v360
        %vm3850 = vcmp.eq.f32.partialorder %v3825, %v361
        %vm3851 = vcmp.eq.f32.partialorder %v3825, %v362
        %vm3852 = vcmp.eq.f32.partialorder %v3825, %v363
        %vm3853 = vcmp.eq.f32.partialorder %v3825, %v364
        %vm3854 = vcmp.eq.f32.partialorder %v3825, %v365
        %vm3855 = vcmp.eq.f32.partialorder %v3825, %v366
        %vm3856 = vcmp.eq.f32.partialorder %v3825, %v367
        %vm3857 = vcmp.eq.f32.partialorder %v3825, %v368
        %v3858 = vsel %vm3826, 1, 0
        %v3859 = vsel %vm3827, 1, 0
        %v3860 = vsel %vm3828, 1, 0
        %v3861 = vsel %vm3829, 1, 0
        %v3862 = vsel %vm3830, 1, 0
        %v3863 = vsel %vm3831, 1, 0
        %v3864 = vsel %vm3832, 1, 0
        %v3865 = vsel %vm3833, 1, 0
        %v3866 = vsel %vm3834, 1, 0
        %v3867 = vsel %vm3835, 1, 0
        %v3868 = vsel %vm3836, 1, 0
        %v3869 = vsel %vm3837, 1, 0
        %v3870 = vsel %vm3838, 1, 0
        %v3871 = vsel %vm3839, 1, 0
        %v3872 = vsel %vm3840, 1, 0
        %v3873 = vsel %vm3841, 1, 0
        %v3874 = vsel %vm3842, 1, 0
        %v3875 = vsel %vm3843, 1, 0
        %v3876 = vsel %vm3844, 1, 0
        %v3877 = vsel %vm3845, 1, 0
        %v3878 = vsel %vm3846, 1, 0
        %v3879 = vsel %vm3847, 1, 0
        %v3880 = vsel %vm3848, 1, 0
        %v3881 = vsel %vm3849, 1, 0
        %v3882 = vsel %vm3850, 1, 0
        %v3883 = vsel %vm3851, 1, 0
        %v3884 = vsel %vm3852, 1, 0
        %v3885 = vsel %vm3853, 1, 0
        %v3886 = vsel %vm3854, 1, 0
        %v3887 = vsel %vm3855, 1, 0
        %v3888 = vsel %vm3856, 1, 0
        %v3889 = vsel %vm3857, 1, 0
        %v3890 = vcvt.s32.f32 %v3858
        %v3891 = vcvt.s32.f32 %v3859
        %v3892 = vcvt.s32.f32 %v3860
        %v3893 = vcvt.s32.f32 %v3861
        %v3894 = vcvt.s32.f32 %v3862
        %v3895 = vcvt.s32.f32 %v3863
        %v3896 = vcvt.s32.f32 %v3864
        %v3897 = vcvt.s32.f32 %v3865
        %v3898 = vcvt.s32.f32 %v3866
        %v3899 = vcvt.s32.f32 %v3867
        %v3900 = vcvt.s32.f32 %v3868
        %v3901 = vcvt.s32.f32 %v3869
        %v3902 = vcvt.s32.f32 %v3870
        %v3903 = vcvt.s32.f32 %v3871
        %v3904 = vcvt.s32.f32 %v3872
        %v3905 = vcvt.s32.f32 %v3873
        %v3906 = vcvt.s32.f32 %v3874
        %v3907 = vcvt.s32.f32 %v3875
        %v3908 = vcvt.s32.f32 %v3876
        %v3909 = vcvt.s32.f32 %v3877
        %v3910 = vcvt.s32.f32 %v3878
        %v3911 = vcvt.s32.f32 %v3879
        %v3912 = vcvt.s32.f32 %v3880
        %v3913 = vcvt.s32.f32 %v3881
        %v3914 = vcvt.s32.f32 %v3882
        %v3915 = vcvt.s32.f32 %v3883
        %v3916 = vcvt.s32.f32 %v3884
        %v3917 = vcvt.s32.f32 %v3885
        %v3918 = vcvt.s32.f32 %v3886
        %v3919 = vcvt.s32.f32 %v3887
        %v3920 = vcvt.s32.f32 %v3888
        %v3921 = vcvt.s32.f32 %v3889
        %v3922 = vadd.f32 %v3790, %v3890
        %v3923 = vadd.f32 %v3791, %v3891
        %v3924 = vadd.f32 %v3792, %v3892
        %v3925 = vadd.f32 %v3793, %v3893
        %v3926 = vadd.f32 %v3794, %v3894
        %v3927 = vadd.f32 %v3795, %v3895
        %v3928 = vadd.f32 %v3796, %v3896
        %v3929 = vadd.f32 %v3797, %v3897
        %v3930 = vadd.f32 %v3798, %v3898
        %v3931 = vadd.f32 %v3799, %v3899
        %v3932 = vadd.f32 %v3800, %v3900
        %v3933 = vadd.f32 %v3801, %v3901
        %v3934 = vadd.f32 %v3802, %v3902
        %v3935 = vadd.f32 %v3803, %v3903
        %v3936 = vadd.f32 %v3804, %v3904
        %v3937 = vadd.f32 %v3805, %v3905
        %v3938 = vadd.f32 %v3806, %v3906
        %v3939 = vadd.f32 %v3807, %v3907
        %v3940 = vadd.f32 %v3808, %v3908
        %v3941 = vadd.f32 %v3809, %v3909
        %v3942 = vadd.f32 %v3810, %v3910
        %v3943 = vadd.f32 %v3811, %v3911
        %v3944 = vadd.f32 %v3812, %v3912
        %v3945 = vadd.f32 %v3813, %v3913
        %v3946 = vadd.f32 %v3814, %v3914
        %v3947 = vadd.f32 %v3815, %v3915
        %v3948 = vadd.f32 %v3816, %v3916
        %v3949 = vadd.f32 %v3817, %v3917
        %v3950 = vadd.f32 %v3818, %v3918
        %v3951 = vadd.f32 %v3819, %v3919
        %v3952 = vadd.f32 %v3820, %v3920
        %v3953 = vadd.f32 %v3821, %v3921
        %v3954 = vlaneseq
        %v3955 = vshrl.u32 %v3954, 7
        %v3956 = vsub.s32 3, %v3955
        %v3957 = vrot.slane %v3557, %v3956
        %vm3958 = vcmp.eq.f32.partialorder %v3957, %v337
        %vm3959 = vcmp.eq.f32.partialorder %v3957, %v338
        %vm3960 = vcmp.eq.f32.partialorder %v3957, %v339
        %vm3961 = vcmp.eq.f32.partialorder %v3957, %v340
        %vm3962 = vcmp.eq.f32.partialorder %v3957, %v341
        %vm3963 = vcmp.eq.f32.partialorder %v3957, %v342
        %vm3964 = vcmp.eq.f32.partialorder %v3957, %v343
        %vm3965 = vcmp.eq.f32.partialorder %v3957, %v344
        %vm3966 = vcmp.eq.f32.partialorder %v3957, %v345
        %vm3967 = vcmp.eq.f32.partialorder %v3957, %v346
        %vm3968 = vcmp.eq.f32.partialorder %v3957, %v347
        %vm3969 = vcmp.eq.f32.partialorder %v3957, %v348
        %vm3970 = vcmp.eq.f32.partialorder %v3957, %v349
        %vm3971 = vcmp.eq.f32.partialorder %v3957, %v350
        %vm3972 = vcmp.eq.f32.partialorder %v3957, %v351
        %vm3973 = vcmp.eq.f32.partialorder %v3957, %v352
        %vm3974 = vcmp.eq.f32.partialorder %v3957, %v353
        %vm3975 = vcmp.eq.f32.partialorder %v3957, %v354
        %vm3976 = vcmp.eq.f32.partialorder %v3957, %v355
        %vm3977 = vcmp.eq.f32.partialorder %v3957, %v356
        %vm3978 = vcmp.eq.f32.partialorder %v3957, %v357
        %vm3979 = vcmp.eq.f32.partialorder %v3957, %v358
        %vm3980 = vcmp.eq.f32.partialorder %v3957, %v359
        %vm3981 = vcmp.eq.f32.partialorder %v3957, %v360
        %vm3982 = vcmp.eq.f32.partialorder %v3957, %v361
        %vm3983 = vcmp.eq.f32.partialorder %v3957, %v362
        %vm3984 = vcmp.eq.f32.partialorder %v3957, %v363
        %vm3985 = vcmp.eq.f32.partialorder %v3957, %v364
        %vm3986 = vcmp.eq.f32.partialorder %v3957, %v365
        %vm3987 = vcmp.eq.f32.partialorder %v3957, %v366
        %vm3988 = vcmp.eq.f32.partialorder %v3957, %v367
        %vm3989 = vcmp.eq.f32.partialorder %v3957, %v368
        %v3990 = vsel %vm3958, 1, 0
        %v3991 = vsel %vm3959, 1, 0
        %v3992 = vsel %vm3960, 1, 0
        %v3993 = vsel %vm3961, 1, 0
        %v3994 = vsel %vm3962, 1, 0
        %v3995 = vsel %vm3963, 1, 0
        %v3996 = vsel %vm3964, 1, 0
        %v3997 = vsel %vm3965, 1, 0
        %v3998 = vsel %vm3966, 1, 0
        %v3999 = vsel %vm3967, 1, 0
        %v4000 = vsel %vm3968, 1, 0
        %v4001 = vsel %vm3969, 1, 0
        %v4002 = vsel %vm3970, 1, 0
        %v4003 = vsel %vm3971, 1, 0
        %v4004 = vsel %vm3972, 1, 0
        %v4005 = vsel %vm3973, 1, 0
        %v4006 = vsel %vm3974, 1, 0
        %v4007 = vsel %vm3975, 1, 0
        %v4008 = vsel %vm3976, 1, 0
        %v4009 = vsel %vm3977, 1, 0
        %v4010 = vsel %vm3978, 1, 0
        %v4011 = vsel %vm3979, 1, 0
        %v4012 = vsel %vm3980, 1, 0
        %v4013 = vsel %vm3981, 1, 0
        %v4014 = vsel %vm3982, 1, 0
        %v4015 = vsel %vm3983, 1, 0
        %v4016 = vsel %vm3984, 1, 0
        %v4017 = vsel %vm3985, 1, 0
        %v4018 = vsel %vm3986, 1, 0
        %v4019 = vsel %vm3987, 1, 0
        %v4020 = vsel %vm3988, 1, 0
        %v4021 = vsel %vm3989, 1, 0
        %v4022 = vcvt.s32.f32 %v3990
        %v4023 = vcvt.s32.f32 %v3991
        %v4024 = vcvt.s32.f32 %v3992
        %v4025 = vcvt.s32.f32 %v3993
        %v4026 = vcvt.s32.f32 %v3994
        %v4027 = vcvt.s32.f32 %v3995
        %v4028 = vcvt.s32.f32 %v3996
        %v4029 = vcvt.s32.f32 %v3997
        %v4030 = vcvt.s32.f32 %v3998
        %v4031 = vcvt.s32.f32 %v3999
        %v4032 = vcvt.s32.f32 %v4000
        %v4033 = vcvt.s32.f32 %v4001
        %v4034 = vcvt.s32.f32 %v4002
        %v4035 = vcvt.s32.f32 %v4003
        %v4036 = vcvt.s32.f32 %v4004
        %v4037 = vcvt.s32.f32 %v4005
        %v4038 = vcvt.s32.f32 %v4006
        %v4039 = vcvt.s32.f32 %v4007
        %v4040 = vcvt.s32.f32 %v4008
        %v4041 = vcvt.s32.f32 %v4009
        %v4042 = vcvt.s32.f32 %v4010
        %v4043 = vcvt.s32.f32 %v4011
        %v4044 = vcvt.s32.f32 %v4012
        %v4045 = vcvt.s32.f32 %v4013
        %v4046 = vcvt.s32.f32 %v4014
        %v4047 = vcvt.s32.f32 %v4015
        %v4048 = vcvt.s32.f32 %v4016
        %v4049 = vcvt.s32.f32 %v4017
        %v4050 = vcvt.s32.f32 %v4018
        %v4051 = vcvt.s32.f32 %v4019
        %v4052 = vcvt.s32.f32 %v4020
        %v4053 = vcvt.s32.f32 %v4021
        %v4054 = vadd.f32 %v3922, %v4022
        %v4055 = vadd.f32 %v3923, %v4023
        %v4056 = vadd.f32 %v3924, %v4024
        %v4057 = vadd.f32 %v3925, %v4025
        %v4058 = vadd.f32 %v3926, %v4026
        %v4059 = vadd.f32 %v3927, %v4027
        %v4060 = vadd.f32 %v3928, %v4028
        %v4061 = vadd.f32 %v3929, %v4029
        %v4062 = vadd.f32 %v3930, %v4030
        %v4063 = vadd.f32 %v3931, %v4031
        %v4064 = vadd.f32 %v3932, %v4032
        %v4065 = vadd.f32 %v3933, %v4033
        %v4066 = vadd.f32 %v3934, %v4034
        %v4067 = vadd.f32 %v3935, %v4035
        %v4068 = vadd.f32 %v3936, %v4036
        %v4069 = vadd.f32 %v3937, %v4037
        %v4070 = vadd.f32 %v3938, %v4038
        %v4071 = vadd.f32 %v3939, %v4039
        %v4072 = vadd.f32 %v3940, %v4040
        %v4073 = vadd.f32 %v3941, %v4041
        %v4074 = vadd.f32 %v3942, %v4042
        %v4075 = vadd.f32 %v3943, %v4043
        %v4076 = vadd.f32 %v3944, %v4044
        %v4077 = vadd.f32 %v3945, %v4045
        %v4078 = vadd.f32 %v3946, %v4046
        %v4079 = vadd.f32 %v3947, %v4047
        %v4080 = vadd.f32 %v3948, %v4048
        %v4081 = vadd.f32 %v3949, %v4049
        %v4082 = vadd.f32 %v3950, %v4050
        %v4083 = vadd.f32 %v3951, %v4051
        %v4084 = vadd.f32 %v3952, %v4052
        %v4085 = vadd.f32 %v3953, %v4053
        %v4086 = vld [vmem:[%s250 + $0x6] sm:$0x2]
        %v4087 = vunpack.c.0.s8 %v4086
        %v4088 = vcvt.s32.f32 %v4087
        %v4089 = vlaneseq
        %v4090 = vshrl.u32 %v4089, 7
        %v4091 = vsub.s32 4, %v4090
        %v4092 = vrot.slane %v4088, %v4091
        %vm4093 = vcmp.eq.f32.partialorder %v4092, %v337
        %vm4094 = vcmp.eq.f32.partialorder %v4092, %v338
        %vm4095 = vcmp.eq.f32.partialorder %v4092, %v339
        %vm4096 = vcmp.eq.f32.partialorder %v4092, %v340
        %vm4097 = vcmp.eq.f32.partialorder %v4092, %v341
        %vm4098 = vcmp.eq.f32.partialorder %v4092, %v342
        %vm4099 = vcmp.eq.f32.partialorder %v4092, %v343
        %vm4100 = vcmp.eq.f32.partialorder %v4092, %v344
        %vm4101 = vcmp.eq.f32.partialorder %v4092, %v345
        %vm4102 = vcmp.eq.f32.partialorder %v4092, %v346
        %vm4103 = vcmp.eq.f32.partialorder %v4092, %v347
        %vm4104 = vcmp.eq.f32.partialorder %v4092, %v348
        %vm4105 = vcmp.eq.f32.partialorder %v4092, %v349
        %vm4106 = vcmp.eq.f32.partialorder %v4092, %v350
        %vm4107 = vcmp.eq.f32.partialorder %v4092, %v351
        %vm4108 = vcmp.eq.f32.partialorder %v4092, %v352
        %vm4109 = vcmp.eq.f32.partialorder %v4092, %v353
        %vm4110 = vcmp.eq.f32.partialorder %v4092, %v354
        %vm4111 = vcmp.eq.f32.partialorder %v4092, %v355
        %vm4112 = vcmp.eq.f32.partialorder %v4092, %v356
        %vm4113 = vcmp.eq.f32.partialorder %v4092, %v357
        %vm4114 = vcmp.eq.f32.partialorder %v4092, %v358
        %vm4115 = vcmp.eq.f32.partialorder %v4092, %v359
        %vm4116 = vcmp.eq.f32.partialorder %v4092, %v360
        %vm4117 = vcmp.eq.f32.partialorder %v4092, %v361
        %vm4118 = vcmp.eq.f32.partialorder %v4092, %v362
        %vm4119 = vcmp.eq.f32.partialorder %v4092, %v363
        %vm4120 = vcmp.eq.f32.partialorder %v4092, %v364
        %vm4121 = vcmp.eq.f32.partialorder %v4092, %v365
        %vm4122 = vcmp.eq.f32.partialorder %v4092, %v366
        %vm4123 = vcmp.eq.f32.partialorder %v4092, %v367
        %vm4124 = vcmp.eq.f32.partialorder %v4092, %v368
        %v4125 = vsel %vm4093, 1, 0
        %v4126 = vsel %vm4094, 1, 0
        %v4127 = vsel %vm4095, 1, 0
        %v4128 = vsel %vm4096, 1, 0
        %v4129 = vsel %vm4097, 1, 0
        %v4130 = vsel %vm4098, 1, 0
        %v4131 = vsel %vm4099, 1, 0
        %v4132 = vsel %vm4100, 1, 0
        %v4133 = vsel %vm4101, 1, 0
        %v4134 = vsel %vm4102, 1, 0
        %v4135 = vsel %vm4103, 1, 0
        %v4136 = vsel %vm4104, 1, 0
        %v4137 = vsel %vm4105, 1, 0
        %v4138 = vsel %vm4106, 1, 0
        %v4139 = vsel %vm4107, 1, 0
        %v4140 = vsel %vm4108, 1, 0
        %v4141 = vsel %vm4109, 1, 0
        %v4142 = vsel %vm4110, 1, 0
        %v4143 = vsel %vm4111, 1, 0
        %v4144 = vsel %vm4112, 1, 0
        %v4145 = vsel %vm4113, 1, 0
        %v4146 = vsel %vm4114, 1, 0
        %v4147 = vsel %vm4115, 1, 0
        %v4148 = vsel %vm4116, 1, 0
        %v4149 = vsel %vm4117, 1, 0
        %v4150 = vsel %vm4118, 1, 0
        %v4151 = vsel %vm4119, 1, 0
        %v4152 = vsel %vm4120, 1, 0
        %v4153 = vsel %vm4121, 1, 0
        %v4154 = vsel %vm4122, 1, 0
        %v4155 = vsel %vm4123, 1, 0
        %v4156 = vsel %vm4124, 1, 0
        %v4157 = vcvt.s32.f32 %v4125
        %v4158 = vcvt.s32.f32 %v4126
        %v4159 = vcvt.s32.f32 %v4127
        %v4160 = vcvt.s32.f32 %v4128
        %v4161 = vcvt.s32.f32 %v4129
        %v4162 = vcvt.s32.f32 %v4130
        %v4163 = vcvt.s32.f32 %v4131
        %v4164 = vcvt.s32.f32 %v4132
        %v4165 = vcvt.s32.f32 %v4133
        %v4166 = vcvt.s32.f32 %v4134
        %v4167 = vcvt.s32.f32 %v4135
        %v4168 = vcvt.s32.f32 %v4136
        %v4169 = vcvt.s32.f32 %v4137
        %v4170 = vcvt.s32.f32 %v4138
        %v4171 = vcvt.s32.f32 %v4139
        %v4172 = vcvt.s32.f32 %v4140
        %v4173 = vcvt.s32.f32 %v4141
        %v4174 = vcvt.s32.f32 %v4142
        %v4175 = vcvt.s32.f32 %v4143
        %v4176 = vcvt.s32.f32 %v4144
        %v4177 = vcvt.s32.f32 %v4145
        %v4178 = vcvt.s32.f32 %v4146
        %v4179 = vcvt.s32.f32 %v4147
        %v4180 = vcvt.s32.f32 %v4148
        %v4181 = vcvt.s32.f32 %v4149
        %v4182 = vcvt.s32.f32 %v4150
        %v4183 = vcvt.s32.f32 %v4151
        %v4184 = vcvt.s32.f32 %v4152
        %v4185 = vcvt.s32.f32 %v4153
        %v4186 = vcvt.s32.f32 %v4154
        %v4187 = vcvt.s32.f32 %v4155
        %v4188 = vcvt.s32.f32 %v4156
        %v4189 = vadd.f32 %v4054, %v4157
        %v4190 = vadd.f32 %v4055, %v4158
        %v4191 = vadd.f32 %v4056, %v4159
        %v4192 = vadd.f32 %v4057, %v4160
        %v4193 = vadd.f32 %v4058, %v4161
        %v4194 = vadd.f32 %v4059, %v4162
        %v4195 = vadd.f32 %v4060, %v4163
        %v4196 = vadd.f32 %v4061, %v4164
        %v4197 = vadd.f32 %v4062, %v4165
        %v4198 = vadd.f32 %v4063, %v4166
        %v4199 = vadd.f32 %v4064, %v4167
        %v4200 = vadd.f32 %v4065, %v4168
        %v4201 = vadd.f32 %v4066, %v4169
        %v4202 = vadd.f32 %v4067, %v4170
        %v4203 = vadd.f32 %v4068, %v4171
        %v4204 = vadd.f32 %v4069, %v4172
        %v4205 = vadd.f32 %v4070, %v4173
        %v4206 = vadd.f32 %v4071, %v4174
        %v4207 = vadd.f32 %v4072, %v4175
        %v4208 = vadd.f32 %v4073, %v4176
        %v4209 = vadd.f32 %v4074, %v4177
        %v4210 = vadd.f32 %v4075, %v4178
        %v4211 = vadd.f32 %v4076, %v4179
        %v4212 = vadd.f32 %v4077, %v4180
        %v4213 = vadd.f32 %v4078, %v4181
        %v4214 = vadd.f32 %v4079, %v4182
        %v4215 = vadd.f32 %v4080, %v4183
        %v4216 = vadd.f32 %v4081, %v4184
        %v4217 = vadd.f32 %v4082, %v4185
        %v4218 = vadd.f32 %v4083, %v4186
        %v4219 = vadd.f32 %v4084, %v4187
        %v4220 = vadd.f32 %v4085, %v4188
        %v4221 = vlaneseq
        %v4222 = vshrl.u32 %v4221, 7
        %v4223 = vsub.s32 5, %v4222
        %v4224 = vrot.slane %v4088, %v4223
        %vm4225 = vcmp.eq.f32.partialorder %v4224, %v337
        %vm4226 = vcmp.eq.f32.partialorder %v4224, %v338
        %vm4227 = vcmp.eq.f32.partialorder %v4224, %v339
        %vm4228 = vcmp.eq.f32.partialorder %v4224, %v340
        %vm4229 = vcmp.eq.f32.partialorder %v4224, %v341
        %vm4230 = vcmp.eq.f32.partialorder %v4224, %v342
        %vm4231 = vcmp.eq.f32.partialorder %v4224, %v343
        %vm4232 = vcmp.eq.f32.partialorder %v4224, %v344
        %vm4233 = vcmp.eq.f32.partialorder %v4224, %v345
        %vm4234 = vcmp.eq.f32.partialorder %v4224, %v346
        %vm4235 = vcmp.eq.f32.partialorder %v4224, %v347
        %vm4236 = vcmp.eq.f32.partialorder %v4224, %v348
        %vm4237 = vcmp.eq.f32.partialorder %v4224, %v349
        %vm4238 = vcmp.eq.f32.partialorder %v4224, %v350
        %vm4239 = vcmp.eq.f32.partialorder %v4224, %v351
        %vm4240 = vcmp.eq.f32.partialorder %v4224, %v352
        %vm4241 = vcmp.eq.f32.partialorder %v4224, %v353
        %vm4242 = vcmp.eq.f32.partialorder %v4224, %v354
        %vm4243 = vcmp.eq.f32.partialorder %v4224, %v355
        %vm4244 = vcmp.eq.f32.partialorder %v4224, %v356
        %vm4245 = vcmp.eq.f32.partialorder %v4224, %v357
        %vm4246 = vcmp.eq.f32.partialorder %v4224, %v358
        %vm4247 = vcmp.eq.f32.partialorder %v4224, %v359
        %vm4248 = vcmp.eq.f32.partialorder %v4224, %v360
        %vm4249 = vcmp.eq.f32.partialorder %v4224, %v361
        %vm4250 = vcmp.eq.f32.partialorder %v4224, %v362
        %vm4251 = vcmp.eq.f32.partialorder %v4224, %v363
        %vm4252 = vcmp.eq.f32.partialorder %v4224, %v364
        %vm4253 = vcmp.eq.f32.partialorder %v4224, %v365
        %vm4254 = vcmp.eq.f32.partialorder %v4224, %v366
        %vm4255 = vcmp.eq.f32.partialorder %v4224, %v367
        %vm4256 = vcmp.eq.f32.partialorder %v4224, %v368
        %v4257 = vsel %vm4225, 1, 0
        %v4258 = vsel %vm4226, 1, 0
        %v4259 = vsel %vm4227, 1, 0
        %v4260 = vsel %vm4228, 1, 0
        %v4261 = vsel %vm4229, 1, 0
        %v4262 = vsel %vm4230, 1, 0
        %v4263 = vsel %vm4231, 1, 0
        %v4264 = vsel %vm4232, 1, 0
        %v4265 = vsel %vm4233, 1, 0
        %v4266 = vsel %vm4234, 1, 0
        %v4267 = vsel %vm4235, 1, 0
        %v4268 = vsel %vm4236, 1, 0
        %v4269 = vsel %vm4237, 1, 0
        %v4270 = vsel %vm4238, 1, 0
        %v4271 = vsel %vm4239, 1, 0
        %v4272 = vsel %vm4240, 1, 0
        %v4273 = vsel %vm4241, 1, 0
        %v4274 = vsel %vm4242, 1, 0
        %v4275 = vsel %vm4243, 1, 0
        %v4276 = vsel %vm4244, 1, 0
        %v4277 = vsel %vm4245, 1, 0
        %v4278 = vsel %vm4246, 1, 0
        %v4279 = vsel %vm4247, 1, 0
        %v4280 = vsel %vm4248, 1, 0
        %v4281 = vsel %vm4249, 1, 0
        %v4282 = vsel %vm4250, 1, 0
        %v4283 = vsel %vm4251, 1, 0
        %v4284 = vsel %vm4252, 1, 0
        %v4285 = vsel %vm4253, 1, 0
        %v4286 = vsel %vm4254, 1, 0
        %v4287 = vsel %vm4255, 1, 0
        %v4288 = vsel %vm4256, 1, 0
        %v4289 = vcvt.s32.f32 %v4257
        %v4290 = vcvt.s32.f32 %v4258
        %v4291 = vcvt.s32.f32 %v4259
        %v4292 = vcvt.s32.f32 %v4260
        %v4293 = vcvt.s32.f32 %v4261
        %v4294 = vcvt.s32.f32 %v4262
        %v4295 = vcvt.s32.f32 %v4263
        %v4296 = vcvt.s32.f32 %v4264
        %v4297 = vcvt.s32.f32 %v4265
        %v4298 = vcvt.s32.f32 %v4266
        %v4299 = vcvt.s32.f32 %v4267
        %v4300 = vcvt.s32.f32 %v4268
        %v4301 = vcvt.s32.f32 %v4269
        %v4302 = vcvt.s32.f32 %v4270
        %v4303 = vcvt.s32.f32 %v4271
        %v4304 = vcvt.s32.f32 %v4272
        %v4305 = vcvt.s32.f32 %v4273
        %v4306 = vcvt.s32.f32 %v4274
        %v4307 = vcvt.s32.f32 %v4275
        %v4308 = vcvt.s32.f32 %v4276
        %v4309 = vcvt.s32.f32 %v4277
        %v4310 = vcvt.s32.f32 %v4278
        %v4311 = vcvt.s32.f32 %v4279
        %v4312 = vcvt.s32.f32 %v4280
        %v4313 = vcvt.s32.f32 %v4281
        %v4314 = vcvt.s32.f32 %v4282
        %v4315 = vcvt.s32.f32 %v4283
        %v4316 = vcvt.s32.f32 %v4284
        %v4317 = vcvt.s32.f32 %v4285
        %v4318 = vcvt.s32.f32 %v4286
        %v4319 = vcvt.s32.f32 %v4287
        %v4320 = vcvt.s32.f32 %v4288
        %v4321 = vadd.f32 %v4189, %v4289
        %v4322 = vadd.f32 %v4190, %v4290
        %v4323 = vadd.f32 %v4191, %v4291
        %v4324 = vadd.f32 %v4192, %v4292
        %v4325 = vadd.f32 %v4193, %v4293
        %v4326 = vadd.f32 %v4194, %v4294
        %v4327 = vadd.f32 %v4195, %v4295
        %v4328 = vadd.f32 %v4196, %v4296
        %v4329 = vadd.f32 %v4197, %v4297
        %v4330 = vadd.f32 %v4198, %v4298
        %v4331 = vadd.f32 %v4199, %v4299
        %v4332 = vadd.f32 %v4200, %v4300
        %v4333 = vadd.f32 %v4201, %v4301
        %v4334 = vadd.f32 %v4202, %v4302
        %v4335 = vadd.f32 %v4203, %v4303
        %v4336 = vadd.f32 %v4204, %v4304
        %v4337 = vadd.f32 %v4205, %v4305
        %v4338 = vadd.f32 %v4206, %v4306
        %v4339 = vadd.f32 %v4207, %v4307
        %v4340 = vadd.f32 %v4208, %v4308
        %v4341 = vadd.f32 %v4209, %v4309
        %v4342 = vadd.f32 %v4210, %v4310
        %v4343 = vadd.f32 %v4211, %v4311
        %v4344 = vadd.f32 %v4212, %v4312
        %v4345 = vadd.f32 %v4213, %v4313
        %v4346 = vadd.f32 %v4214, %v4314
        %v4347 = vadd.f32 %v4215, %v4315
        %v4348 = vadd.f32 %v4216, %v4316
        %v4349 = vadd.f32 %v4217, %v4317
        %v4350 = vadd.f32 %v4218, %v4318
        %v4351 = vadd.f32 %v4219, %v4319
        %v4352 = vadd.f32 %v4220, %v4320
        %v4353 = vlaneseq
        %v4354 = vshrl.u32 %v4353, 7
        %v4355 = vsub.s32 6, %v4354
        %v4356 = vrot.slane %v4088, %v4355
        %vm4357 = vcmp.eq.f32.partialorder %v4356, %v337
        %vm4358 = vcmp.eq.f32.partialorder %v4356, %v338
        %vm4359 = vcmp.eq.f32.partialorder %v4356, %v339
        %vm4360 = vcmp.eq.f32.partialorder %v4356, %v340
        %vm4361 = vcmp.eq.f32.partialorder %v4356, %v341
        %vm4362 = vcmp.eq.f32.partialorder %v4356, %v342
        %vm4363 = vcmp.eq.f32.partialorder %v4356, %v343
        %vm4364 = vcmp.eq.f32.partialorder %v4356, %v344
        %vm4365 = vcmp.eq.f32.partialorder %v4356, %v345
        %vm4366 = vcmp.eq.f32.partialorder %v4356, %v346
        %vm4367 = vcmp.eq.f32.partialorder %v4356, %v347
        %vm4368 = vcmp.eq.f32.partialorder %v4356, %v348
        %vm4369 = vcmp.eq.f32.partialorder %v4356, %v349
        %vm4370 = vcmp.eq.f32.partialorder %v4356, %v350
        %vm4371 = vcmp.eq.f32.partialorder %v4356, %v351
        %vm4372 = vcmp.eq.f32.partialorder %v4356, %v352
        %vm4373 = vcmp.eq.f32.partialorder %v4356, %v353
        %vm4374 = vcmp.eq.f32.partialorder %v4356, %v354
        %vm4375 = vcmp.eq.f32.partialorder %v4356, %v355
        %vm4376 = vcmp.eq.f32.partialorder %v4356, %v356
        %vm4377 = vcmp.eq.f32.partialorder %v4356, %v357
        %vm4378 = vcmp.eq.f32.partialorder %v4356, %v358
        %vm4379 = vcmp.eq.f32.partialorder %v4356, %v359
        %vm4380 = vcmp.eq.f32.partialorder %v4356, %v360
        %vm4381 = vcmp.eq.f32.partialorder %v4356, %v361
        %vm4382 = vcmp.eq.f32.partialorder %v4356, %v362
        %vm4383 = vcmp.eq.f32.partialorder %v4356, %v363
        %vm4384 = vcmp.eq.f32.partialorder %v4356, %v364
        %vm4385 = vcmp.eq.f32.partialorder %v4356, %v365
        %vm4386 = vcmp.eq.f32.partialorder %v4356, %v366
        %vm4387 = vcmp.eq.f32.partialorder %v4356, %v367
        %vm4388 = vcmp.eq.f32.partialorder %v4356, %v368
        %v4389 = vsel %vm4357, 1, 0
        %v4390 = vsel %vm4358, 1, 0
        %v4391 = vsel %vm4359, 1, 0
        %v4392 = vsel %vm4360, 1, 0
        %v4393 = vsel %vm4361, 1, 0
        %v4394 = vsel %vm4362, 1, 0
        %v4395 = vsel %vm4363, 1, 0
        %v4396 = vsel %vm4364, 1, 0
        %v4397 = vsel %vm4365, 1, 0
        %v4398 = vsel %vm4366, 1, 0
        %v4399 = vsel %vm4367, 1, 0
        %v4400 = vsel %vm4368, 1, 0
        %v4401 = vsel %vm4369, 1, 0
        %v4402 = vsel %vm4370, 1, 0
        %v4403 = vsel %vm4371, 1, 0
        %v4404 = vsel %vm4372, 1, 0
        %v4405 = vsel %vm4373, 1, 0
        %v4406 = vsel %vm4374, 1, 0
        %v4407 = vsel %vm4375, 1, 0
        %v4408 = vsel %vm4376, 1, 0
        %v4409 = vsel %vm4377, 1, 0
        %v4410 = vsel %vm4378, 1, 0
        %v4411 = vsel %vm4379, 1, 0
        %v4412 = vsel %vm4380, 1, 0
        %v4413 = vsel %vm4381, 1, 0
        %v4414 = vsel %vm4382, 1, 0
        %v4415 = vsel %vm4383, 1, 0
        %v4416 = vsel %vm4384, 1, 0
        %v4417 = vsel %vm4385, 1, 0
        %v4418 = vsel %vm4386, 1, 0
        %v4419 = vsel %vm4387, 1, 0
        %v4420 = vsel %vm4388, 1, 0
        %v4421 = vcvt.s32.f32 %v4389
        %v4422 = vcvt.s32.f32 %v4390
        %v4423 = vcvt.s32.f32 %v4391
        %v4424 = vcvt.s32.f32 %v4392
        %v4425 = vcvt.s32.f32 %v4393
        %v4426 = vcvt.s32.f32 %v4394
        %v4427 = vcvt.s32.f32 %v4395
        %v4428 = vcvt.s32.f32 %v4396
        %v4429 = vcvt.s32.f32 %v4397
        %v4430 = vcvt.s32.f32 %v4398
        %v4431 = vcvt.s32.f32 %v4399
        %v4432 = vcvt.s32.f32 %v4400
        %v4433 = vcvt.s32.f32 %v4401
        %v4434 = vcvt.s32.f32 %v4402
        %v4435 = vcvt.s32.f32 %v4403
        %v4436 = vcvt.s32.f32 %v4404
        %v4437 = vcvt.s32.f32 %v4405
        %v4438 = vcvt.s32.f32 %v4406
        %v4439 = vcvt.s32.f32 %v4407
        %v4440 = vcvt.s32.f32 %v4408
        %v4441 = vcvt.s32.f32 %v4409
        %v4442 = vcvt.s32.f32 %v4410
        %v4443 = vcvt.s32.f32 %v4411
        %v4444 = vcvt.s32.f32 %v4412
        %v4445 = vcvt.s32.f32 %v4413
        %v4446 = vcvt.s32.f32 %v4414
        %v4447 = vcvt.s32.f32 %v4415
        %v4448 = vcvt.s32.f32 %v4416
        %v4449 = vcvt.s32.f32 %v4417
        %v4450 = vcvt.s32.f32 %v4418
        %v4451 = vcvt.s32.f32 %v4419
        %v4452 = vcvt.s32.f32 %v4420
        %v4453 = vadd.f32 %v4321, %v4421
        %v4454 = vadd.f32 %v4322, %v4422
        %v4455 = vadd.f32 %v4323, %v4423
        %v4456 = vadd.f32 %v4324, %v4424
        %v4457 = vadd.f32 %v4325, %v4425
        %v4458 = vadd.f32 %v4326, %v4426
        %v4459 = vadd.f32 %v4327, %v4427
        %v4460 = vadd.f32 %v4328, %v4428
        %v4461 = vadd.f32 %v4329, %v4429
        %v4462 = vadd.f32 %v4330, %v4430
        %v4463 = vadd.f32 %v4331, %v4431
        %v4464 = vadd.f32 %v4332, %v4432
        %v4465 = vadd.f32 %v4333, %v4433
        %v4466 = vadd.f32 %v4334, %v4434
        %v4467 = vadd.f32 %v4335, %v4435
        %v4468 = vadd.f32 %v4336, %v4436
        %v4469 = vadd.f32 %v4337, %v4437
        %v4470 = vadd.f32 %v4338, %v4438
        %v4471 = vadd.f32 %v4339, %v4439
        %v4472 = vadd.f32 %v4340, %v4440
        %v4473 = vadd.f32 %v4341, %v4441
        %v4474 = vadd.f32 %v4342, %v4442
        %v4475 = vadd.f32 %v4343, %v4443
        %v4476 = vadd.f32 %v4344, %v4444
        %v4477 = vadd.f32 %v4345, %v4445
        %v4478 = vadd.f32 %v4346, %v4446
        %v4479 = vadd.f32 %v4347, %v4447
        %v4480 = vadd.f32 %v4348, %v4448
        %v4481 = vadd.f32 %v4349, %v4449
        %v4482 = vadd.f32 %v4350, %v4450
        %v4483 = vadd.f32 %v4351, %v4451
        %v4484 = vadd.f32 %v4352, %v4452
        %v4485 = vlaneseq
        %v4486 = vshrl.u32 %v4485, 7
        %v4487 = vsub.s32 7, %v4486
        %v4488 = vrot.slane %v4088, %v4487
        %vm4489 = vcmp.eq.f32.partialorder %v4488, %v337
        %vm4490 = vcmp.eq.f32.partialorder %v4488, %v338
        %vm4491 = vcmp.eq.f32.partialorder %v4488, %v339
        %vm4492 = vcmp.eq.f32.partialorder %v4488, %v340
        %vm4493 = vcmp.eq.f32.partialorder %v4488, %v341
        %vm4494 = vcmp.eq.f32.partialorder %v4488, %v342
        %vm4495 = vcmp.eq.f32.partialorder %v4488, %v343
        %vm4496 = vcmp.eq.f32.partialorder %v4488, %v344
        %vm4497 = vcmp.eq.f32.partialorder %v4488, %v345
        %vm4498 = vcmp.eq.f32.partialorder %v4488, %v346
        %vm4499 = vcmp.eq.f32.partialorder %v4488, %v347
        %vm4500 = vcmp.eq.f32.partialorder %v4488, %v348
        %vm4501 = vcmp.eq.f32.partialorder %v4488, %v349
        %vm4502 = vcmp.eq.f32.partialorder %v4488, %v350
        %vm4503 = vcmp.eq.f32.partialorder %v4488, %v351
        %vm4504 = vcmp.eq.f32.partialorder %v4488, %v352
        %vm4505 = vcmp.eq.f32.partialorder %v4488, %v353
        %vm4506 = vcmp.eq.f32.partialorder %v4488, %v354
        %vm4507 = vcmp.eq.f32.partialorder %v4488, %v355
        %vm4508 = vcmp.eq.f32.partialorder %v4488, %v356
        %vm4509 = vcmp.eq.f32.partialorder %v4488, %v357
        %vm4510 = vcmp.eq.f32.partialorder %v4488, %v358
        %vm4511 = vcmp.eq.f32.partialorder %v4488, %v359
        %vm4512 = vcmp.eq.f32.partialorder %v4488, %v360
        %vm4513 = vcmp.eq.f32.partialorder %v4488, %v361
        %vm4514 = vcmp.eq.f32.partialorder %v4488, %v362
        %vm4515 = vcmp.eq.f32.partialorder %v4488, %v363
        %vm4516 = vcmp.eq.f32.partialorder %v4488, %v364
        %vm4517 = vcmp.eq.f32.partialorder %v4488, %v365
        %vm4518 = vcmp.eq.f32.partialorder %v4488, %v366
        %vm4519 = vcmp.eq.f32.partialorder %v4488, %v367
        %vm4520 = vcmp.eq.f32.partialorder %v4488, %v368
        %v4521 = vsel %vm4489, 1, 0
        %v4522 = vsel %vm4490, 1, 0
        %v4523 = vsel %vm4491, 1, 0
        %v4524 = vsel %vm4492, 1, 0
        %v4525 = vsel %vm4493, 1, 0
        %v4526 = vsel %vm4494, 1, 0
        %v4527 = vsel %vm4495, 1, 0
        %v4528 = vsel %vm4496, 1, 0
        %v4529 = vsel %vm4497, 1, 0
        %v4530 = vsel %vm4498, 1, 0
        %v4531 = vsel %vm4499, 1, 0
        %v4532 = vsel %vm4500, 1, 0
        %v4533 = vsel %vm4501, 1, 0
        %v4534 = vsel %vm4502, 1, 0
        %v4535 = vsel %vm4503, 1, 0
        %v4536 = vsel %vm4504, 1, 0
        %v4537 = vsel %vm4505, 1, 0
        %v4538 = vsel %vm4506, 1, 0
        %v4539 = vsel %vm4507, 1, 0
        %v4540 = vsel %vm4508, 1, 0
        %v4541 = vsel %vm4509, 1, 0
        %v4542 = vsel %vm4510, 1, 0
        %v4543 = vsel %vm4511, 1, 0
        %v4544 = vsel %vm4512, 1, 0
        %v4545 = vsel %vm4513, 1, 0
        %v4546 = vsel %vm4514, 1, 0
        %v4547 = vsel %vm4515, 1, 0
        %v4548 = vsel %vm4516, 1, 0
        %v4549 = vsel %vm4517, 1, 0
        %v4550 = vsel %vm4518, 1, 0
        %v4551 = vsel %vm4519, 1, 0
        %v4552 = vsel %vm4520, 1, 0
        %v4553 = vcvt.s32.f32 %v4521
        %v4554 = vcvt.s32.f32 %v4522
        %v4555 = vcvt.s32.f32 %v4523
        %v4556 = vcvt.s32.f32 %v4524
        %v4557 = vcvt.s32.f32 %v4525
        %v4558 = vcvt.s32.f32 %v4526
        %v4559 = vcvt.s32.f32 %v4527
        %v4560 = vcvt.s32.f32 %v4528
        %v4561 = vcvt.s32.f32 %v4529
        %v4562 = vcvt.s32.f32 %v4530
        %v4563 = vcvt.s32.f32 %v4531
        %v4564 = vcvt.s32.f32 %v4532
        %v4565 = vcvt.s32.f32 %v4533
        %v4566 = vcvt.s32.f32 %v4534
        %v4567 = vcvt.s32.f32 %v4535
        %v4568 = vcvt.s32.f32 %v4536
        %v4569 = vcvt.s32.f32 %v4537
        %v4570 = vcvt.s32.f32 %v4538
        %v4571 = vcvt.s32.f32 %v4539
        %v4572 = vcvt.s32.f32 %v4540
        %v4573 = vcvt.s32.f32 %v4541
        %v4574 = vcvt.s32.f32 %v4542
        %v4575 = vcvt.s32.f32 %v4543
        %v4576 = vcvt.s32.f32 %v4544
        %v4577 = vcvt.s32.f32 %v4545
        %v4578 = vcvt.s32.f32 %v4546
        %v4579 = vcvt.s32.f32 %v4547
        %v4580 = vcvt.s32.f32 %v4548
        %v4581 = vcvt.s32.f32 %v4549
        %v4582 = vcvt.s32.f32 %v4550
        %v4583 = vcvt.s32.f32 %v4551
        %v4584 = vcvt.s32.f32 %v4552
        %v4585 = vadd.f32 %v4453, %v4553
        %v4586 = vadd.f32 %v4454, %v4554
        %v4587 = vadd.f32 %v4455, %v4555
        %v4588 = vadd.f32 %v4456, %v4556
        %v4589 = vadd.f32 %v4457, %v4557
        %v4590 = vadd.f32 %v4458, %v4558
        %v4591 = vadd.f32 %v4459, %v4559
        %v4592 = vadd.f32 %v4460, %v4560
        %v4593 = vadd.f32 %v4461, %v4561
        %v4594 = vadd.f32 %v4462, %v4562
        %v4595 = vadd.f32 %v4463, %v4563
        %v4596 = vadd.f32 %v4464, %v4564
        %v4597 = vadd.f32 %v4465, %v4565
        %v4598 = vadd.f32 %v4466, %v4566
        %v4599 = vadd.f32 %v4467, %v4567
        %v4600 = vadd.f32 %v4468, %v4568
        %v4601 = vadd.f32 %v4469, %v4569
        %v4602 = vadd.f32 %v4470, %v4570
        %v4603 = vadd.f32 %v4471, %v4571
        %v4604 = vadd.f32 %v4472, %v4572
        %v4605 = vadd.f32 %v4473, %v4573
        %v4606 = vadd.f32 %v4474, %v4574
        %v4607 = vadd.f32 %v4475, %v4575
        %v4608 = vadd.f32 %v4476, %v4576
        %v4609 = vadd.f32 %v4477, %v4577
        %v4610 = vadd.f32 %v4478, %v4578
        %v4611 = vadd.f32 %v4479, %v4579
        %v4612 = vadd.f32 %v4480, %v4580
        %v4613 = vadd.f32 %v4481, %v4581
        %v4614 = vadd.f32 %v4482, %v4582
        %v4615 = vadd.f32 %v4483, %v4583
        %v4616 = vadd.f32 %v4484, %v4584
        %v4617 = vld [vmem:[%s250 + $0x8] sm:$0x1]
        %v4618 = vunpack.c.0.s8 %v4617
        %v4619 = vcvt.s32.f32 %v4618
        %v4620 = vlaneseq
        %v4621 = vshrl.u32 %v4620, 7
        %v4622 = vsub.s32 0, %v4621
        %v4623 = vrot.slane %v4619, %v4622
        %vm4624 = vcmp.eq.f32.partialorder %v4623, %v337
        %vm4625 = vcmp.eq.f32.partialorder %v4623, %v338
        %vm4626 = vcmp.eq.f32.partialorder %v4623, %v339
        %vm4627 = vcmp.eq.f32.partialorder %v4623, %v340
        %vm4628 = vcmp.eq.f32.partialorder %v4623, %v341
        %vm4629 = vcmp.eq.f32.partialorder %v4623, %v342
        %vm4630 = vcmp.eq.f32.partialorder %v4623, %v343
        %vm4631 = vcmp.eq.f32.partialorder %v4623, %v344
        %vm4632 = vcmp.eq.f32.partialorder %v4623, %v345
        %vm4633 = vcmp.eq.f32.partialorder %v4623, %v346
        %vm4634 = vcmp.eq.f32.partialorder %v4623, %v347
        %vm4635 = vcmp.eq.f32.partialorder %v4623, %v348
        %vm4636 = vcmp.eq.f32.partialorder %v4623, %v349
        %vm4637 = vcmp.eq.f32.partialorder %v4623, %v350
        %vm4638 = vcmp.eq.f32.partialorder %v4623, %v351
        %vm4639 = vcmp.eq.f32.partialorder %v4623, %v352
        %vm4640 = vcmp.eq.f32.partialorder %v4623, %v353
        %vm4641 = vcmp.eq.f32.partialorder %v4623, %v354
        %vm4642 = vcmp.eq.f32.partialorder %v4623, %v355
        %vm4643 = vcmp.eq.f32.partialorder %v4623, %v356
        %vm4644 = vcmp.eq.f32.partialorder %v4623, %v357
        %vm4645 = vcmp.eq.f32.partialorder %v4623, %v358
        %vm4646 = vcmp.eq.f32.partialorder %v4623, %v359
        %vm4647 = vcmp.eq.f32.partialorder %v4623, %v360
        %vm4648 = vcmp.eq.f32.partialorder %v4623, %v361
        %vm4649 = vcmp.eq.f32.partialorder %v4623, %v362
        %vm4650 = vcmp.eq.f32.partialorder %v4623, %v363
        %vm4651 = vcmp.eq.f32.partialorder %v4623, %v364
        %vm4652 = vcmp.eq.f32.partialorder %v4623, %v365
        %vm4653 = vcmp.eq.f32.partialorder %v4623, %v366
        %vm4654 = vcmp.eq.f32.partialorder %v4623, %v367
        %vm4655 = vcmp.eq.f32.partialorder %v4623, %v368
        %v4656 = vsel %vm4624, 1, 0
        %v4657 = vsel %vm4625, 1, 0
        %v4658 = vsel %vm4626, 1, 0
        %v4659 = vsel %vm4627, 1, 0
        %v4660 = vsel %vm4628, 1, 0
        %v4661 = vsel %vm4629, 1, 0
        %v4662 = vsel %vm4630, 1, 0
        %v4663 = vsel %vm4631, 1, 0
        %v4664 = vsel %vm4632, 1, 0
        %v4665 = vsel %vm4633, 1, 0
        %v4666 = vsel %vm4634, 1, 0
        %v4667 = vsel %vm4635, 1, 0
        %v4668 = vsel %vm4636, 1, 0
        %v4669 = vsel %vm4637, 1, 0
        %v4670 = vsel %vm4638, 1, 0
        %v4671 = vsel %vm4639, 1, 0
        %v4672 = vsel %vm4640, 1, 0
        %v4673 = vsel %vm4641, 1, 0
        %v4674 = vsel %vm4642, 1, 0
        %v4675 = vsel %vm4643, 1, 0
        %v4676 = vsel %vm4644, 1, 0
        %v4677 = vsel %vm4645, 1, 0
        %v4678 = vsel %vm4646, 1, 0
        %v4679 = vsel %vm4647, 1, 0
        %v4680 = vsel %vm4648, 1, 0
        %v4681 = vsel %vm4649, 1, 0
        %v4682 = vsel %vm4650, 1, 0
        %v4683 = vsel %vm4651, 1, 0
        %v4684 = vsel %vm4652, 1, 0
        %v4685 = vsel %vm4653, 1, 0
        %v4686 = vsel %vm4654, 1, 0
        %v4687 = vsel %vm4655, 1, 0
        %v4688 = vcvt.s32.f32 %v4656
        %v4689 = vcvt.s32.f32 %v4657
        %v4690 = vcvt.s32.f32 %v4658
        %v4691 = vcvt.s32.f32 %v4659
        %v4692 = vcvt.s32.f32 %v4660
        %v4693 = vcvt.s32.f32 %v4661
        %v4694 = vcvt.s32.f32 %v4662
        %v4695 = vcvt.s32.f32 %v4663
        %v4696 = vcvt.s32.f32 %v4664
        %v4697 = vcvt.s32.f32 %v4665
        %v4698 = vcvt.s32.f32 %v4666
        %v4699 = vcvt.s32.f32 %v4667
        %v4700 = vcvt.s32.f32 %v4668
        %v4701 = vcvt.s32.f32 %v4669
        %v4702 = vcvt.s32.f32 %v4670
        %v4703 = vcvt.s32.f32 %v4671
        %v4704 = vcvt.s32.f32 %v4672
        %v4705 = vcvt.s32.f32 %v4673
        %v4706 = vcvt.s32.f32 %v4674
        %v4707 = vcvt.s32.f32 %v4675
        %v4708 = vcvt.s32.f32 %v4676
        %v4709 = vcvt.s32.f32 %v4677
        %v4710 = vcvt.s32.f32 %v4678
        %v4711 = vcvt.s32.f32 %v4679
        %v4712 = vcvt.s32.f32 %v4680
        %v4713 = vcvt.s32.f32 %v4681
        %v4714 = vcvt.s32.f32 %v4682
        %v4715 = vcvt.s32.f32 %v4683
        %v4716 = vcvt.s32.f32 %v4684
        %v4717 = vcvt.s32.f32 %v4685
        %v4718 = vcvt.s32.f32 %v4686
        %v4719 = vcvt.s32.f32 %v4687
        %v4720 = vadd.f32 %v4585, %v4688
        %v4721 = vadd.f32 %v4586, %v4689
        %v4722 = vadd.f32 %v4587, %v4690
        %v4723 = vadd.f32 %v4588, %v4691
        %v4724 = vadd.f32 %v4589, %v4692
        %v4725 = vadd.f32 %v4590, %v4693
        %v4726 = vadd.f32 %v4591, %v4694
        %v4727 = vadd.f32 %v4592, %v4695
        %v4728 = vadd.f32 %v4593, %v4696
        %v4729 = vadd.f32 %v4594, %v4697
        %v4730 = vadd.f32 %v4595, %v4698
        %v4731 = vadd.f32 %v4596, %v4699
        %v4732 = vadd.f32 %v4597, %v4700
        %v4733 = vadd.f32 %v4598, %v4701
        %v4734 = vadd.f32 %v4599, %v4702
        %v4735 = vadd.f32 %v4600, %v4703
        %v4736 = vadd.f32 %v4601, %v4704
        %v4737 = vadd.f32 %v4602, %v4705
        %v4738 = vadd.f32 %v4603, %v4706
        %v4739 = vadd.f32 %v4604, %v4707
        %v4740 = vadd.f32 %v4605, %v4708
        %v4741 = vadd.f32 %v4606, %v4709
        %v4742 = vadd.f32 %v4607, %v4710
        %v4743 = vadd.f32 %v4608, %v4711
        %v4744 = vadd.f32 %v4609, %v4712
        %v4745 = vadd.f32 %v4610, %v4713
        %v4746 = vadd.f32 %v4611, %v4714
        %v4747 = vadd.f32 %v4612, %v4715
        %v4748 = vadd.f32 %v4613, %v4716
        %v4749 = vadd.f32 %v4614, %v4717
        %v4750 = vadd.f32 %v4615, %v4718
        %v4751 = vadd.f32 %v4616, %v4719
        %v4752 = vlaneseq
        %v4753 = vshrl.u32 %v4752, 7
        %v4754 = vsub.s32 1, %v4753
        %v4755 = vrot.slane %v4619, %v4754
        %vm4756 = vcmp.eq.f32.partialorder %v4755, %v337
        %vm4757 = vcmp.eq.f32.partialorder %v4755, %v338
        %vm4758 = vcmp.eq.f32.partialorder %v4755, %v339
        %vm4759 = vcmp.eq.f32.partialorder %v4755, %v340
        %vm4760 = vcmp.eq.f32.partialorder %v4755, %v341
        %vm4761 = vcmp.eq.f32.partialorder %v4755, %v342
        %vm4762 = vcmp.eq.f32.partialorder %v4755, %v343
        %vm4763 = vcmp.eq.f32.partialorder %v4755, %v344
        %vm4764 = vcmp.eq.f32.partialorder %v4755, %v345
        %vm4765 = vcmp.eq.f32.partialorder %v4755, %v346
        %vm4766 = vcmp.eq.f32.partialorder %v4755, %v347
        %vm4767 = vcmp.eq.f32.partialorder %v4755, %v348
        %vm4768 = vcmp.eq.f32.partialorder %v4755, %v349
        %vm4769 = vcmp.eq.f32.partialorder %v4755, %v350
        %vm4770 = vcmp.eq.f32.partialorder %v4755, %v351
        %vm4771 = vcmp.eq.f32.partialorder %v4755, %v352
        %vm4772 = vcmp.eq.f32.partialorder %v4755, %v353
        %vm4773 = vcmp.eq.f32.partialorder %v4755, %v354
        %vm4774 = vcmp.eq.f32.partialorder %v4755, %v355
        %vm4775 = vcmp.eq.f32.partialorder %v4755, %v356
        %vm4776 = vcmp.eq.f32.partialorder %v4755, %v357
        %vm4777 = vcmp.eq.f32.partialorder %v4755, %v358
        %vm4778 = vcmp.eq.f32.partialorder %v4755, %v359
        %vm4779 = vcmp.eq.f32.partialorder %v4755, %v360
        %vm4780 = vcmp.eq.f32.partialorder %v4755, %v361
        %vm4781 = vcmp.eq.f32.partialorder %v4755, %v362
        %vm4782 = vcmp.eq.f32.partialorder %v4755, %v363
        %vm4783 = vcmp.eq.f32.partialorder %v4755, %v364
        %vm4784 = vcmp.eq.f32.partialorder %v4755, %v365
        %vm4785 = vcmp.eq.f32.partialorder %v4755, %v366
        %vm4786 = vcmp.eq.f32.partialorder %v4755, %v367
        %vm4787 = vcmp.eq.f32.partialorder %v4755, %v368
        %v4788 = vsel %vm4756, 1, 0
        %v4789 = vsel %vm4757, 1, 0
        %v4790 = vsel %vm4758, 1, 0
        %v4791 = vsel %vm4759, 1, 0
        %v4792 = vsel %vm4760, 1, 0
        %v4793 = vsel %vm4761, 1, 0
        %v4794 = vsel %vm4762, 1, 0
        %v4795 = vsel %vm4763, 1, 0
        %v4796 = vsel %vm4764, 1, 0
        %v4797 = vsel %vm4765, 1, 0
        %v4798 = vsel %vm4766, 1, 0
        %v4799 = vsel %vm4767, 1, 0
        %v4800 = vsel %vm4768, 1, 0
        %v4801 = vsel %vm4769, 1, 0
        %v4802 = vsel %vm4770, 1, 0
        %v4803 = vsel %vm4771, 1, 0
        %v4804 = vsel %vm4772, 1, 0
        %v4805 = vsel %vm4773, 1, 0
        %v4806 = vsel %vm4774, 1, 0
        %v4807 = vsel %vm4775, 1, 0
        %v4808 = vsel %vm4776, 1, 0
        %v4809 = vsel %vm4777, 1, 0
        %v4810 = vsel %vm4778, 1, 0
        %v4811 = vsel %vm4779, 1, 0
        %v4812 = vsel %vm4780, 1, 0
        %v4813 = vsel %vm4781, 1, 0
        %v4814 = vsel %vm4782, 1, 0
        %v4815 = vsel %vm4783, 1, 0
        %v4816 = vsel %vm4784, 1, 0
        %v4817 = vsel %vm4785, 1, 0
        %v4818 = vsel %vm4786, 1, 0
        %v4819 = vsel %vm4787, 1, 0
        %v4820 = vcvt.s32.f32 %v4788
        %v4821 = vcvt.s32.f32 %v4789
        %v4822 = vcvt.s32.f32 %v4790
        %v4823 = vcvt.s32.f32 %v4791
        %v4824 = vcvt.s32.f32 %v4792
        %v4825 = vcvt.s32.f32 %v4793
        %v4826 = vcvt.s32.f32 %v4794
        %v4827 = vcvt.s32.f32 %v4795
        %v4828 = vcvt.s32.f32 %v4796
        %v4829 = vcvt.s32.f32 %v4797
        %v4830 = vcvt.s32.f32 %v4798
        %v4831 = vcvt.s32.f32 %v4799
        %v4832 = vcvt.s32.f32 %v4800
        %v4833 = vcvt.s32.f32 %v4801
        %v4834 = vcvt.s32.f32 %v4802
        %v4835 = vcvt.s32.f32 %v4803
        %v4836 = vcvt.s32.f32 %v4804
        %v4837 = vcvt.s32.f32 %v4805
        %v4838 = vcvt.s32.f32 %v4806
        %v4839 = vcvt.s32.f32 %v4807
        %v4840 = vcvt.s32.f32 %v4808
        %v4841 = vcvt.s32.f32 %v4809
        %v4842 = vcvt.s32.f32 %v4810
        %v4843 = vcvt.s32.f32 %v4811
        %v4844 = vcvt.s32.f32 %v4812
        %v4845 = vcvt.s32.f32 %v4813
        %v4846 = vcvt.s32.f32 %v4814
        %v4847 = vcvt.s32.f32 %v4815
        %v4848 = vcvt.s32.f32 %v4816
        %v4849 = vcvt.s32.f32 %v4817
        %v4850 = vcvt.s32.f32 %v4818
        %v4851 = vcvt.s32.f32 %v4819
        %v4852 = vadd.f32 %v4720, %v4820
        %v4853 = vadd.f32 %v4721, %v4821
        %v4854 = vadd.f32 %v4722, %v4822
        %v4855 = vadd.f32 %v4723, %v4823
        %v4856 = vadd.f32 %v4724, %v4824
        %v4857 = vadd.f32 %v4725, %v4825
        %v4858 = vadd.f32 %v4726, %v4826
        %v4859 = vadd.f32 %v4727, %v4827
        %v4860 = vadd.f32 %v4728, %v4828
        %v4861 = vadd.f32 %v4729, %v4829
        %v4862 = vadd.f32 %v4730, %v4830
        %v4863 = vadd.f32 %v4731, %v4831
        %v4864 = vadd.f32 %v4732, %v4832
        %v4865 = vadd.f32 %v4733, %v4833
        %v4866 = vadd.f32 %v4734, %v4834
        %v4867 = vadd.f32 %v4735, %v4835
        %v4868 = vadd.f32 %v4736, %v4836
        %v4869 = vadd.f32 %v4737, %v4837
        %v4870 = vadd.f32 %v4738, %v4838
        %v4871 = vadd.f32 %v4739, %v4839
        %v4872 = vadd.f32 %v4740, %v4840
        %v4873 = vadd.f32 %v4741, %v4841
        %v4874 = vadd.f32 %v4742, %v4842
        %v4875 = vadd.f32 %v4743, %v4843
        %v4876 = vadd.f32 %v4744, %v4844
        %v4877 = vadd.f32 %v4745, %v4845
        %v4878 = vadd.f32 %v4746, %v4846
        %v4879 = vadd.f32 %v4747, %v4847
        %v4880 = vadd.f32 %v4748, %v4848
        %v4881 = vadd.f32 %v4749, %v4849
        %v4882 = vadd.f32 %v4750, %v4850
        %v4883 = vadd.f32 %v4751, %v4851
        %v4884 = vlaneseq
        %v4885 = vshrl.u32 %v4884, 7
        %v4886 = vsub.s32 2, %v4885
        %v4887 = vrot.slane %v4619, %v4886
        %vm4888 = vcmp.eq.f32.partialorder %v4887, %v337
        %vm4889 = vcmp.eq.f32.partialorder %v4887, %v338
        %vm4890 = vcmp.eq.f32.partialorder %v4887, %v339
        %vm4891 = vcmp.eq.f32.partialorder %v4887, %v340
        %vm4892 = vcmp.eq.f32.partialorder %v4887, %v341
        %vm4893 = vcmp.eq.f32.partialorder %v4887, %v342
        %vm4894 = vcmp.eq.f32.partialorder %v4887, %v343
        %vm4895 = vcmp.eq.f32.partialorder %v4887, %v344
        %vm4896 = vcmp.eq.f32.partialorder %v4887, %v345
        %vm4897 = vcmp.eq.f32.partialorder %v4887, %v346
        %vm4898 = vcmp.eq.f32.partialorder %v4887, %v347
        %vm4899 = vcmp.eq.f32.partialorder %v4887, %v348
        %vm4900 = vcmp.eq.f32.partialorder %v4887, %v349
        %vm4901 = vcmp.eq.f32.partialorder %v4887, %v350
        %vm4902 = vcmp.eq.f32.partialorder %v4887, %v351
        %vm4903 = vcmp.eq.f32.partialorder %v4887, %v352
        %vm4904 = vcmp.eq.f32.partialorder %v4887, %v353
        %vm4905 = vcmp.eq.f32.partialorder %v4887, %v354
        %vm4906 = vcmp.eq.f32.partialorder %v4887, %v355
        %vm4907 = vcmp.eq.f32.partialorder %v4887, %v356
        %vm4908 = vcmp.eq.f32.partialorder %v4887, %v357
        %vm4909 = vcmp.eq.f32.partialorder %v4887, %v358
        %vm4910 = vcmp.eq.f32.partialorder %v4887, %v359
        %vm4911 = vcmp.eq.f32.partialorder %v4887, %v360
        %vm4912 = vcmp.eq.f32.partialorder %v4887, %v361
        %vm4913 = vcmp.eq.f32.partialorder %v4887, %v362
        %vm4914 = vcmp.eq.f32.partialorder %v4887, %v363
        %vm4915 = vcmp.eq.f32.partialorder %v4887, %v364
        %vm4916 = vcmp.eq.f32.partialorder %v4887, %v365
        %vm4917 = vcmp.eq.f32.partialorder %v4887, %v366
        %vm4918 = vcmp.eq.f32.partialorder %v4887, %v367
        %vm4919 = vcmp.eq.f32.partialorder %v4887, %v368
        %v4920 = vsel %vm4888, 1, 0
        %v4921 = vsel %vm4889, 1, 0
        %v4922 = vsel %vm4890, 1, 0
        %v4923 = vsel %vm4891, 1, 0
        %v4924 = vsel %vm4892, 1, 0
        %v4925 = vsel %vm4893, 1, 0
        %v4926 = vsel %vm4894, 1, 0
        %v4927 = vsel %vm4895, 1, 0
        %v4928 = vsel %vm4896, 1, 0
        %v4929 = vsel %vm4897, 1, 0
        %v4930 = vsel %vm4898, 1, 0
        %v4931 = vsel %vm4899, 1, 0
        %v4932 = vsel %vm4900, 1, 0
        %v4933 = vsel %vm4901, 1, 0
        %v4934 = vsel %vm4902, 1, 0
        %v4935 = vsel %vm4903, 1, 0
        %v4936 = vsel %vm4904, 1, 0
        %v4937 = vsel %vm4905, 1, 0
        %v4938 = vsel %vm4906, 1, 0
        %v4939 = vsel %vm4907, 1, 0
        %v4940 = vsel %vm4908, 1, 0
        %v4941 = vsel %vm4909, 1, 0
        %v4942 = vsel %vm4910, 1, 0
        %v4943 = vsel %vm4911, 1, 0
        %v4944 = vsel %vm4912, 1, 0
        %v4945 = vsel %vm4913, 1, 0
        %v4946 = vsel %vm4914, 1, 0
        %v4947 = vsel %vm4915, 1, 0
        %v4948 = vsel %vm4916, 1, 0
        %v4949 = vsel %vm4917, 1, 0
        %v4950 = vsel %vm4918, 1, 0
        %v4951 = vsel %vm4919, 1, 0
        %v4952 = vcvt.s32.f32 %v4920
        %v4953 = vcvt.s32.f32 %v4921
        %v4954 = vcvt.s32.f32 %v4922
        %v4955 = vcvt.s32.f32 %v4923
        %v4956 = vcvt.s32.f32 %v4924
        %v4957 = vcvt.s32.f32 %v4925
        %v4958 = vcvt.s32.f32 %v4926
        %v4959 = vcvt.s32.f32 %v4927
        %v4960 = vcvt.s32.f32 %v4928
        %v4961 = vcvt.s32.f32 %v4929
        %v4962 = vcvt.s32.f32 %v4930
        %v4963 = vcvt.s32.f32 %v4931
        %v4964 = vcvt.s32.f32 %v4932
        %v4965 = vcvt.s32.f32 %v4933
        %v4966 = vcvt.s32.f32 %v4934
        %v4967 = vcvt.s32.f32 %v4935
        %v4968 = vcvt.s32.f32 %v4936
        %v4969 = vcvt.s32.f32 %v4937
        %v4970 = vcvt.s32.f32 %v4938
        %v4971 = vcvt.s32.f32 %v4939
        %v4972 = vcvt.s32.f32 %v4940
        %v4973 = vcvt.s32.f32 %v4941
        %v4974 = vcvt.s32.f32 %v4942
        %v4975 = vcvt.s32.f32 %v4943
        %v4976 = vcvt.s32.f32 %v4944
        %v4977 = vcvt.s32.f32 %v4945
        %v4978 = vcvt.s32.f32 %v4946
        %v4979 = vcvt.s32.f32 %v4947
        %v4980 = vcvt.s32.f32 %v4948
        %v4981 = vcvt.s32.f32 %v4949
        %v4982 = vcvt.s32.f32 %v4950
        %v4983 = vcvt.s32.f32 %v4951
        %v4984 = vadd.f32 %v4852, %v4952
        %v4985 = vadd.f32 %v4853, %v4953
        %v4986 = vadd.f32 %v4854, %v4954
        %v4987 = vadd.f32 %v4855, %v4955
        %v4988 = vadd.f32 %v4856, %v4956
        %v4989 = vadd.f32 %v4857, %v4957
        %v4990 = vadd.f32 %v4858, %v4958
        %v4991 = vadd.f32 %v4859, %v4959
        %v4992 = vadd.f32 %v4860, %v4960
        %v4993 = vadd.f32 %v4861, %v4961
        %v4994 = vadd.f32 %v4862, %v4962
        %v4995 = vadd.f32 %v4863, %v4963
        %v4996 = vadd.f32 %v4864, %v4964
        %v4997 = vadd.f32 %v4865, %v4965
        %v4998 = vadd.f32 %v4866, %v4966
        %v4999 = vadd.f32 %v4867, %v4967
        %v5000 = vadd.f32 %v4868, %v4968
        %v5001 = vadd.f32 %v4869, %v4969
        %v5002 = vadd.f32 %v4870, %v4970
        %v5003 = vadd.f32 %v4871, %v4971
        %v5004 = vadd.f32 %v4872, %v4972
        %v5005 = vadd.f32 %v4873, %v4973
        %v5006 = vadd.f32 %v4874, %v4974
        %v5007 = vadd.f32 %v4875, %v4975
        %v5008 = vadd.f32 %v4876, %v4976
        %v5009 = vadd.f32 %v4877, %v4977
        %v5010 = vadd.f32 %v4878, %v4978
        %v5011 = vadd.f32 %v4879, %v4979
        %v5012 = vadd.f32 %v4880, %v4980
        %v5013 = vadd.f32 %v4881, %v4981
        %v5014 = vadd.f32 %v4882, %v4982
        %v5015 = vadd.f32 %v4883, %v4983
        %v5016 = vlaneseq
        %v5017 = vshrl.u32 %v5016, 7
        %v5018 = vsub.s32 3, %v5017
        %v5019 = vrot.slane %v4619, %v5018
        %vm5020 = vcmp.eq.f32.partialorder %v5019, %v337
        %vm5021 = vcmp.eq.f32.partialorder %v5019, %v338
        %vm5022 = vcmp.eq.f32.partialorder %v5019, %v339
        %vm5023 = vcmp.eq.f32.partialorder %v5019, %v340
        %vm5024 = vcmp.eq.f32.partialorder %v5019, %v341
        %vm5025 = vcmp.eq.f32.partialorder %v5019, %v342
        %vm5026 = vcmp.eq.f32.partialorder %v5019, %v343
        %vm5027 = vcmp.eq.f32.partialorder %v5019, %v344
        %vm5028 = vcmp.eq.f32.partialorder %v5019, %v345
        %vm5029 = vcmp.eq.f32.partialorder %v5019, %v346
        %vm5030 = vcmp.eq.f32.partialorder %v5019, %v347
        %vm5031 = vcmp.eq.f32.partialorder %v5019, %v348
        %vm5032 = vcmp.eq.f32.partialorder %v5019, %v349
        %vm5033 = vcmp.eq.f32.partialorder %v5019, %v350
        %vm5034 = vcmp.eq.f32.partialorder %v5019, %v351
        %vm5035 = vcmp.eq.f32.partialorder %v5019, %v352
        %vm5036 = vcmp.eq.f32.partialorder %v5019, %v353
        %vm5037 = vcmp.eq.f32.partialorder %v5019, %v354
        %vm5038 = vcmp.eq.f32.partialorder %v5019, %v355
        %vm5039 = vcmp.eq.f32.partialorder %v5019, %v356
        %vm5040 = vcmp.eq.f32.partialorder %v5019, %v357
        %vm5041 = vcmp.eq.f32.partialorder %v5019, %v358
        %vm5042 = vcmp.eq.f32.partialorder %v5019, %v359
        %vm5043 = vcmp.eq.f32.partialorder %v5019, %v360
        %vm5044 = vcmp.eq.f32.partialorder %v5019, %v361
        %vm5045 = vcmp.eq.f32.partialorder %v5019, %v362
        %vm5046 = vcmp.eq.f32.partialorder %v5019, %v363
        %vm5047 = vcmp.eq.f32.partialorder %v5019, %v364
        %vm5048 = vcmp.eq.f32.partialorder %v5019, %v365
        %vm5049 = vcmp.eq.f32.partialorder %v5019, %v366
        %vm5050 = vcmp.eq.f32.partialorder %v5019, %v367
        %vm5051 = vcmp.eq.f32.partialorder %v5019, %v368
        %v5052 = vsel %vm5020, 1, 0
        %v5053 = vsel %vm5021, 1, 0
        %v5054 = vsel %vm5022, 1, 0
        %v5055 = vsel %vm5023, 1, 0
        %v5056 = vsel %vm5024, 1, 0
        %v5057 = vsel %vm5025, 1, 0
        %v5058 = vsel %vm5026, 1, 0
        %v5059 = vsel %vm5027, 1, 0
        %v5060 = vsel %vm5028, 1, 0
        %v5061 = vsel %vm5029, 1, 0
        %v5062 = vsel %vm5030, 1, 0
        %v5063 = vsel %vm5031, 1, 0
        %v5064 = vsel %vm5032, 1, 0
        %v5065 = vsel %vm5033, 1, 0
        %v5066 = vsel %vm5034, 1, 0
        %v5067 = vsel %vm5035, 1, 0
        %v5068 = vsel %vm5036, 1, 0
        %v5069 = vsel %vm5037, 1, 0
        %v5070 = vsel %vm5038, 1, 0
        %v5071 = vsel %vm5039, 1, 0
        %v5072 = vsel %vm5040, 1, 0
        %v5073 = vsel %vm5041, 1, 0
        %v5074 = vsel %vm5042, 1, 0
        %v5075 = vsel %vm5043, 1, 0
        %v5076 = vsel %vm5044, 1, 0
        %v5077 = vsel %vm5045, 1, 0
        %v5078 = vsel %vm5046, 1, 0
        %v5079 = vsel %vm5047, 1, 0
        %v5080 = vsel %vm5048, 1, 0
        %v5081 = vsel %vm5049, 1, 0
        %v5082 = vsel %vm5050, 1, 0
        %v5083 = vsel %vm5051, 1, 0
        %v5084 = vcvt.s32.f32 %v5052
        %v5085 = vcvt.s32.f32 %v5053
        %v5086 = vcvt.s32.f32 %v5054
        %v5087 = vcvt.s32.f32 %v5055
        %v5088 = vcvt.s32.f32 %v5056
        %v5089 = vcvt.s32.f32 %v5057
        %v5090 = vcvt.s32.f32 %v5058
        %v5091 = vcvt.s32.f32 %v5059
        %v5092 = vcvt.s32.f32 %v5060
        %v5093 = vcvt.s32.f32 %v5061
        %v5094 = vcvt.s32.f32 %v5062
        %v5095 = vcvt.s32.f32 %v5063
        %v5096 = vcvt.s32.f32 %v5064
        %v5097 = vcvt.s32.f32 %v5065
        %v5098 = vcvt.s32.f32 %v5066
        %v5099 = vcvt.s32.f32 %v5067
        %v5100 = vcvt.s32.f32 %v5068
        %v5101 = vcvt.s32.f32 %v5069
        %v5102 = vcvt.s32.f32 %v5070
        %v5103 = vcvt.s32.f32 %v5071
        %v5104 = vcvt.s32.f32 %v5072
        %v5105 = vcvt.s32.f32 %v5073
        %v5106 = vcvt.s32.f32 %v5074
        %v5107 = vcvt.s32.f32 %v5075
        %v5108 = vcvt.s32.f32 %v5076
        %v5109 = vcvt.s32.f32 %v5077
        %v5110 = vcvt.s32.f32 %v5078
        %v5111 = vcvt.s32.f32 %v5079
        %v5112 = vcvt.s32.f32 %v5080
        %v5113 = vcvt.s32.f32 %v5081
        %v5114 = vcvt.s32.f32 %v5082
        %v5115 = vcvt.s32.f32 %v5083
        %v5116 = vadd.f32 %v4984, %v5084
        %v5117 = vadd.f32 %v4985, %v5085
        %v5118 = vadd.f32 %v4986, %v5086
        %v5119 = vadd.f32 %v4987, %v5087
        %v5120 = vadd.f32 %v4988, %v5088
        %v5121 = vadd.f32 %v4989, %v5089
        %v5122 = vadd.f32 %v4990, %v5090
        %v5123 = vadd.f32 %v4991, %v5091
        %v5124 = vadd.f32 %v4992, %v5092
        %v5125 = vadd.f32 %v4993, %v5093
        %v5126 = vadd.f32 %v4994, %v5094
        %v5127 = vadd.f32 %v4995, %v5095
        %v5128 = vadd.f32 %v4996, %v5096
        %v5129 = vadd.f32 %v4997, %v5097
        %v5130 = vadd.f32 %v4998, %v5098
        %v5131 = vadd.f32 %v4999, %v5099
        %v5132 = vadd.f32 %v5000, %v5100
        %v5133 = vadd.f32 %v5001, %v5101
        %v5134 = vadd.f32 %v5002, %v5102
        %v5135 = vadd.f32 %v5003, %v5103
        %v5136 = vadd.f32 %v5004, %v5104
        %v5137 = vadd.f32 %v5005, %v5105
        %v5138 = vadd.f32 %v5006, %v5106
        %v5139 = vadd.f32 %v5007, %v5107
        %v5140 = vadd.f32 %v5008, %v5108
        %v5141 = vadd.f32 %v5009, %v5109
        %v5142 = vadd.f32 %v5010, %v5110
        %v5143 = vadd.f32 %v5011, %v5111
        %v5144 = vadd.f32 %v5012, %v5112
        %v5145 = vadd.f32 %v5013, %v5113
        %v5146 = vadd.f32 %v5014, %v5114
        %v5147 = vadd.f32 %v5015, %v5115
        %v5148 = vpack.c.bf16 %v5117, %v5116
        %v5149 = vpack.c.bf16 %v5119, %v5118
        %v5150 = vpack.c.bf16 %v5121, %v5120
        %v5151 = vpack.c.bf16 %v5123, %v5122
        %v5152 = vpack.c.bf16 %v5125, %v5124
        %v5153 = vpack.c.bf16 %v5127, %v5126
        %v5154 = vpack.c.bf16 %v5129, %v5128
        %v5155 = vpack.c.bf16 %v5131, %v5130
        %v5156 = vpack.c.bf16 %v5133, %v5132
        %v5157 = vpack.c.bf16 %v5135, %v5134
        %v5158 = vpack.c.bf16 %v5137, %v5136
        %v5159 = vpack.c.bf16 %v5139, %v5138
        %v5160 = vpack.c.bf16 %v5141, %v5140
        %v5161 = vpack.c.bf16 %v5143, %v5142
        %v5162 = vpack.c.bf16 %v5145, %v5144
        %v5163 = vpack.c.bf16 %v5147, %v5146
        %v5164 = vld [vmem:[%s1] sm:$0xf]
        %v5165 = vld [vmem:[%s1 + $0x4] sm:$0xf]
        %v5166 = vld [vmem:[%s1 + $0x8] sm:$0xf]
        %v5167 = vld [vmem:[%s1 + $0xc] sm:$0xf]
        %v5168 = vld [vmem:[%s1 + $0x10] sm:$0xf]
        %v5169 = vld [vmem:[%s1 + $0x14] sm:$0xf]
        %v5170 = vld [vmem:[%s1 + $0x18] sm:$0xf]
        %v5171 = vld [vmem:[%s1 + $0x1c] sm:$0xf]
        %v5172 = vld [vmem:[%s1 + $0x20] sm:$0xf]
        %v5173 = vld [vmem:[%s1 + $0x24] sm:$0xf]
        %v5174 = vld [vmem:[%s1 + $0x28] sm:$0xf]
        %v5175 = vld [vmem:[%s1 + $0x2c] sm:$0xf]
        %v5176 = vld [vmem:[%s1 + $0x30] sm:$0xf]
        %v5177 = vld [vmem:[%s1 + $0x34] sm:$0xf]
        %v5178 = vld [vmem:[%s1 + $0x38] sm:$0xf]
        %v5179 = vld [vmem:[%s1 + $0x3c] sm:$0xf]
        %v5180 = vld [vmem:[%s1 + $0x40] sm:$0xf]
        %v5181 = vld [vmem:[%s1 + $0x44] sm:$0xf]
        %v5182 = vld [vmem:[%s1 + $0x48] sm:$0xf]
        %v5183 = vld [vmem:[%s1 + $0x4c] sm:$0xf]
        %v5184 = vld [vmem:[%s1 + $0x50] sm:$0xf]
        %v5185 = vld [vmem:[%s1 + $0x54] sm:$0xf]
        %v5186 = vld [vmem:[%s1 + $0x58] sm:$0xf]
        %v5187 = vld [vmem:[%s1 + $0x5c] sm:$0xf]
        %v5188 = vld [vmem:[%s1 + $0x60] sm:$0xf]
        %v5189 = vld [vmem:[%s1 + $0x64] sm:$0xf]
        %v5190 = vld [vmem:[%s1 + $0x68] sm:$0xf]
        %v5191 = vld [vmem:[%s1 + $0x6c] sm:$0xf]
        %v5192 = vld [vmem:[%s1 + $0x70] sm:$0xf]
        %v5193 = vld [vmem:[%s1 + $0x74] sm:$0xf]
        %v5194 = vld [vmem:[%s1 + $0x78] sm:$0xf]
        %v5195 = vld [vmem:[%s1 + $0x7c] sm:$0xf]
        %v5196 = vld [vmem:[%s2] sm:$0xf]
        %v5197 = vld [vmem:[%s2 + $0x4] sm:$0xf]
        %v5198 = vld [vmem:[%s2 + $0x8] sm:$0xf]
        %v5199 = vld [vmem:[%s2 + $0xc] sm:$0xf]
        %v5200 = vld [vmem:[%s2 + $0x10] sm:$0xf]
        %v5201 = vld [vmem:[%s2 + $0x14] sm:$0xf]
        %v5202 = vld [vmem:[%s2 + $0x18] sm:$0xf]
        %v5203 = vld [vmem:[%s2 + $0x1c] sm:$0xf]
        %v5204 = vld [vmem:[%s2 + $0x20] sm:$0xf]
        %v5205 = vld [vmem:[%s2 + $0x24] sm:$0xf]
        %v5206 = vld [vmem:[%s2 + $0x28] sm:$0xf]
        %v5207 = vld [vmem:[%s2 + $0x2c] sm:$0xf]
        %v5208 = vld [vmem:[%s2 + $0x30] sm:$0xf]
        %v5209 = vld [vmem:[%s2 + $0x34] sm:$0xf]
        %v5210 = vld [vmem:[%s2 + $0x38] sm:$0xf]
        %v5211 = vld [vmem:[%s2 + $0x3c] sm:$0xf]
        %v5212 = vld [vmem:[%s2 + $0x40] sm:$0xf]
        %v5213 = vld [vmem:[%s2 + $0x44] sm:$0xf]
        %v5214 = vld [vmem:[%s2 + $0x48] sm:$0xf]
        %v5215 = vld [vmem:[%s2 + $0x4c] sm:$0xf]
        %v5216 = vld [vmem:[%s2 + $0x50] sm:$0xf]
        %v5217 = vld [vmem:[%s2 + $0x54] sm:$0xf]
        %v5218 = vld [vmem:[%s2 + $0x58] sm:$0xf]
        %v5219 = vld [vmem:[%s2 + $0x5c] sm:$0xf]
        %v5220 = vld [vmem:[%s2 + $0x60] sm:$0xf]
        %v5221 = vld [vmem:[%s2 + $0x64] sm:$0xf]
        %v5222 = vld [vmem:[%s2 + $0x68] sm:$0xf]
        %v5223 = vld [vmem:[%s2 + $0x6c] sm:$0xf]
        %v5224 = vld [vmem:[%s2 + $0x70] sm:$0xf]
        %v5225 = vld [vmem:[%s2 + $0x74] sm:$0xf]
        %v5226 = vld [vmem:[%s2 + $0x78] sm:$0xf]
        %v5227 = vld [vmem:[%s2 + $0x7c] sm:$0xf]
        %v5260 = vunpack.c.l.b16 %v5196
        %v5261 = vunpack.c.l.b16 %v5197
        %v5262 = vunpack.c.l.b16 %v5198
        %v5263 = vunpack.c.l.b16 %v5199
        %v5264 = vunpack.c.l.b16 %v5200
        %v5265 = vunpack.c.l.b16 %v5201
        %v5266 = vunpack.c.l.b16 %v5202
        %v5267 = vunpack.c.l.b16 %v5203
        %v5268 = vunpack.c.l.b16 %v5204
        %v5269 = vunpack.c.l.b16 %v5205
        %v5270 = vunpack.c.l.b16 %v5206
        %v5271 = vunpack.c.l.b16 %v5207
        %v5272 = vunpack.c.l.b16 %v5208
        %v5273 = vunpack.c.l.b16 %v5209
        %v5274 = vunpack.c.l.b16 %v5210
        %v5275 = vunpack.c.l.b16 %v5211
        %v5276 = vunpack.c.l.b16 %v5212
        %v5277 = vunpack.c.l.b16 %v5213
        %v5278 = vunpack.c.l.b16 %v5214
        %v5279 = vunpack.c.l.b16 %v5215
        %v5280 = vunpack.c.l.b16 %v5216
        %v5281 = vunpack.c.l.b16 %v5217
        %v5282 = vunpack.c.l.b16 %v5218
        %v5283 = vunpack.c.l.b16 %v5219
        %v5284 = vunpack.c.l.b16 %v5220
        %v5285 = vunpack.c.l.b16 %v5221
        %v5286 = vunpack.c.l.b16 %v5222
        %v5287 = vunpack.c.l.b16 %v5223
        %v5288 = vunpack.c.l.b16 %v5224
        %v5289 = vunpack.c.l.b16 %v5225
        %v5290 = vunpack.c.l.b16 %v5226
        %v5291 = vunpack.c.l.b16 %v5227
        %v5292 = vpack.c.b16 %v5261, %v5260
        %v5293 = vpack.c.b16 %v5263, %v5262
        %v5294 = vpack.c.b16 %v5265, %v5264
        %v5295 = vpack.c.b16 %v5267, %v5266
        %v5296 = vpack.c.b16 %v5269, %v5268
        %v5297 = vpack.c.b16 %v5271, %v5270
        %v5298 = vpack.c.b16 %v5273, %v5272
        %v5299 = vpack.c.b16 %v5275, %v5274
        %v5300 = vpack.c.b16 %v5277, %v5276
        %v5301 = vpack.c.b16 %v5279, %v5278
        %v5302 = vpack.c.b16 %v5281, %v5280
        %v5303 = vpack.c.b16 %v5283, %v5282
        %v5304 = vpack.c.b16 %v5285, %v5284
        %v5305 = vpack.c.b16 %v5287, %v5286
        %v5306 = vpack.c.b16 %v5289, %v5288
        %v5307 = vpack.c.b16 %v5291, %v5290
        %5324 = vxpose.xlu0.c.b16.start [1/8] %v5292, 128
        %5325 = vxpose.xlu0.c.b16.cont [2/8] %v5293, 128
        %5326 = vxpose.xlu0.c.b16.cont [3/8] %v5294, 128
        %5327 = vxpose.xlu0.c.b16.cont [4/8] %v5295, 128
        %5328 = vxpose.xlu0.c.b16.cont [5/8] %v5296, 128
        %5329 = vxpose.xlu0.c.b16.cont [6/8] %v5297, 128
        %5330 = vxpose.xlu0.c.b16.cont [7/8] %v5298, 128
        %5331 = vxpose.xlu0.c.b16.end [8/8] %v5299, 128
        %v5332 = vpop.trf.xlu0
        %v5333 = vpop.trf.xlu0
        %v5334 = vpop.trf.xlu0
        %v5335 = vpop.trf.xlu0
        %v5336 = vpop.trf.xlu0
        %v5337 = vpop.trf.xlu0
        %v5338 = vpop.trf.xlu0
        %v5339 = vpop.trf.xlu0
        %5340 = vxpose.xlu0.c.b16.start [1/8] %v5300, 128
        %5341 = vxpose.xlu0.c.b16.cont [2/8] %v5301, 128
        %5342 = vxpose.xlu0.c.b16.cont [3/8] %v5302, 128
        %5343 = vxpose.xlu0.c.b16.cont [4/8] %v5303, 128
        %5344 = vxpose.xlu0.c.b16.cont [5/8] %v5304, 128
        %5345 = vxpose.xlu0.c.b16.cont [6/8] %v5305, 128
        %5346 = vxpose.xlu0.c.b16.cont [7/8] %v5306, 128
        %5347 = vxpose.xlu0.c.b16.end [8/8] %v5307, 128
        %v5348 = vpop.trf.xlu0
        %v5349 = vpop.trf.xlu0
        %v5350 = vpop.trf.xlu0
        %v5351 = vpop.trf.xlu0
        %v5352 = vpop.trf.xlu0
        %v5353 = vpop.trf.xlu0
        %v5354 = vpop.trf.xlu0
        %v5355 = vpop.trf.xlu0
        %5356 = vmatprep.subr.bf16.mxu0 0
        %5357 = vmatpush1.bf16.msra.mxu0 %v5155
        %5358 = vmatprep.subr.bf16.mxu0 0
        %5359 = vmatpush1.bf16.msra.mxu0 %v5154
        %5360 = vmatprep.subr.bf16.mxu0 0
        %5361 = vmatpush1.bf16.msra.mxu0 %v5153
        %5362 = vmatprep.subr.bf16.mxu0 0
        %5363 = vmatpush1.bf16.msra.mxu0 %v5152
        %5364 = vmatprep.subr.bf16.mxu0 0
        %5365 = vmatpush1.bf16.msra.mxu0 %v5151
        %5366 = vmatprep.subr.bf16.mxu0 0
        %5367 = vmatpush1.bf16.msra.mxu0 %v5150
        %5368 = vmatprep.subr.bf16.mxu0 0
        %5369 = vmatpush1.bf16.msra.mxu0 %v5149
        %5370 = vmatprep.subr.bf16.mxu0 0
        %5371 = vmatpush1.bf16.msra.mxu0 %v5148
        %5372 = vmatprep.subr.bf16.mxu0 0
        %5373 = vmatpush2.bf16.msra.mxu0 %v5163
        %5374 = vmatprep.subr.bf16.mxu0 0
        %5375 = vmatpush2.bf16.msra.mxu0 %v5162
        %5376 = vmatprep.subr.bf16.mxu0 0
        %5377 = vmatpush2.bf16.msra.mxu0 %v5161
        %5378 = vmatprep.subr.bf16.mxu0 0
        %5379 = vmatpush2.bf16.msra.mxu0 %v5160
        %5380 = vmatprep.subr.bf16.mxu0 0
        %5381 = vmatpush2.bf16.msra.mxu0 %v5159
        %5382 = vmatprep.subr.bf16.mxu0 0
        %5383 = vmatpush2.bf16.msra.mxu0 %v5158
        %5384 = vmatprep.subr.bf16.mxu0 0
        %5385 = vmatpush2.bf16.msra.mxu0 %v5157
        %5386 = vmatprep.subr.bf16.mxu0 0
        %5387 = vmatpush2.bf16.msra.mxu0 %v5156
        %5388 = vmatprep.mubr.bf16.mxu0 %v5348
        %5389 = vmatmul.mubr.bf16.gmra.mxu0 %v5332
        %v5390 = vpop.f32.mrf.mxu0
        %v5391 = vadd.f32 0.0, %v5390
        %v5392 = vpop.f32.mrf.mxu0
        %v5393 = vpop.f32.mrf.mxu0
        %v5394 = vpop.f32.mrf.mxu0
        %5395 = vdwg.mxu0
        %v5428 = vunpack.c.l.b16 %v5164
        %v5429 = vunpack.c.l.b16 %v5165
        %v5430 = vunpack.c.l.b16 %v5166
        %v5431 = vunpack.c.l.b16 %v5167
        %v5432 = vunpack.c.l.b16 %v5168
        %v5433 = vunpack.c.l.b16 %v5169
        %v5434 = vunpack.c.l.b16 %v5170
        %v5435 = vunpack.c.l.b16 %v5171
        %v5436 = vunpack.c.l.b16 %v5172
        %v5437 = vunpack.c.l.b16 %v5173
        %v5438 = vunpack.c.l.b16 %v5174
        %v5439 = vunpack.c.l.b16 %v5175
        %v5440 = vunpack.c.l.b16 %v5176
        %v5441 = vunpack.c.l.b16 %v5177
        %v5442 = vunpack.c.l.b16 %v5178
        %v5443 = vunpack.c.l.b16 %v5179
        %v5444 = vunpack.c.l.b16 %v5180
        %v5445 = vunpack.c.l.b16 %v5181
        %v5446 = vunpack.c.l.b16 %v5182
        %v5447 = vunpack.c.l.b16 %v5183
        %v5448 = vunpack.c.l.b16 %v5184
        %v5449 = vunpack.c.l.b16 %v5185
        %v5450 = vunpack.c.l.b16 %v5186
        %v5451 = vunpack.c.l.b16 %v5187
        %v5452 = vunpack.c.l.b16 %v5188
        %v5453 = vunpack.c.l.b16 %v5189
        %v5454 = vunpack.c.l.b16 %v5190
        %v5455 = vunpack.c.l.b16 %v5191
        %v5456 = vunpack.c.l.b16 %v5192
        %v5457 = vunpack.c.l.b16 %v5193
        %v5458 = vunpack.c.l.b16 %v5194
        %v5459 = vunpack.c.l.b16 %v5195
        %v5460 = vpack.c.b16 %v5429, %v5428
        %v5461 = vpack.c.b16 %v5431, %v5430
        %v5462 = vpack.c.b16 %v5433, %v5432
        %v5463 = vpack.c.b16 %v5435, %v5434
        %v5464 = vpack.c.b16 %v5437, %v5436
        %v5465 = vpack.c.b16 %v5439, %v5438
        %v5466 = vpack.c.b16 %v5441, %v5440
        %v5467 = vpack.c.b16 %v5443, %v5442
        %v5468 = vpack.c.b16 %v5445, %v5444
        %v5469 = vpack.c.b16 %v5447, %v5446
        %v5470 = vpack.c.b16 %v5449, %v5448
        %v5471 = vpack.c.b16 %v5451, %v5450
        %v5472 = vpack.c.b16 %v5453, %v5452
        %v5473 = vpack.c.b16 %v5455, %v5454
        %v5474 = vpack.c.b16 %v5457, %v5456
        %v5475 = vpack.c.b16 %v5459, %v5458
        %5492 = vxpose.xlu0.c.b16.start [1/8] %v5460, 128
        %5493 = vxpose.xlu0.c.b16.cont [2/8] %v5461, 128
        %5494 = vxpose.xlu0.c.b16.cont [3/8] %v5462, 128
        %5495 = vxpose.xlu0.c.b16.cont [4/8] %v5463, 128
        %5496 = vxpose.xlu0.c.b16.cont [5/8] %v5464, 128
        %5497 = vxpose.xlu0.c.b16.cont [6/8] %v5465, 128
        %5498 = vxpose.xlu0.c.b16.cont [7/8] %v5466, 128
        %5499 = vxpose.xlu0.c.b16.end [8/8] %v5467, 128
        %v5500 = vpop.trf.xlu0
        %v5501 = vpop.trf.xlu0
        %v5502 = vpop.trf.xlu0
        %v5503 = vpop.trf.xlu0
        %v5504 = vpop.trf.xlu0
        %v5505 = vpop.trf.xlu0
        %v5506 = vpop.trf.xlu0
        %v5507 = vpop.trf.xlu0
        %5508 = vxpose.xlu0.c.b16.start [1/8] %v5468, 128
        %5509 = vxpose.xlu0.c.b16.cont [2/8] %v5469, 128
        %5510 = vxpose.xlu0.c.b16.cont [3/8] %v5470, 128
        %5511 = vxpose.xlu0.c.b16.cont [4/8] %v5471, 128
        %5512 = vxpose.xlu0.c.b16.cont [5/8] %v5472, 128
        %5513 = vxpose.xlu0.c.b16.cont [6/8] %v5473, 128
        %5514 = vxpose.xlu0.c.b16.cont [7/8] %v5474, 128
        %5515 = vxpose.xlu0.c.b16.end [8/8] %v5475, 128
        %v5516 = vpop.trf.xlu0
        %v5517 = vpop.trf.xlu0
        %v5518 = vpop.trf.xlu0
        %v5519 = vpop.trf.xlu0
        %v5520 = vpop.trf.xlu0
        %v5521 = vpop.trf.xlu0
        %v5522 = vpop.trf.xlu0
        %v5523 = vpop.trf.xlu0
        %5524 = vmatprep.subr.bf16.mxu0 0
        %5525 = vmatpush1.bf16.msra.mxu0 %v5155
        %5526 = vmatprep.subr.bf16.mxu0 0
        %5527 = vmatpush1.bf16.msra.mxu0 %v5154
        %5528 = vmatprep.subr.bf16.mxu0 0
        %5529 = vmatpush1.bf16.msra.mxu0 %v5153
        %5530 = vmatprep.subr.bf16.mxu0 0
        %5531 = vmatpush1.bf16.msra.mxu0 %v5152
        %5532 = vmatprep.subr.bf16.mxu0 0
        %5533 = vmatpush1.bf16.msra.mxu0 %v5151
        %5534 = vmatprep.subr.bf16.mxu0 0
        %5535 = vmatpush1.bf16.msra.mxu0 %v5150
        %5536 = vmatprep.subr.bf16.mxu0 0
        %5537 = vmatpush1.bf16.msra.mxu0 %v5149
        %5538 = vmatprep.subr.bf16.mxu0 0
        %5539 = vmatpush1.bf16.msra.mxu0 %v5148
        %5540 = vmatprep.subr.bf16.mxu0 0
        %5541 = vmatpush2.bf16.msra.mxu0 %v5163
        %5542 = vmatprep.subr.bf16.mxu0 0
        %5543 = vmatpush2.bf16.msra.mxu0 %v5162
        %5544 = vmatprep.subr.bf16.mxu0 0
        %5545 = vmatpush2.bf16.msra.mxu0 %v5161
        %5546 = vmatprep.subr.bf16.mxu0 0
        %5547 = vmatpush2.bf16.msra.mxu0 %v5160
        %5548 = vmatprep.subr.bf16.mxu0 0
        %5549 = vmatpush2.bf16.msra.mxu0 %v5159
        %5550 = vmatprep.subr.bf16.mxu0 0
        %5551 = vmatpush2.bf16.msra.mxu0 %v5158
        %5552 = vmatprep.subr.bf16.mxu0 0
        %5553 = vmatpush2.bf16.msra.mxu0 %v5157
        %5554 = vmatprep.subr.bf16.mxu0 0
        %5555 = vmatpush2.bf16.msra.mxu0 %v5156
        %5556 = vmatprep.mubr.bf16.mxu0 %v5516
        %5557 = vmatmul.mubr.bf16.gmra.mxu0 %v5500
        %v5558 = vpop.f32.mrf.mxu0
        %v5559 = vadd.f32 %v5391, %v5558
        %v5560 = vpop.f32.mrf.mxu0
        %v5561 = vpop.f32.mrf.mxu0
        %v5562 = vpop.f32.mrf.mxu0
        %5563 = vdwg.mxu0
        %v5564 = vld [vmem:[%s3] sm:$0xff]
        %v5565 = vadd.f32 %v5559, %v5564
        %5566 = vst [vmem:[%s272] sm:$0xff] %v5565
        %s5567 = sand.u32 %s131, 1
        %s5568 = scalar_lea.sflag [#allocation4], %s5567
        %s5569 = sand.u32 %s131, 1
        %s5570 = smul.addr %s5569, 8
        %s5571 = scalar_lea.vmem [#allocation3], %s5570
        // Predicated region
        $region78: #{tpu_custom_call.1} parent=72 // pred_check
          %p5572 = pneg %p141
        $region79: #{tpu_custom_call.1} parent=72 // pred_check_branch
          %5574 = sbr.rel (%p5572) target = $region81
        $region80: #{tpu_custom_call.1} parent=72 // pred_region
          %s5576 = ssub.s32 128, 128
          %5577 = vsyncadd %s5568, %s5576
          %s5578 = smul.addr %s22, 2
          %s5579 = sadd.s32 %s23, %s5578
          %s5580 = smul.addr %s5579, 128
          %s5581 = scalar_lea.hbm %s4, %s5580
          %s5583 = sshll.u32 %s5571, 4
          %s5584 = int_to_ptr.vmem [resolvable:$true] %s5583
          %5586 = dma.vmem_to_hbm [thread:$0]  %s5584, 128, %s5581, %s5568
        $region81: #{tpu_custom_call.1} parent=72 // pred_fallthru
          _
      $region73: #{tpu_custom_call.1} parent=5 // pred_fallthru
        _
      %p5587 = scmp.le.s32.totalorder 2, %s13
      // Predicated region
      $region82: #{tpu_custom_call.1} parent=5 // pred_check
        %p5588 = pneg %p5587
      $region83: #{tpu_custom_call.1} parent=5 // pred_check_branch
        %5590 = sbr.rel (%p5588) target = $region85
      $region84: #{tpu_custom_call.1} parent=5 // pred_region
        %s5591 = ssub.s32 %s13, 2
        // Predicated region
        $region86: #{tpu_custom_call.1} parent=84 // pred_check
          %p5592 = pneg %p147
        $region87: #{tpu_custom_call.1} parent=84 // pred_check_branch
          %5594 = sbr.rel (%p5592) target = $region89
        $region88: #{tpu_custom_call.1} parent=84 // pred_region
          %s5595 = sand.u32 %s132, 1
          %s5596 = scalar_lea.sflag [#allocation4], %s5595
          %s5597 = sand.u32 %s132, 1
          %s5598 = smul.addr %s5597, 8
          %s5599 = scalar_lea.vmem [#allocation3], %s5598
          %5600 = dma.done %s5596, 128
        $region89: #{tpu_custom_call.1} parent=84 // pred_fallthru
          _
      $region85: #{tpu_custom_call.1} parent=5 // pred_fallthru
        _
    $region6: #{tpu_custom_call.1} parent=1 // loop_footer
      %s17 = sadd.s32 1, %s13
    $region7: #{tpu_custom_call.1} parent=1 // loop_footer_branch
      %12 = sbr.rel target = $region3
    $region8: #{tpu_custom_call.1} parent=1 // loop_exit
      _
    %5601 = vsyncpa [#allocation4], 1
    %s5602 = scalar_lea.sflag [#allocation4], 1
    %5603 = vsyncpa %s5602, 1

</llo_original>
